<compile_context>
chip_gen: v6e
topology: v6e:2x2x1
jax: 0.10.0
libtpu: 0.0.40
codegen_flags: <defaults>
</compile_context>

<pallas_src>
import functools

import jax
import jax.numpy as jnp
import numpy as np
from jax import lax
from jax.experimental import pallas as pl
from jax.experimental.pallas import tpu as pltpu


# ----------------------------------------------------------------------------
# Host-side constant matrices: bilinear (align_corners=True) interpolation
# ----------------------------------------------------------------------------
def _interp_matrix(n_in, n_out):
    """align_corners=True 1-D linear interpolation matrix of shape (n_out, n_in)."""
    A = np.zeros((n_out, n_in), dtype=np.float32)
    if n_out == 1:
        A[0, 0] = 1.0
        return A
    scale = (n_in - 1) / (n_out - 1)
    for i in range(n_out):
        src = i * scale
        i0 = min(int(np.floor(src)), n_in - 1)
        i1 = min(i0 + 1, n_in - 1)
        w1 = src - i0
        A[i, i0] += 1.0 - w1
        A[i, i1] += w1
    return A


def _upsample_concat_mats(Hin, Win, H, W, C1, C2):
    """Matrices that turn lane-dense x1 (Hin, Win*C1), x2 (H, W*C2) into the concat slab
    (H, W*(C1+C2)) via three matmuls: Ah @ x1 -> @ B, plus x2 @ P."""
    Cin = C1 + C2
    ah = _interp_matrix(Hin, H)                         # (H, Hin) vertical interp
    aw = _interp_matrix(Win, W)                         # (W, Win) horizontal interp
    # B[wi*C1+c, w*Cin+c] = aw[w, wi]  (horizontal interp + place into channels [0:C1))
    e = np.zeros((C1, Cin), np.float32)
    e[:, :C1] = np.eye(C1, dtype=np.float32)
    bmat = np.kron(aw.T, e)                             # (Win*C1, W*Cin)
    # P[w*C2+c2, w*Cin+C1+c2] = 1  (place x2 into channels [C1:Cin))
    f = np.zeros((C2, Cin), np.float32)
    f[:, C1:] = np.eye(C2, dtype=np.float32)
    pmat = np.kron(np.eye(W, dtype=np.float32), f)      # (W*C2, W*Cin)
    return jnp.asarray(ah), jnp.asarray(bmat), jnp.asarray(pmat)


# ----------------------------------------------------------------------------
# Weight prep: fold BN scale, build lane-Toeplitz conv weights (all traceable jnp)
# ----------------------------------------------------------------------------
def _fold_scale(w, scale):
    return w * scale.reshape((1,) * (w.ndim - 1) + (-1,))


def _toeplitz_conv_weights(w, scale, W):
    """w: (KH, KW, Cin, Cout) f32 -> (KH, W*Cin, W*Cout) bf16.
    The kw taps and the W-direction 'same' zero padding are folded into the lane axis, so the
    conv becomes KH matmuls on row-shifted (H, W*Cin) slabs."""
    KH, KW, Cin, Cout = w.shape
    pad = (KW - 1) // 2
    wf = _fold_scale(w, scale)                          # BN scale folded in f32
    mats = []
    for kh in range(KH):
        t = jnp.zeros((W * Cin, W * Cout), jnp.float32)
        for kw in range(KW):
            # input column wi feeds output column w  iff  wi == w + kw - pad
            shift_eye = np.eye(W, k=pad - kw, dtype=np.float32)
            t = t + jnp.kron(jnp.asarray(shift_eye), wf[kh, kw])
        mats.append(t)
    return jnp.stack(mats).astype(jnp.bfloat16)


def _tile_shift(b, W):
    return jnp.tile(b, W).reshape(1, W * b.shape[0])


# ----------------------------------------------------------------------------
# Fused BasicBlock kernel (optionally with upsample+concat fused in), grid=(N,)
# ----------------------------------------------------------------------------
def _row_shift(x, kh, pad):
    """out[h, :] = x[h + kh - pad, :], zero outside [0, H). kh/pad are Python ints."""
    H, L = x.shape
    if kh == pad:
        return x
    if kh < pad:
        s = pad - kh
        return jnp.concatenate([jnp.zeros((s, L), x.dtype), x[:H - s, :]], axis=0)
    s = kh - pad
    return jnp.concatenate([x[s:, :], jnp.zeros((s, L), x.dtype)], axis=0)


def _basic_block_kernel(*refs, KH, pad, fuse_upsample, has_downsample):
    it = iter(refs)
    if fuse_upsample:
        ah_ref = next(it)      # (H, Hin)          f32
        bmat_ref = next(it)    # (Win*C1, W*Cin)   f32
        pmat_ref = next(it)    # (W*C2,   W*Cin)   f32
        x1_ref = next(it)      # (1, Hin, Win*C1)  f32
        x2_ref = next(it)      # (1, H,   W*C2)    f32
    else:
        x_ref = next(it)       # (1, H, W*Cin)     f32
    t1_ref = next(it)          # (KH, W*Cin,  W*Cout) bf16  (BN scale folded)
    b1_ref = next(it)          # (1, W*Cout)          f32
    if has_downsample:
        d_ref = next(it)       # (W*Cin, W*Cout)      bf16
        bd_ref = next(it)      # (1, W*Cout)          f32
    t2_ref = next(it)          # (KH, W*Cout, W*Cout) bf16
    b2_ref = next(it)          # (1, W*Cout)          f32
    o_ref = next(it)           # (1, H, W*Cout)       f32

    # ---- input slab (H, W*Cin): bilinear upsample + channel concat fused as matmuls ----
    if fuse_upsample:
        x1v = jnp.dot(ah_ref[...], x1_ref[0], preferred_element_type=jnp.float32)
        x_slab = (jnp.dot(x1v, bmat_ref[...], preferred_element_type=jnp.float32)
                  + jnp.dot(x2_ref[0], pmat_ref[...], preferred_element_type=jnp.float32))
    else:
        x_slab = x_ref[0]

    def conv3x3(x_f32, t_ref):
        # 'same' 3x3 conv on a lane-dense slab: KH matmuls on row-shifted taps.
        acc = None
        for kh in range(KH):
            tap = _row_shift(x_f32, kh, pad).astype(jnp.bfloat16)
            part = jnp.dot(tap, t_ref[kh], preferred_element_type=jnp.float32)
            acc = part if acc is None else acc + part
        return acc

    # ---- conv1 + BN + ReLU ----
    y1 = jnp.maximum(conv3x3(x_slab, t1_ref) + b1_ref[...], 0.0)

    # ---- identity / 1x1-conv downsample branch ----
    if has_downsample:
        identity = jnp.dot(x_slab.astype(jnp.bfloat16), d_ref[...],
                           preferred_element_type=jnp.float32) + bd_ref[...]
    else:
        identity = x_slab                                  # Cin == Cout

    # ---- conv2 + BN + residual + ReLU ----
    y2 = conv3x3(y1, t2_ref) + b2_ref[...] + identity
    o_ref[0] = jnp.maximum(y2, 0.0).astype(o_ref.dtype)


def _rep_spec(a):
    nd = a.ndim
    return pl.BlockSpec(a.shape, lambda n, _nd=nd: (0,) * _nd)


def _block_call(p, *, N, H, W, x=None, upsample=None):
    """One fused BasicBlock. `upsample = (ah, bmat, pmat, x1f, x2f)` for the first block."""
    KH, KW, Cin, Cout = p["w1"].shape
    has_downsample = "wd" in p
    fuse_upsample = upsample is not None
    pad = (KH - 1) // 2     # 'same' padding, stride 1

    # Kernel-ready parameters: BN scale folded into weights, lane-Toeplitz layout, bf16 MXU.
    t1 = _toeplitz_conv_weights(p["w1"], p["s1"], W)          # (KH, W*Cin,  W*Cout) bf16
    t2 = _toeplitz_conv_weights(p["w2"], p["s2"], W)          # (KH, W*Cout, W*Cout) bf16
    b1 = _tile_shift(p["b1"], W)                              # (1, W*Cout) f32
    b2 = _tile_shift(p["b2"], W)

    args, in_specs = [], []
    if fuse_upsample:
        ah, bmat, pmat, x1f, x2f = upsample
        assert x1f.shape[2] // x2f.shape[2] * 0 + (bmat.shape[1] // W) == Cin, "C1+C2 != Cin"
        args += [ah, bmat, pmat, x1f, x2f]
        in_specs += [
            _rep_spec(ah), _rep_spec(bmat), _rep_spec(pmat),
            pl.BlockSpec((1,) + x1f.shape[1:], lambda n: (n, 0, 0)),
            pl.BlockSpec((1,) + x2f.shape[1:], lambda n: (n, 0, 0)),
        ]
    else:
        args += [x]
        in_specs += [pl.BlockSpec((1, H, W * Cin), lambda n: (n, 0, 0))]

    args += [t1, b1]
    in_specs += [_rep_spec(t1), _rep_spec(b1)]
    if has_downsample:
        dmat = jnp.kron(jnp.eye(W, dtype=jnp.float32),
                        _fold_scale(p["wd"][0, 0], p["sd"])).astype(jnp.bfloat16)
        bd = _tile_shift(p["bd"], W)
        args += [dmat, bd]
        in_specs += [_rep_spec(dmat), _rep_spec(bd)]
    args += [t2, b2]
    in_specs += [_rep_spec(t2), _rep_spec(b2)]

    kern = functools.partial(_basic_block_kernel, KH=KH, pad=pad,
                             fuse_upsample=fuse_upsample, has_downsample=has_downsample)

    return pl.pallas_call(
        kern,
        out_shape=jax.ShapeDtypeStruct((N, H, W * Cout), jnp.float32),
        grid=(N,),
        in_specs=in_specs,
        out_specs=pl.BlockSpec((1, H, W * Cout), lambda n: (n, 0, 0)),
        compiler_params=pltpu.CompilerParams(
            dimension_semantics=("parallel",)),   # batch axis -> both TCs on v7x
    )(*args)


# ----------------------------------------------------------------------------
# UpConv forward: upsample+concat fused into block 0, then the remaining blocks
# ----------------------------------------------------------------------------
def upconv_forward(x1, x2, block_params):
    """x1, x2: NCHW. Returns NCHW."""
    N, C1, Hin, Win = x1.shape
    _, C2, H, W = x2.shape
    ah, bmat, pmat = _upsample_concat_mats(Hin, Win, H, W, C1, C2)

    # NCHW -> lane-dense slabs (N, H, W*C): channels-last, W and C merged on the lane axis.
    x1f = jnp.transpose(x1, (0, 2, 3, 1)).reshape(N, Hin, Win * C1)
    x2f = jnp.transpose(x2, (0, 2, 3, 1)).reshape(N, H, W * C2)

    assert block_params[0]["w1"].shape[2] == C1 + C2, "concat channels != first conv Cin"

    x = None
    for bi, p in enumerate(block_params):
        if bi == 0:
            x = _block_call(p, N=N, H=H, W=W, upsample=(ah, bmat, pmat, x1f, x2f))
        else:
            x = _block_call(p, N=N, H=H, W=W, x=x)
    Cout = block_params[-1]["w2"].shape[-1]
    return jnp.transpose(x.reshape(N, H, W, Cout), (0, 3, 1, 2))   # -> NCHW


# ----------------------------------------------------------------------------
# Deterministic parameter construction (BasicBlock, expansion=1, folded BN)
# ----------------------------------------------------------------------------
def _fold_bn(key, c, eps=1e-5):
    k1, k2, k3, k4 = jax.random.split(key, 4)
    gamma = jax.random.uniform(k1, (c,), jnp.float32, 0.5, 1.5)
    beta = 0.1 * jax.random.normal(k2, (c,), jnp.float32)
    mean = 0.1 * jax.random.normal(k3, (c,), jnp.float32)
    var = jax.random.uniform(k4, (c,), jnp.float32, 0.5, 1.5)
    scale = gamma / jnp.sqrt(var + eps)
    shift = beta - mean * scale
    return scale, shift


def make_layer_params(key, in_planes, planes, blocks, stride=1):
    assert stride == 1, "only stride=1 exercised in this synthetic kernel"
    params = []
    for b in range(blocks):
        key, k1, k2, k3, kb1, kb2, kbd = jax.random.split(key, 7)
        cin = in_planes if b == 0 else planes
        p = {}
        p["w1"] = 0.1 * jax.random.normal(k1, (3, 3, cin, planes), jnp.float32)
        p["s1"], p["b1"] = _fold_bn(kb1, planes)
        p["w2"] = 0.1 * jax.random.normal(k2, (3, 3, planes, planes), jnp.float32)
        p["s2"], p["b2"] = _fold_bn(kb2, planes)
        if b == 0 and (stride != 1 or in_planes != planes):
            p["wd"] = 0.1 * jax.random.normal(k3, (1, 1, cin, planes), jnp.float32)
            p["sd"], p["bd"] = _fold_bn(kbd, planes)
        params.append(p)
    return params


# ----------------------------------------------------------------------------
# Pure-JAX reference (same rounding points: f32 interp, scale folded in f32 then bf16 matmuls,
# f32 accumulation / epilogue)
# ----------------------------------------------------------------------------
def _ref_bilinear(x, h_out, w_out):
    N, C, Hin, Win = x.shape
    hs = jnp.linspace(0.0, Hin - 1.0, h_out)
    ws = jnp.linspace(0.0, Win - 1.0, w_out)
    h0 = jnp.clip(jnp.floor(hs).astype(jnp.int32), 0, Hin - 1)
    h1 = jnp.clip(h0 + 1, 0, Hin - 1)
    wh = (hs - h0)[None, None, :, None]
    w0 = jnp.clip(jnp.floor(ws).astype(jnp.int32), 0, Win - 1)
    w1 = jnp.clip(w0 + 1, 0, Win - 1)
    ww = ws - w0
    top = x[:, :, h0, :] * (1 - wh) + x[:, :, h1, :] * wh
    return top[:, :, :, w0] * (1 - ww) + top[:, :, :, w1] * ww


def _ref_conv_bn(x_bf16, w, scale, shift, pad):
    wf = (w * scale.reshape((1,) * (w.ndim - 1) + (-1,))).astype(jnp.bfloat16)
    y = lax.conv_general_dilated(x_bf16, wf, (1, 1),
                                 [(pad, pad), (pad, pad)],
                                 dimension_numbers=("NHWC", "HWIO", "NHWC"),
                                 preferred_element_type=jnp.float32)
    return y + shift


def _ref_forward(x1, x2, block_params):
    _, _, H, W = x2.shape
    x = jnp.concatenate([_ref_bilinear(x1, H, W), x2], axis=1)
    x = jnp.transpose(x, (0, 2, 3, 1)).astype(jnp.float32)       # NHWC f32
    for p in block_params:
        xb = x.astype(jnp.bfloat16)
        y1 = jnp.maximum(_ref_conv_bn(xb, p["w1"], p["s1"], p["b1"], 1), 0.0)
        if "wd" in p:
            identity = _ref_conv_bn(xb, p["wd"], p["sd"], p["bd"], 0)
        else:
            identity = x
        y2 = _ref_conv_bn(y1.astype(jnp.bfloat16), p["w2"], p["s2"], p["b2"], 1)
        x = jnp.maximum(y2 + identity, 0.0)
    return jnp.transpose(x, (0, 3, 1, 2))


# ----------------------------------------------------------------------------
if __name__ == "__main__":
    key = jax.random.PRNGKey(0)
    k_x1, k_x2, k_p = jax.random.split(key, 3)

    # x1 is the low-res decoder feature, x2 the skip connection (PyTorch NCHW).
    x1 = jax.random.normal(k_x1, (2, 4, 8, 8), jnp.float32)
    x2 = jax.random.normal(k_x2, (2, 4, 16, 16), jnp.float32)

    # UpConv(in_planes=8 (=4+4 after concat), block=BasicBlock, planes=16, blocks=2, stride=1)
    block_params = make_layer_params(k_p, in_planes=8, planes=16, blocks=2, stride=1)

    out = jax.jit(upconv_forward)(x1, x2, block_params)
    out = jax.block_until_ready(out)

    ref = _ref_forward(x1, x2, block_params)
    assert out.shape == (2, 16, 16, 16), out.shape
    np.testing.assert_allclose(np.asarray(out), np.asarray(ref), rtol=5e-3, atol=5e-3)

    print("KERNEL_OK")
</pallas_src>

<mosaic_0001>
module attributes {stable_mosaic.version = 11 : i64} {
  func.func @_basic_block_kernel(%arg0: i32, %arg1: memref<16x8xf32, #tpu.memory_space<vmem>>, %arg2: memref<32x128xf32, #tpu.memory_space<vmem>>, %arg3: memref<64x128xf32, #tpu.memory_space<vmem>>, %arg4: memref<1x8x32xf32, #tpu.memory_space<vmem>>, %arg5: memref<1x16x64xf32, #tpu.memory_space<vmem>>, %arg6: memref<3x128x256xbf16, #tpu.memory_space<vmem>>, %arg7: memref<1x256xf32, #tpu.memory_space<vmem>>, %arg8: memref<128x256xbf16, #tpu.memory_space<vmem>>, %arg9: memref<1x256xf32, #tpu.memory_space<vmem>>, %arg10: memref<3x256x256xbf16, #tpu.memory_space<vmem>>, %arg11: memref<1x256xf32, #tpu.memory_space<vmem>>, %arg12: memref<1x16x256xf32, #tpu.memory_space<vmem>>) attributes {dimension_semantics = [#tpu.dimension_semantics<parallel>], iteration_bounds = array<i64: 2>, scalar_prefetch = 0 : i64, scratch_operands = 0 : i64, tpu.core_type = #tpu.core_type<tc>, window_params = [{pipeline_mode = #tpu.pipeline_mode<synchronous>, transform_indices = @transform_0, window_bounds = array<i64: 16, 8>}, {pipeline_mode = #tpu.pipeline_mode<synchronous>, transform_indices = @transform_1, window_bounds = array<i64: 32, 128>}, {pipeline_mode = #tpu.pipeline_mode<synchronous>, transform_indices = @transform_2, window_bounds = array<i64: 64, 128>}, {transform_indices = @transform_3, window_bounds = array<i64: 1, 8, 32>}, {transform_indices = @transform_4, window_bounds = array<i64: 1, 16, 64>}, {pipeline_mode = #tpu.pipeline_mode<synchronous>, transform_indices = @transform_5, window_bounds = array<i64: 3, 128, 256>}, {pipeline_mode = #tpu.pipeline_mode<synchronous>, transform_indices = @transform_6, window_bounds = array<i64: 1, 256>}, {pipeline_mode = #tpu.pipeline_mode<synchronous>, transform_indices = @transform_7, window_bounds = array<i64: 128, 256>}, {pipeline_mode = #tpu.pipeline_mode<synchronous>, transform_indices = @transform_8, window_bounds = array<i64: 1, 256>}, {pipeline_mode = #tpu.pipeline_mode<synchronous>, transform_indices = @transform_9, window_bounds = array<i64: 3, 256, 256>}, {pipeline_mode = #tpu.pipeline_mode<synchronous>, transform_indices = @transform_10, window_bounds = array<i64: 1, 256>}, {transform_indices = @transform_11, window_bounds = array<i64: 1, 16, 256>}]} {
    %c0 = arith.constant 0 : index
    %c0_0 = arith.constant 0 : index
    %0 = vector.load %arg1[%c0, %c0_0] : memref<16x8xf32, #tpu.memory_space<vmem>>, vector<16x8xf32>
    %c0_1 = arith.constant 0 : index
    %c0_2 = arith.constant 0 : index
    %c0_3 = arith.constant 0 : index
    %1 = vector.load %arg4[%c0_1, %c0_2, %c0_3] : memref<1x8x32xf32, #tpu.memory_space<vmem>>, vector<1x8x32xf32>
    %2 = vector.shape_cast %1 : vector<1x8x32xf32> to vector<8x32xf32>
    %cst = arith.constant dense<0.000000e+00> : vector<16x32xf32>
    %3 = tpu.matmul %0, %2, %cst {dimension_numbers = #tpu.dot_dimension_numbers<[1], [0], [0], [1], [0, 0, 1, 1], [], []>} : vector<16x8xf32>, vector<8x32xf32>, vector<16x32xf32> -> vector<16x32xf32>
    %c0_4 = arith.constant 0 : index
    %c0_5 = arith.constant 0 : index
    %4 = vector.load %arg2[%c0_4, %c0_5] : memref<32x128xf32, #tpu.memory_space<vmem>>, vector<32x128xf32>
    %cst_6 = arith.constant dense<0.000000e+00> : vector<16x128xf32>
    %5 = tpu.matmul %3, %4, %cst_6 {dimension_numbers = #tpu.dot_dimension_numbers<[1], [0], [0], [1], [0, 0, 1, 1], [], []>} : vector<16x32xf32>, vector<32x128xf32>, vector<16x128xf32> -> vector<16x128xf32>
    %c0_7 = arith.constant 0 : index
    %c0_8 = arith.constant 0 : index
    %c0_9 = arith.constant 0 : index
    %6 = vector.load %arg5[%c0_7, %c0_8, %c0_9] : memref<1x16x64xf32, #tpu.memory_space<vmem>>, vector<1x16x64xf32>
    %7 = vector.shape_cast %6 : vector<1x16x64xf32> to vector<16x64xf32>
    %c0_10 = arith.constant 0 : index
    %c0_11 = arith.constant 0 : index
    %8 = vector.load %arg3[%c0_10, %c0_11] : memref<64x128xf32, #tpu.memory_space<vmem>>, vector<64x128xf32>
    %cst_12 = arith.constant dense<0.000000e+00> : vector<16x128xf32>
    %9 = tpu.matmul %7, %8, %cst_12 {dimension_numbers = #tpu.dot_dimension_numbers<[1], [0], [0], [1], [0, 0, 1, 1], [], []>} : vector<16x64xf32>, vector<64x128xf32>, vector<16x128xf32> -> vector<16x128xf32>
    %10 = arith.addf %5, %9 : vector<16x128xf32>
    %cst_13 = arith.constant 0.000000e+00 : f32
    %11 = vector.broadcast %cst_13 : f32 to vector<1x128xf32>
    %12 = vector.extract_strided_slice %10 {offsets = [0, 0], sizes = [15, 128], strides = [1, 1]} : vector<16x128xf32> to vector<15x128xf32>
    %13 = tpu.concatenate %11, %12 in 0 : vector<1x128xf32>, vector<15x128xf32> -> vector<16x128xf32>
    %14 = arith.truncf %13 : vector<16x128xf32> to vector<16x128xbf16>
    %c0_14 = arith.constant 0 : index
    %c0_15 = arith.constant 0 : index
    %c0_16 = arith.constant 0 : index
    %15 = vector.load %arg6[%c0_14, %c0_15, %c0_16] : memref<3x128x256xbf16, #tpu.memory_space<vmem>>, vector<1x128x256xbf16>
    %16 = vector.shape_cast %15 : vector<1x128x256xbf16> to vector<128x256xbf16>
    %cst_17 = arith.constant dense<0.000000e+00> : vector<16x256xf32>
    %17 = tpu.matmul %14, %16, %cst_17 {dimension_numbers = #tpu.dot_dimension_numbers<[1], [0], [0], [1], [0, 0, 1, 1], [], []>} : vector<16x128xbf16>, vector<128x256xbf16>, vector<16x256xf32> -> vector<16x256xf32>
    %18 = arith.truncf %10 : vector<16x128xf32> to vector<16x128xbf16>
    %c1 = arith.constant 1 : index
    %c0_18 = arith.constant 0 : index
    %c0_19 = arith.constant 0 : index
    %19 = vector.load %arg6[%c1, %c0_18, %c0_19] : memref<3x128x256xbf16, #tpu.memory_space<vmem>>, vector<1x128x256xbf16>
    %20 = vector.shape_cast %19 : vector<1x128x256xbf16> to vector<128x256xbf16>
    %cst_20 = arith.constant dense<0.000000e+00> : vector<16x256xf32>
    %21 = tpu.matmul %18, %20, %cst_20 {dimension_numbers = #tpu.dot_dimension_numbers<[1], [0], [0], [1], [0, 0, 1, 1], [], []>} : vector<16x128xbf16>, vector<128x256xbf16>, vector<16x256xf32> -> vector<16x256xf32>
    %22 = arith.addf %17, %21 : vector<16x256xf32>
    %23 = vector.extract_strided_slice %10 {offsets = [1, 0], sizes = [15, 128], strides = [1, 1]} : vector<16x128xf32> to vector<15x128xf32>
    %cst_21 = arith.constant 0.000000e+00 : f32
    %24 = vector.broadcast %cst_21 : f32 to vector<1x128xf32>
    %25 = tpu.concatenate %23, %24 in 0 : vector<15x128xf32>, vector<1x128xf32> -> vector<16x128xf32>
    %26 = arith.truncf %25 : vector<16x128xf32> to vector<16x128xbf16>
    %c2 = arith.constant 2 : index
    %c0_22 = arith.constant 0 : index
    %c0_23 = arith.constant 0 : index
    %27 = vector.load %arg6[%c2, %c0_22, %c0_23] : memref<3x128x256xbf16, #tpu.memory_space<vmem>>, vector<1x128x256xbf16>
    %28 = vector.shape_cast %27 : vector<1x128x256xbf16> to vector<128x256xbf16>
    %cst_24 = arith.constant dense<0.000000e+00> : vector<16x256xf32>
    %29 = tpu.matmul %26, %28, %cst_24 {dimension_numbers = #tpu.dot_dimension_numbers<[1], [0], [0], [1], [0, 0, 1, 1], [], []>} : vector<16x128xbf16>, vector<128x256xbf16>, vector<16x256xf32> -> vector<16x256xf32>
    %30 = arith.addf %22, %29 : vector<16x256xf32>
    %c0_25 = arith.constant 0 : index
    %c0_26 = arith.constant 0 : index
    %31 = vector.load %arg7[%c0_25, %c0_26] : memref<1x256xf32, #tpu.memory_space<vmem>>, vector<1x256xf32>
    %32 = vector.broadcast %31 : vector<1x256xf32> to vector<16x256xf32>
    %33 = arith.addf %30, %32 : vector<16x256xf32>
    %cst_27 = arith.constant 0.000000e+00 : f32
    %34 = vector.broadcast %cst_27 : f32 to vector<16x256xf32>
    %35 = arith.maximumf %33, %34 : vector<16x256xf32>
    %36 = arith.truncf %10 : vector<16x128xf32> to vector<16x128xbf16>
    %c0_28 = arith.constant 0 : index
    %c0_29 = arith.constant 0 : index
    %37 = vector.load %arg8[%c0_28, %c0_29] : memref<128x256xbf16, #tpu.memory_space<vmem>>, vector<128x256xbf16>
    %cst_30 = arith.constant dense<0.000000e+00> : vector<16x256xf32>
    %38 = tpu.matmul %36, %37, %cst_30 {dimension_numbers = #tpu.dot_dimension_numbers<[1], [0], [0], [1], [0, 0, 1, 1], [], []>} : vector<16x128xbf16>, vector<128x256xbf16>, vector<16x256xf32> -> vector<16x256xf32>
    %c0_31 = arith.constant 0 : index
    %c0_32 = arith.constant 0 : index
    %39 = vector.load %arg9[%c0_31, %c0_32] : memref<1x256xf32, #tpu.memory_space<vmem>>, vector<1x256xf32>
    %40 = vector.broadcast %39 : vector<1x256xf32> to vector<16x256xf32>
    %41 = arith.addf %38, %40 : vector<16x256xf32>
    %cst_33 = arith.constant 0.000000e+00 : f32
    %42 = vector.broadcast %cst_33 : f32 to vector<1x256xf32>
    %43 = vector.extract_strided_slice %35 {offsets = [0, 0], sizes = [15, 256], strides = [1, 1]} : vector<16x256xf32> to vector<15x256xf32>
    %44 = tpu.concatenate %42, %43 in 0 : vector<1x256xf32>, vector<15x256xf32> -> vector<16x256xf32>
    %45 = arith.truncf %44 : vector<16x256xf32> to vector<16x256xbf16>
    %c0_34 = arith.constant 0 : index
    %c0_35 = arith.constant 0 : index
    %c0_36 = arith.constant 0 : index
    %46 = vector.load %arg10[%c0_34, %c0_35, %c0_36] : memref<3x256x256xbf16, #tpu.memory_space<vmem>>, vector<1x256x256xbf16>
    %47 = vector.shape_cast %46 : vector<1x256x256xbf16> to vector<256x256xbf16>
    %cst_37 = arith.constant dense<0.000000e+00> : vector<16x256xf32>
    %48 = tpu.matmul %45, %47, %cst_37 {dimension_numbers = #tpu.dot_dimension_numbers<[1], [0], [0], [1], [0, 0, 1, 1], [], []>} : vector<16x256xbf16>, vector<256x256xbf16>, vector<16x256xf32> -> vector<16x256xf32>
    %49 = arith.truncf %35 : vector<16x256xf32> to vector<16x256xbf16>
    %c1_38 = arith.constant 1 : index
    %c0_39 = arith.constant 0 : index
    %c0_40 = arith.constant 0 : index
    %50 = vector.load %arg10[%c1_38, %c0_39, %c0_40] : memref<3x256x256xbf16, #tpu.memory_space<vmem>>, vector<1x256x256xbf16>
    %51 = vector.shape_cast %50 : vector<1x256x256xbf16> to vector<256x256xbf16>
    %cst_41 = arith.constant dense<0.000000e+00> : vector<16x256xf32>
    %52 = tpu.matmul %49, %51, %cst_41 {dimension_numbers = #tpu.dot_dimension_numbers<[1], [0], [0], [1], [0, 0, 1, 1], [], []>} : vector<16x256xbf16>, vector<256x256xbf16>, vector<16x256xf32> -> vector<16x256xf32>
    %53 = arith.addf %48, %52 : vector<16x256xf32>
    %54 = vector.extract_strided_slice %35 {offsets = [1, 0], sizes = [15, 256], strides = [1, 1]} : vector<16x256xf32> to vector<15x256xf32>
    %cst_42 = arith.constant 0.000000e+00 : f32
    %55 = vector.broadcast %cst_42 : f32 to vector<1x256xf32>
    %56 = tpu.concatenate %54, %55 in 0 : vector<15x256xf32>, vector<1x256xf32> -> vector<16x256xf32>
    %57 = arith.truncf %56 : vector<16x256xf32> to vector<16x256xbf16>
    %c2_43 = arith.constant 2 : index
    %c0_44 = arith.constant 0 : index
    %c0_45 = arith.constant 0 : index
    %58 = vector.load %arg10[%c2_43, %c0_44, %c0_45] : memref<3x256x256xbf16, #tpu.memory_space<vmem>>, vector<1x256x256xbf16>
    %59 = vector.shape_cast %58 : vector<1x256x256xbf16> to vector<256x256xbf16>
    %cst_46 = arith.constant dense<0.000000e+00> : vector<16x256xf32>
    %60 = tpu.matmul %57, %59, %cst_46 {dimension_numbers = #tpu.dot_dimension_numbers<[1], [0], [0], [1], [0, 0, 1, 1], [], []>} : vector<16x256xbf16>, vector<256x256xbf16>, vector<16x256xf32> -> vector<16x256xf32>
    %61 = arith.addf %53, %60 : vector<16x256xf32>
    %c0_47 = arith.constant 0 : index
    %c0_48 = arith.constant 0 : index
    %62 = vector.load %arg11[%c0_47, %c0_48] : memref<1x256xf32, #tpu.memory_space<vmem>>, vector<1x256xf32>
    %63 = vector.broadcast %62 : vector<1x256xf32> to vector<16x256xf32>
    %64 = arith.addf %61, %63 : vector<16x256xf32>
    %65 = arith.addf %64, %41 : vector<16x256xf32>
    %cst_49 = arith.constant 0.000000e+00 : f32
    %66 = vector.broadcast %cst_49 : f32 to vector<16x256xf32>
    %67 = arith.maximumf %65, %66 : vector<16x256xf32>
    %c0_50 = arith.constant 0 : index
    %c0_51 = arith.constant 0 : index
    %c0_52 = arith.constant 0 : index
    %68 = vector.load %arg12[%c0_50, %c0_51, %c0_52] : memref<1x16x256xf32, #tpu.memory_space<vmem>>, vector<1x16x256xf32>
    %69 = vector.shape_cast %68 : vector<1x16x256xf32> to vector<16x256xf32>
    %70 = vector.shape_cast %67 : vector<16x256xf32> to vector<1x16x256xf32>
    tpu.vector_store %arg12[%c0_50, %c0_51, %c0_52], %70 {strides = array<i32>} : memref<1x16x256xf32, #tpu.memory_space<vmem>>, vector<1x16x256xf32>,
    return
  }
  func.func @transform_0(%arg0: i32) -> (i32, i32) {
    %c0_i32 = arith.constant 0 : i32
    %c0_i32_0 = arith.constant 0 : i32
    %c0_i32_1 = arith.constant 0 : i32
    return %c0_i32, %c0_i32_0 : i32, i32
  }
  func.func @transform_1(%arg0: i32) -> (i32, i32) {
    %c0_i32 = arith.constant 0 : i32
    %c0_i32_0 = arith.constant 0 : i32
    %c0_i32_1 = arith.constant 0 : i32
    return %c0_i32, %c0_i32_0 : i32, i32
  }
  func.func @transform_2(%arg0: i32) -> (i32, i32) {
    %c0_i32 = arith.constant 0 : i32
    %c0_i32_0 = arith.constant 0 : i32
    %c0_i32_1 = arith.constant 0 : i32
    return %c0_i32, %c0_i32_0 : i32, i32
  }
  func.func @transform_3(%arg0: i32) -> (i32, i32, i32) {
    %c0_i32 = arith.constant 0 : i32
    %c0_i32_0 = arith.constant 0 : i32
    %c0_i32_1 = arith.constant 0 : i32
    return %arg0, %c0_i32, %c0_i32_0 : i32, i32, i32
  }
  func.func @transform_4(%arg0: i32) -> (i32, i32, i32) {
    %c0_i32 = arith.constant 0 : i32
    %c0_i32_0 = arith.constant 0 : i32
    %c0_i32_1 = arith.constant 0 : i32
    return %arg0, %c0_i32, %c0_i32_0 : i32, i32, i32
  }
  func.func @transform_5(%arg0: i32) -> (i32, i32, i32) {
    %c0_i32 = arith.constant 0 : i32
    %c0_i32_0 = arith.constant 0 : i32
    %c0_i32_1 = arith.constant 0 : i32
    %c0_i32_2 = arith.constant 0 : i32
    return %c0_i32, %c0_i32_0, %c0_i32_1 : i32, i32, i32
  }
  func.func @transform_6(%arg0: i32) -> (i32, i32) {
    %c0_i32 = arith.constant 0 : i32
    %c0_i32_0 = arith.constant 0 : i32
    %c0_i32_1 = arith.constant 0 : i32
    return %c0_i32, %c0_i32_0 : i32, i32
  }
  func.func @transform_7(%arg0: i32) -> (i32, i32) {
    %c0_i32 = arith.constant 0 : i32
    %c0_i32_0 = arith.constant 0 : i32
    %c0_i32_1 = arith.constant 0 : i32
    return %c0_i32, %c0_i32_0 : i32, i32
  }
  func.func @transform_8(%arg0: i32) -> (i32, i32) {
    %c0_i32 = arith.constant 0 : i32
    %c0_i32_0 = arith.constant 0 : i32
    %c0_i32_1 = arith.constant 0 : i32
    return %c0_i32, %c0_i32_0 : i32, i32
  }
  func.func @transform_9(%arg0: i32) -> (i32, i32, i32) {
    %c0_i32 = arith.constant 0 : i32
    %c0_i32_0 = arith.constant 0 : i32
    %c0_i32_1 = arith.constant 0 : i32
    %c0_i32_2 = arith.constant 0 : i32
    return %c0_i32, %c0_i32_0, %c0_i32_1 : i32, i32, i32
  }
  func.func @transform_10(%arg0: i32) -> (i32, i32) {
    %c0_i32 = arith.constant 0 : i32
    %c0_i32_0 = arith.constant 0 : i32
    %c0_i32_1 = arith.constant 0 : i32
    return %c0_i32, %c0_i32_0 : i32, i32
  }
  func.func @transform_11(%arg0: i32) -> (i32, i32, i32) {
    %c0_i32 = arith.constant 0 : i32
    %c0_i32_0 = arith.constant 0 : i32
    %c0_i32_1 = arith.constant 0 : i32
    return %arg0, %c0_i32, %c0_i32_0 : i32, i32, i32
  }
}

module attributes {stable_mosaic.version = 11 : i64} {
  func.func @_basic_block_kernel(%arg0: i32, %arg1: memref<1x16x256xf32, #tpu.memory_space<vmem>>, %arg2: memref<3x256x256xbf16, #tpu.memory_space<vmem>>, %arg3: memref<1x256xf32, #tpu.memory_space<vmem>>, %arg4: memref<3x256x256xbf16, #tpu.memory_space<vmem>>, %arg5: memref<1x256xf32, #tpu.memory_space<vmem>>, %arg6: memref<1x16x256xf32, #tpu.memory_space<vmem>>) attributes {dimension_semantics = [#tpu.dimension_semantics<parallel>], iteration_bounds = array<i64: 2>, scalar_prefetch = 0 : i64, scratch_operands = 0 : i64, tpu.core_type = #tpu.core_type<tc>, window_params = [{transform_indices = @transform_0, window_bounds = array<i64: 1, 16, 256>}, {pipeline_mode = #tpu.pipeline_mode<synchronous>, transform_indices = @transform_1, window_bounds = array<i64: 3, 256, 256>}, {pipeline_mode = #tpu.pipeline_mode<synchronous>, transform_indices = @transform_2, window_bounds = array<i64: 1, 256>}, {pipeline_mode = #tpu.pipeline_mode<synchronous>, transform_indices = @transform_3, window_bounds = array<i64: 3, 256, 256>}, {pipeline_mode = #tpu.pipeline_mode<synchronous>, transform_indices = @transform_4, window_bounds = array<i64: 1, 256>}, {transform_indices = @transform_5, window_bounds = array<i64: 1, 16, 256>}]} {
    %c0 = arith.constant 0 : index
    %c0_0 = arith.constant 0 : index
    %c0_1 = arith.constant 0 : index
    %0 = vector.load %arg1[%c0, %c0_0, %c0_1] : memref<1x16x256xf32, #tpu.memory_space<vmem>>, vector<1x16x256xf32>
    %1 = vector.shape_cast %0 : vector<1x16x256xf32> to vector<16x256xf32>
    %cst = arith.constant 0.000000e+00 : f32
    %2 = vector.broadcast %cst : f32 to vector<1x256xf32>
    %3 = vector.extract_strided_slice %1 {offsets = [0, 0], sizes = [15, 256], strides = [1, 1]} : vector<16x256xf32> to vector<15x256xf32>
    %4 = tpu.concatenate %2, %3 in 0 : vector<1x256xf32>, vector<15x256xf32> -> vector<16x256xf32>
    %5 = arith.truncf %4 : vector<16x256xf32> to vector<16x256xbf16>
    %c0_2 = arith.constant 0 : index
    %c0_3 = arith.constant 0 : index
    %c0_4 = arith.constant 0 : index
    %6 = vector.load %arg2[%c0_2, %c0_3, %c0_4] : memref<3x256x256xbf16, #tpu.memory_space<vmem>>, vector<1x256x256xbf16>
    %7 = vector.shape_cast %6 : vector<1x256x256xbf16> to vector<256x256xbf16>
    %cst_5 = arith.constant dense<0.000000e+00> : vector<16x256xf32>
    %8 = tpu.matmul %5, %7, %cst_5 {dimension_numbers = #tpu.dot_dimension_numbers<[1], [0], [0], [1], [0, 0, 1, 1], [], []>} : vector<16x256xbf16>, vector<256x256xbf16>, vector<16x256xf32> -> vector<16x256xf32>
    %9 = arith.truncf %1 : vector<16x256xf32> to vector<16x256xbf16>
    %c1 = arith.constant 1 : index
    %c0_6 = arith.constant 0 : index
    %c0_7 = arith.constant 0 : index
    %10 = vector.load %arg2[%c1, %c0_6, %c0_7] : memref<3x256x256xbf16, #tpu.memory_space<vmem>>, vector<1x256x256xbf16>
    %11 = vector.shape_cast %10 : vector<1x256x256xbf16> to vector<256x256xbf16>
    %cst_8 = arith.constant dense<0.000000e+00> : vector<16x256xf32>
    %12 = tpu.matmul %9, %11, %cst_8 {dimension_numbers = #tpu.dot_dimension_numbers<[1], [0], [0], [1], [0, 0, 1, 1], [], []>} : vector<16x256xbf16>, vector<256x256xbf16>, vector<16x256xf32> -> vector<16x256xf32>
    %13 = arith.addf %8, %12 : vector<16x256xf32>
    %14 = vector.extract_strided_slice %1 {offsets = [1, 0], sizes = [15, 256], strides = [1, 1]} : vector<16x256xf32> to vector<15x256xf32>
    %cst_9 = arith.constant 0.000000e+00 : f32
    %15 = vector.broadcast %cst_9 : f32 to vector<1x256xf32>
    %16 = tpu.concatenate %14, %15 in 0 : vector<15x256xf32>, vector<1x256xf32> -> vector<16x256xf32>
    %17 = arith.truncf %16 : vector<16x256xf32> to vector<16x256xbf16>
    %c2 = arith.constant 2 : index
    %c0_10 = arith.constant 0 : index
    %c0_11 = arith.constant 0 : index
    %18 = vector.load %arg2[%c2, %c0_10, %c0_11] : memref<3x256x256xbf16, #tpu.memory_space<vmem>>, vector<1x256x256xbf16>
    %19 = vector.shape_cast %18 : vector<1x256x256xbf16> to vector<256x256xbf16>
    %cst_12 = arith.constant dense<0.000000e+00> : vector<16x256xf32>
    %20 = tpu.matmul %17, %19, %cst_12 {dimension_numbers = #tpu.dot_dimension_numbers<[1], [0], [0], [1], [0, 0, 1, 1], [], []>} : vector<16x256xbf16>, vector<256x256xbf16>, vector<16x256xf32> -> vector<16x256xf32>
    %21 = arith.addf %13, %20 : vector<16x256xf32>
    %c0_13 = arith.constant 0 : index
    %c0_14 = arith.constant 0 : index
    %22 = vector.load %arg3[%c0_13, %c0_14] : memref<1x256xf32, #tpu.memory_space<vmem>>, vector<1x256xf32>
    %23 = vector.broadcast %22 : vector<1x256xf32> to vector<16x256xf32>
    %24 = arith.addf %21, %23 : vector<16x256xf32>
    %cst_15 = arith.constant 0.000000e+00 : f32
    %25 = vector.broadcast %cst_15 : f32 to vector<16x256xf32>
    %26 = arith.maximumf %24, %25 : vector<16x256xf32>
    %cst_16 = arith.constant 0.000000e+00 : f32
    %27 = vector.broadcast %cst_16 : f32 to vector<1x256xf32>
    %28 = vector.extract_strided_slice %26 {offsets = [0, 0], sizes = [15, 256], strides = [1, 1]} : vector<16x256xf32> to vector<15x256xf32>
    %29 = tpu.concatenate %27, %28 in 0 : vector<1x256xf32>, vector<15x256xf32> -> vector<16x256xf32>
    %30 = arith.truncf %29 : vector<16x256xf32> to vector<16x256xbf16>
    %c0_17 = arith.constant 0 : index
    %c0_18 = arith.constant 0 : index
    %c0_19 = arith.constant 0 : index
    %31 = vector.load %arg4[%c0_17, %c0_18, %c0_19] : memref<3x256x256xbf16, #tpu.memory_space<vmem>>, vector<1x256x256xbf16>
    %32 = vector.shape_cast %31 : vector<1x256x256xbf16> to vector<256x256xbf16>
    %cst_20 = arith.constant dense<0.000000e+00> : vector<16x256xf32>
    %33 = tpu.matmul %30, %32, %cst_20 {dimension_numbers = #tpu.dot_dimension_numbers<[1], [0], [0], [1], [0, 0, 1, 1], [], []>} : vector<16x256xbf16>, vector<256x256xbf16>, vector<16x256xf32> -> vector<16x256xf32>
    %34 = arith.truncf %26 : vector<16x256xf32> to vector<16x256xbf16>
    %c1_21 = arith.constant 1 : index
    %c0_22 = arith.constant 0 : index
    %c0_23 = arith.constant 0 : index
    %35 = vector.load %arg4[%c1_21, %c0_22, %c0_23] : memref<3x256x256xbf16, #tpu.memory_space<vmem>>, vector<1x256x256xbf16>
    %36 = vector.shape_cast %35 : vector<1x256x256xbf16> to vector<256x256xbf16>
    %cst_24 = arith.constant dense<0.000000e+00> : vector<16x256xf32>
    %37 = tpu.matmul %34, %36, %cst_24 {dimension_numbers = #tpu.dot_dimension_numbers<[1], [0], [0], [1], [0, 0, 1, 1], [], []>} : vector<16x256xbf16>, vector<256x256xbf16>, vector<16x256xf32> -> vector<16x256xf32>
    %38 = arith.addf %33, %37 : vector<16x256xf32>
    %39 = vector.extract_strided_slice %26 {offsets = [1, 0], sizes = [15, 256], strides = [1, 1]} : vector<16x256xf32> to vector<15x256xf32>
    %cst_25 = arith.constant 0.000000e+00 : f32
    %40 = vector.broadcast %cst_25 : f32 to vector<1x256xf32>
    %41 = tpu.concatenate %39, %40 in 0 : vector<15x256xf32>, vector<1x256xf32> -> vector<16x256xf32>
    %42 = arith.truncf %41 : vector<16x256xf32> to vector<16x256xbf16>
    %c2_26 = arith.constant 2 : index
    %c0_27 = arith.constant 0 : index
    %c0_28 = arith.constant 0 : index
    %43 = vector.load %arg4[%c2_26, %c0_27, %c0_28] : memref<3x256x256xbf16, #tpu.memory_space<vmem>>, vector<1x256x256xbf16>
    %44 = vector.shape_cast %43 : vector<1x256x256xbf16> to vector<256x256xbf16>
    %cst_29 = arith.constant dense<0.000000e+00> : vector<16x256xf32>
    %45 = tpu.matmul %42, %44, %cst_29 {dimension_numbers = #tpu.dot_dimension_numbers<[1], [0], [0], [1], [0, 0, 1, 1], [], []>} : vector<16x256xbf16>, vector<256x256xbf16>, vector<16x256xf32> -> vector<16x256xf32>
    %46 = arith.addf %38, %45 : vector<16x256xf32>
    %c0_30 = arith.constant 0 : index
    %c0_31 = arith.constant 0 : index
    %47 = vector.load %arg5[%c0_30, %c0_31] : memref<1x256xf32, #tpu.memory_space<vmem>>, vector<1x256xf32>
    %48 = vector.broadcast %47 : vector<1x256xf32> to vector<16x256xf32>
    %49 = arith.addf %46, %48 : vector<16x256xf32>
    %50 = arith.addf %49, %1 : vector<16x256xf32>
    %cst_32 = arith.constant 0.000000e+00 : f32
    %51 = vector.broadcast %cst_32 : f32 to vector<16x256xf32>
    %52 = arith.maximumf %50, %51 : vector<16x256xf32>
    %c0_33 = arith.constant 0 : index
    %c0_34 = arith.constant 0 : index
    %c0_35 = arith.constant 0 : index
    %53 = vector.load %arg6[%c0_33, %c0_34, %c0_35] : memref<1x16x256xf32, #tpu.memory_space<vmem>>, vector<1x16x256xf32>
    %54 = vector.shape_cast %53 : vector<1x16x256xf32> to vector<16x256xf32>
    %55 = vector.shape_cast %52 : vector<16x256xf32> to vector<1x16x256xf32>
    tpu.vector_store %arg6[%c0_33, %c0_34, %c0_35], %55 {strides = array<i32>} : memref<1x16x256xf32, #tpu.memory_space<vmem>>, vector<1x16x256xf32>,
    return
  }
  func.func @transform_0(%arg0: i32) -> (i32, i32, i32) {
    %c0_i32 = arith.constant 0 : i32
    %c0_i32_0 = arith.constant 0 : i32
    %c0_i32_1 = arith.constant 0 : i32
    return %arg0, %c0_i32, %c0_i32_0 : i32, i32, i32
  }
  func.func @transform_1(%arg0: i32) -> (i32, i32, i32) {
    %c0_i32 = arith.constant 0 : i32
    %c0_i32_0 = arith.constant 0 : i32
    %c0_i32_1 = arith.constant 0 : i32
    %c0_i32_2 = arith.constant 0 : i32
    return %c0_i32, %c0_i32_0, %c0_i32_1 : i32, i32, i32
  }
  func.func @transform_2(%arg0: i32) -> (i32, i32) {
    %c0_i32 = arith.constant 0 : i32
    %c0_i32_0 = arith.constant 0 : i32
    %c0_i32_1 = arith.constant 0 : i32
    return %c0_i32, %c0_i32_0 : i32, i32
  }
  func.func @transform_3(%arg0: i32) -> (i32, i32, i32) {
    %c0_i32 = arith.constant 0 : i32
    %c0_i32_0 = arith.constant 0 : i32
    %c0_i32_1 = arith.constant 0 : i32
    %c0_i32_2 = arith.constant 0 : i32
    return %c0_i32, %c0_i32_0, %c0_i32_1 : i32, i32, i32
  }
  func.func @transform_4(%arg0: i32) -> (i32, i32) {
    %c0_i32 = arith.constant 0 : i32
    %c0_i32_0 = arith.constant 0 : i32
    %c0_i32_1 = arith.constant 0 : i32
    return %c0_i32, %c0_i32_0 : i32, i32
  }
  func.func @transform_5(%arg0: i32) -> (i32, i32, i32) {
    %c0_i32 = arith.constant 0 : i32
    %c0_i32_0 = arith.constant 0 : i32
    %c0_i32_1 = arith.constant 0 : i32
    return %arg0, %c0_i32, %c0_i32_0 : i32, i32, i32
  }
}

</mosaic_0001>

<llo_original>
// kernel: tile.29
$region0: #{tile.29}
  %s0 = inlined_call_operand.vmem [shape: f32[16,16], index: 0, kind: input, shape index: {}]
  %s1 = inlined_call_operand.vmem [shape: f32[1,256], index: 1, kind: output, shape index: {}]
  $region1: #{tile.29} parent=0
    #allocation0 [shape = 'u8[8192]{0}', space=vmem, size = 0x2000, scoped, tag = 'scoped mem for output reshape']
    %s2 = smov 3
    %v3 = vld [vmem:[%s0] ss:$8 sm:%s2]
    %vm4 = vcmask 130048
    %5 = vst.msk [vmem:[#allocation0] ss:$8 sm:$0x3] %vm4, %v3
    %s6 = scalar_lea.vmem %s0, 7
    %s7 = smov 3
    %v8 = vld [vmem:[%s6] ss:$8 sm:%s7]
    %9 = vrot.lane.b32.xlu0 %v8, 112
    %v10 = vpop.permute.xlu0 %9
    %vm11 = vcmask 1048448
    %12 = vst.msk [vmem:[#allocation0] ss:$8 sm:$0x3] %vm11, %v10
    %s13 = scalar_lea.vmem %s0, 6
    %s14 = smov 3
    %v15 = vld [vmem:[%s13] ss:$8 sm:%s14]
    %16 = vrot.lane.b32.xlu0 %v15, 96
    %v17 = vpop.permute.xlu0 %16
    %vm18 = vcmask 917248
    %19 = vst.msk [vmem:[#allocation0] ss:$8 sm:$0x3] %vm18, %v17
    %s20 = scalar_lea.vmem %s0, 5
    %s21 = smov 3
    %v22 = vld [vmem:[%s20] ss:$8 sm:%s21]
    %23 = vrot.lane.b32.xlu0 %v22, 80
    %v24 = vpop.permute.xlu0 %23
    %vm25 = vcmask 786048
    %26 = vst.msk [vmem:[#allocation0] ss:$8 sm:$0x3] %vm25, %v24
    %s27 = scalar_lea.vmem %s0, 4
    %s28 = smov 3
    %v29 = vld [vmem:[%s27] ss:$8 sm:%s28]
    %30 = vrot.lane.b32.xlu0 %v29, 64
    %v31 = vpop.permute.xlu0 %30
    %vm32 = vcmask 654848
    %33 = vst.msk [vmem:[#allocation0] ss:$8 sm:$0x3] %vm32, %v31
    %s34 = scalar_lea.vmem %s0, 3
    %s35 = smov 3
    %v36 = vld [vmem:[%s34] ss:$8 sm:%s35]
    %37 = vrot.lane.b32.xlu0 %v36, 48
    %v38 = vpop.permute.xlu0 %37
    %vm39 = vcmask 523648
    %40 = vst.msk [vmem:[#allocation0] ss:$8 sm:$0x3] %vm39, %v38
    %s41 = scalar_lea.vmem %s0, 2
    %s42 = smov 3
    %v43 = vld [vmem:[%s41] ss:$8 sm:%s42]
    %44 = vrot.lane.b32.xlu0 %v43, 32
    %v45 = vpop.permute.xlu0 %44
    %vm46 = vcmask 392448
    %47 = vst.msk [vmem:[#allocation0] ss:$8 sm:$0x3] %vm46, %v45
    %s48 = scalar_lea.vmem %s0, 1
    %s49 = smov 3
    %v50 = vld [vmem:[%s48] ss:$8 sm:%s49]
    %51 = vrot.lane.b32.xlu0 %v50, 16
    %v52 = vpop.permute.xlu0 %51
    %vm53 = vcmask 261248
    %54 = vst.msk [vmem:[#allocation0] ss:$8 sm:$0x3] %vm53, %v52
    %s56 = sshll.u32 1, 1
    %s57 = ssub.s32 %s56, 1
    %v59 = vld [vmem:[#allocation0] sm:%s57]
    %s60 = sshll.u32 1, 1
    %s61 = ssub.s32 %s60, 1
    %62 = vst [vmem:[%s1] sm:%s61] %v59
    %s63 = scalar_lea.vmem [#allocation0], 8
    %v64 = vld [vmem:[%s63] sm:%s57]
    %s65 = sshll.u32 1, 1
    %s66 = ssub.s32 %s65, 1
    %s67 = scalar_lea.vmem %s1, 1
    %68 = vst [vmem:[%s67] sm:%s66] %v64

// kernel: tile.28
$region0: #{tile.28}
  #allocation2 [shape = 's32[1]{0}', space=sflag, size = 0x4, scoped, tag = 'scoped memory for tile.28']
  %s0 = inlined_call_operand.hbm [shape: f32[16], index: 0, kind: input, shape index: {}]
  %s1 = inlined_call_operand.vmem [shape: f32[16,16], index: 1, kind: output, shape index: {}]
  $region1: #{tile.28} parent=0
    #allocation0 [shape = 'u8[512]{0}', space=vmem, size = 0x400, scoped, tag = 'operand span for operand 0']
    #allocation1 [shape = 's32[1]{0}', space=sflag, size = 0x4, scoped, tag = 'scoped memory for tile.28']
    %2 = vsyncpa [#allocation1], 0
    // Predicated region
    $region2: #{tile.28} parent=1 // pred_check
      _
    $region3: #{tile.28} parent=1 // pred_check_branch
      %4 = sbr.rel (0) target = $region5
    $region4: #{tile.28} parent=1 // pred_region
      %s6 = ssub.s32 16, 16
      %7 = vsyncadd [#allocation1], %s6
      %s9 = sshll.u32 [#allocation0], 4
      %s10 = int_to_ptr.vmem [resolvable:$true] %s9
      %12 = dma.hbm_to_vmem [thread:$0]  %s0, 16, %s10, [#allocation1]
    $region5: #{tile.28} parent=1 // pred_fallthru
      _
    // Predicated region
    $region6: #{tile.28} parent=1 // pred_check
      _
    $region7: #{tile.28} parent=1 // pred_check_branch
      %14 = sbr.rel (0) target = $region9
    $region8: #{tile.28} parent=1 // pred_region
      %15 = dma.done [#allocation1], 16
    $region9: #{tile.28} parent=1 // pred_fallthru
      _
    %v16 = vld [vmem:[#allocation0] ss:$0 sm:$0xff]
    %17 = vst [vmem:[%s1] sm:$0xff] %v16
    %s18 = scalar_lea.vmem %s1, 8
    %19 = vst [vmem:[%s18] sm:$0xff] %v16
    %20 = vsyncpa [#allocation1], 1

// kernel: upconv_forward.2
$region0: #{upconv_forward.2}
  #allocation0 [shape = 'u32[]', space=smem, size = 0x4, offset = 0x4, fixed_abs, tag = 'smem constant byte address 0x4 - core index']
  #allocation1 [shape = 'u32[144,128]{1,0:T(1,128)}', space=vmem, size = 0x12000, scoped, tag = 'internal scratch']
  %s0 = inlined_call_operand.vmem [shape: f32[16,8], index: 0, kind: input, shape index: {}]
  %s1 = inlined_call_operand.vmem [shape: f32[32,128], index: 1, kind: input, shape index: {}]
  %s2 = inlined_call_operand.vmem [shape: f32[64,128], index: 2, kind: input, shape index: {}]
  %s3 = inlined_call_operand.vmem [shape: f32[2,8,32], index: 3, kind: input, shape index: {}]
  %s4 = inlined_call_operand.vmem [shape: f32[2,16,64], index: 4, kind: input, shape index: {}]
  %s5 = inlined_call_operand.vmem [shape: bf16[3,128,256], index: 5, kind: input, shape index: {}]
  %s6 = inlined_call_operand.vmem [shape: f32[1,256], index: 6, kind: input, shape index: {}]
  %s7 = inlined_call_operand.vmem [shape: bf16[128,256], index: 7, kind: input, shape index: {}]
  %s8 = inlined_call_operand.vmem [shape: f32[1,256], index: 8, kind: input, shape index: {}]
  %s9 = inlined_call_operand.vmem [shape: bf16[3,256,256], index: 9, kind: input, shape index: {}]
  %s10 = inlined_call_operand.vmem [shape: f32[1,256], index: 10, kind: input, shape index: {}]
  %s11 = inlined_call_operand.vmem [shape: f32[2,16,256], index: 11, kind: output, shape index: {}]
  %s12 = sld [smem:[#allocation0]]
  $region77: #{upconv_forward.2} parent=0
    _
  %s14 = ssub.s32 1, %s12
  %s15 = scalar_select 0, %s14, %s12
  loop: start=0, step=1, limit=4
  $region2: #{upconv_forward.2} parent=0 // loop_pre_header
    _
  $region3: #{upconv_forward.2} parent=0 // loop_header
    %s17 = sphi 0, %s21
    %p18 = scmp.ge.s32.totalorder %s17, 4
    %s25 = sphi 0, %s25
    %s27 = sphi 0, %s25
    %s28 = sphi 0, %s27
    %s42 = sphi 0, %s28
    %s46 = sphi 0, %s46
    %s48 = sphi 0, %s46
    %s49 = sphi 0, %s48
    %s63 = sphi 0, %s49
    %s67 = sphi 0, %s67
    %s69 = sphi 0, %s67
    %s70 = sphi 0, %s69
    %s84 = sphi 0, %s70
    %s90 = sphi 0, %s92
    %s93 = sphi 0, %s90
    %s94 = sphi 0, %s93
    %s110 = sphi 0, %s94
    %s116 = sphi 0, %s118
    %s119 = sphi 0, %s116
    %s120 = sphi 0, %s119
    %s136 = sphi 0, %s120
    %s140 = sphi 0, %s140
    %s142 = sphi 0, %s140
    %s143 = sphi 0, %s142
    %s157 = sphi 0, %s143
    %s161 = sphi 0, %s161
    %s163 = sphi 0, %s161
    %s164 = sphi 0, %s163
    %s178 = sphi 0, %s164
    %s182 = sphi 0, %s182
    %s184 = sphi 0, %s182
    %s185 = sphi 0, %s184
    %s199 = sphi 0, %s185
    %s203 = sphi 0, %s203
    %s205 = sphi 0, %s203
    %s206 = sphi 0, %s205
    %s220 = sphi 0, %s206
    %s224 = sphi 0, %s224
    %s226 = sphi 0, %s224
    %s227 = sphi 0, %s226
    %s241 = sphi 0, %s227
    %s245 = sphi 0, %s245
    %s247 = sphi 0, %s245
    %s248 = sphi 0, %s247
    %s262 = sphi 0, %s248
    %s268 = sphi 0, %s270
    %s271 = sphi 0, %s268
    %s272 = sphi 0, %s271
    %s288 = sphi 0, %s272
  $region4: #{upconv_forward.2} parent=0 // loop_header_branch
    %20 = sbr.rel (%p18) target = $region8
  $region5: #{upconv_forward.2} parent=0 // loop_body
    %s22 = ssub.s32 %s17, 1
    %s23 = ssub.s32 %s17, 2
    %s24 = sadd.s32 %s17, 1
    %s26 = sadd.s32 %s25, 1
    %p29 = scmp.eq.s32.totalorder %s17, 1
    %p30 = scmp.ne.s32.totalorder %s25, %s27
    %p31 = scmp.eq.s32.totalorder %s17, 0
    %p32 = por %p30, %p31
    %p33 = scmp.ne.s32.totalorder %s25, %s27
    %p34 = scmp.eq.s32.totalorder %s22, 1
    %p35 = por %p33, %p34
    %p36 = scmp.ne.s32.totalorder %s27, %s28
    %p37 = scmp.eq.s32.totalorder %s22, 0
    %p38 = por %p36, %p37
    %p39 = scmp.ne.s32.totalorder %s27, %s28
    %p40 = scmp.eq.s32.totalorder %s23, 1
    %p41 = por %p39, %p40
    %p43 = scmp.ne.s32.totalorder %s28, %s42
    %p44 = scmp.eq.s32.totalorder %s23, 0
    %p45 = por %p43, %p44
    %s47 = sadd.s32 %s46, 1
    %p50 = scmp.eq.s32.totalorder %s17, 1
    %p51 = scmp.ne.s32.totalorder %s46, %s48
    %p52 = scmp.eq.s32.totalorder %s17, 0
    %p53 = por %p51, %p52
    %p54 = scmp.ne.s32.totalorder %s46, %s48
    %p55 = scmp.eq.s32.totalorder %s22, 1
    %p56 = por %p54, %p55
    %p57 = scmp.ne.s32.totalorder %s48, %s49
    %p58 = scmp.eq.s32.totalorder %s22, 0
    %p59 = por %p57, %p58
    %p60 = scmp.ne.s32.totalorder %s48, %s49
    %p61 = scmp.eq.s32.totalorder %s23, 1
    %p62 = por %p60, %p61
    %p64 = scmp.ne.s32.totalorder %s49, %s63
    %p65 = scmp.eq.s32.totalorder %s23, 0
    %p66 = por %p64, %p65
    %s68 = sadd.s32 %s67, 1
    %p71 = scmp.eq.s32.totalorder %s17, 1
    %p72 = scmp.ne.s32.totalorder %s67, %s69
    %p73 = scmp.eq.s32.totalorder %s17, 0
    %p74 = por %p72, %p73
    %p75 = scmp.ne.s32.totalorder %s67, %s69
    %p76 = scmp.eq.s32.totalorder %s22, 1
    %p77 = por %p75, %p76
    %p78 = scmp.ne.s32.totalorder %s69, %s70
    %p79 = scmp.eq.s32.totalorder %s22, 0
    %p80 = por %p78, %p79
    %p81 = scmp.ne.s32.totalorder %s69, %s70
    %p82 = scmp.eq.s32.totalorder %s23, 1
    %p83 = por %p81, %p82
    %p85 = scmp.ne.s32.totalorder %s70, %s84
    %p86 = scmp.eq.s32.totalorder %s23, 0
    %p87 = por %p85, %p86
    %s88 = ssub.s32 %s17, %s24
    %p89 = scmp.eq.s32.totalorder %s88, 0
    %s91 = sadd.s32 %s90, 1
    %s92 = scalar_select %p89, %s90, %s91
    %p95 = pneg %p89
    %p96 = scmp.eq.s32.totalorder %s17, 1
    %p97 = por %p95, %p96
    %p98 = scmp.ne.s32.totalorder %s90, %s93
    %p99 = scmp.eq.s32.totalorder %s17, 0
    %p100 = por %p98, %p99
    %p101 = scmp.ne.s32.totalorder %s90, %s93
    %p102 = scmp.eq.s32.totalorder %s22, 1
    %p103 = por %p101, %p102
    %p104 = scmp.ne.s32.totalorder %s93, %s94
    %p105 = scmp.eq.s32.totalorder %s22, 0
    %p106 = por %p104, %p105
    %p107 = scmp.ne.s32.totalorder %s93, %s94
    %p108 = scmp.eq.s32.totalorder %s23, 1
    %p109 = por %p107, %p108
    %p111 = scmp.ne.s32.totalorder %s94, %s110
    %p112 = scmp.eq.s32.totalorder %s23, 0
    %p113 = por %p111, %p112
    %s114 = ssub.s32 %s17, %s24
    %p115 = scmp.eq.s32.totalorder %s114, 0
    %s117 = sadd.s32 %s116, 1
    %s118 = scalar_select %p115, %s116, %s117
    %p121 = pneg %p115
    %p122 = scmp.eq.s32.totalorder %s17, 1
    %p123 = por %p121, %p122
    %p124 = scmp.ne.s32.totalorder %s116, %s119
    %p125 = scmp.eq.s32.totalorder %s17, 0
    %p126 = por %p124, %p125
    %p127 = scmp.ne.s32.totalorder %s116, %s119
    %p128 = scmp.eq.s32.totalorder %s22, 1
    %p129 = por %p127, %p128
    %p130 = scmp.ne.s32.totalorder %s119, %s120
    %p131 = scmp.eq.s32.totalorder %s22, 0
    %p132 = por %p130, %p131
    %p133 = scmp.ne.s32.totalorder %s119, %s120
    %p134 = scmp.eq.s32.totalorder %s23, 1
    %p135 = por %p133, %p134
    %p137 = scmp.ne.s32.totalorder %s120, %s136
    %p138 = scmp.eq.s32.totalorder %s23, 0
    %p139 = por %p137, %p138
    %s141 = sadd.s32 %s140, 1
    %p144 = scmp.eq.s32.totalorder %s17, 1
    %p145 = scmp.ne.s32.totalorder %s140, %s142
    %p146 = scmp.eq.s32.totalorder %s17, 0
    %p147 = por %p145, %p146
    %p148 = scmp.ne.s32.totalorder %s140, %s142
    %p149 = scmp.eq.s32.totalorder %s22, 1
    %p150 = por %p148, %p149
    %p151 = scmp.ne.s32.totalorder %s142, %s143
    %p152 = scmp.eq.s32.totalorder %s22, 0
    %p153 = por %p151, %p152
    %p154 = scmp.ne.s32.totalorder %s142, %s143
    %p155 = scmp.eq.s32.totalorder %s23, 1
    %p156 = por %p154, %p155
    %p158 = scmp.ne.s32.totalorder %s143, %s157
    %p159 = scmp.eq.s32.totalorder %s23, 0
    %p160 = por %p158, %p159
    %s162 = sadd.s32 %s161, 1
    %p165 = scmp.eq.s32.totalorder %s17, 1
    %p166 = scmp.ne.s32.totalorder %s161, %s163
    %p167 = scmp.eq.s32.totalorder %s17, 0
    %p168 = por %p166, %p167
    %p169 = scmp.ne.s32.totalorder %s161, %s163
    %p170 = scmp.eq.s32.totalorder %s22, 1
    %p171 = por %p169, %p170
    %p172 = scmp.ne.s32.totalorder %s163, %s164
    %p173 = scmp.eq.s32.totalorder %s22, 0
    %p174 = por %p172, %p173
    %p175 = scmp.ne.s32.totalorder %s163, %s164
    %p176 = scmp.eq.s32.totalorder %s23, 1
    %p177 = por %p175, %p176
    %p179 = scmp.ne.s32.totalorder %s164, %s178
    %p180 = scmp.eq.s32.totalorder %s23, 0
    %p181 = por %p179, %p180
    %s183 = sadd.s32 %s182, 1
    %p186 = scmp.eq.s32.totalorder %s17, 1
    %p187 = scmp.ne.s32.totalorder %s182, %s184
    %p188 = scmp.eq.s32.totalorder %s17, 0
    %p189 = por %p187, %p188
    %p190 = scmp.ne.s32.totalorder %s182, %s184
    %p191 = scmp.eq.s32.totalorder %s22, 1
    %p192 = por %p190, %p191
    %p193 = scmp.ne.s32.totalorder %s184, %s185
    %p194 = scmp.eq.s32.totalorder %s22, 0
    %p195 = por %p193, %p194
    %p196 = scmp.ne.s32.totalorder %s184, %s185
    %p197 = scmp.eq.s32.totalorder %s23, 1
    %p198 = por %p196, %p197
    %p200 = scmp.ne.s32.totalorder %s185, %s199
    %p201 = scmp.eq.s32.totalorder %s23, 0
    %p202 = por %p200, %p201
    %s204 = sadd.s32 %s203, 1
    %p207 = scmp.eq.s32.totalorder %s17, 1
    %p208 = scmp.ne.s32.totalorder %s203, %s205
    %p209 = scmp.eq.s32.totalorder %s17, 0
    %p210 = por %p208, %p209
    %p211 = scmp.ne.s32.totalorder %s203, %s205
    %p212 = scmp.eq.s32.totalorder %s22, 1
    %p213 = por %p211, %p212
    %p214 = scmp.ne.s32.totalorder %s205, %s206
    %p215 = scmp.eq.s32.totalorder %s22, 0
    %p216 = por %p214, %p215
    %p217 = scmp.ne.s32.totalorder %s205, %s206
    %p218 = scmp.eq.s32.totalorder %s23, 1
    %p219 = por %p217, %p218
    %p221 = scmp.ne.s32.totalorder %s206, %s220
    %p222 = scmp.eq.s32.totalorder %s23, 0
    %p223 = por %p221, %p222
    %s225 = sadd.s32 %s224, 1
    %p228 = scmp.eq.s32.totalorder %s17, 1
    %p229 = scmp.ne.s32.totalorder %s224, %s226
    %p230 = scmp.eq.s32.totalorder %s17, 0
    %p231 = por %p229, %p230
    %p232 = scmp.ne.s32.totalorder %s224, %s226
    %p233 = scmp.eq.s32.totalorder %s22, 1
    %p234 = por %p232, %p233
    %p235 = scmp.ne.s32.totalorder %s226, %s227
    %p236 = scmp.eq.s32.totalorder %s22, 0
    %p237 = por %p235, %p236
    %p238 = scmp.ne.s32.totalorder %s226, %s227
    %p239 = scmp.eq.s32.totalorder %s23, 1
    %p240 = por %p238, %p239
    %p242 = scmp.ne.s32.totalorder %s227, %s241
    %p243 = scmp.eq.s32.totalorder %s23, 0
    %p244 = por %p242, %p243
    %s246 = sadd.s32 %s245, 1
    %p249 = scmp.eq.s32.totalorder %s17, 1
    %p250 = scmp.ne.s32.totalorder %s245, %s247
    %p251 = scmp.eq.s32.totalorder %s17, 0
    %p252 = por %p250, %p251
    %p253 = scmp.ne.s32.totalorder %s245, %s247
    %p254 = scmp.eq.s32.totalorder %s22, 1
    %p255 = por %p253, %p254
    %p256 = scmp.ne.s32.totalorder %s247, %s248
    %p257 = scmp.eq.s32.totalorder %s22, 0
    %p258 = por %p256, %p257
    %p259 = scmp.ne.s32.totalorder %s247, %s248
    %p260 = scmp.eq.s32.totalorder %s23, 1
    %p261 = por %p259, %p260
    %p263 = scmp.ne.s32.totalorder %s248, %s262
    %p264 = scmp.eq.s32.totalorder %s23, 0
    %p265 = por %p263, %p264
    %s266 = ssub.s32 %s17, %s24
    %p267 = scmp.eq.s32.totalorder %s266, 0
    %s269 = sadd.s32 %s268, 1
    %s270 = scalar_select %p267, %s268, %s269
    %p273 = pneg %p267
    %p274 = scmp.eq.s32.totalorder %s17, 1
    %p275 = por %p273, %p274
    %p276 = scmp.ne.s32.totalorder %s268, %s271
    %p277 = scmp.eq.s32.totalorder %s17, 0
    %p278 = por %p276, %p277
    %p279 = scmp.ne.s32.totalorder %s268, %s271
    %p280 = scmp.eq.s32.totalorder %s22, 1
    %p281 = por %p279, %p280
    %p282 = scmp.ne.s32.totalorder %s271, %s272
    %p283 = scmp.eq.s32.totalorder %s22, 0
    %p284 = por %p282, %p283
    %p285 = scmp.ne.s32.totalorder %s271, %s272
    %p286 = scmp.eq.s32.totalorder %s23, 1
    %p287 = por %p285, %p286
    %p289 = scmp.ne.s32.totalorder %s272, %s288
    %p290 = scmp.eq.s32.totalorder %s23, 0
    %p291 = por %p289, %p290
    %p292 = scmp.le.s32.totalorder 1, %s17
    %p293 = scmp.lt.s32.totalorder %s17, 3
    %p294 = pnand %p292, %p293
    %p295 = pneg %p294
    // Predicated region
    $region9: #{upconv_forward.2} parent=5 // pred_check
      _
    $region10: #{upconv_forward.2} parent=5 // pred_check_branch
      %297 = sbr.rel (%p294) target = $region12
    $region11: #{upconv_forward.2} parent=5 // pred_region
      %s298 = ssub.s32 %s17, 1
      // Predicated region
      $region13: #{upconv_forward.2} parent=11 // pred_check
        %p299 = pneg %p38
      $region14: #{upconv_forward.2} parent=11 // pred_check_branch
        %301 = sbr.rel (%p299) target = $region16
      $region15: #{upconv_forward.2} parent=11 // pred_region
        _
      $region16: #{upconv_forward.2} parent=11 // pred_fallthru
        _
      // Predicated region
      $region17: #{upconv_forward.2} parent=11 // pred_check
        %p302 = pneg %p59
      $region18: #{upconv_forward.2} parent=11 // pred_check_branch
        %304 = sbr.rel (%p302) target = $region20
      $region19: #{upconv_forward.2} parent=11 // pred_region
        _
      $region20: #{upconv_forward.2} parent=11 // pred_fallthru
        _
      // Predicated region
      $region21: #{upconv_forward.2} parent=11 // pred_check
        %p305 = pneg %p80
      $region22: #{upconv_forward.2} parent=11 // pred_check_branch
        %307 = sbr.rel (%p305) target = $region24
      $region23: #{upconv_forward.2} parent=11 // pred_region
        _
      $region24: #{upconv_forward.2} parent=11 // pred_fallthru
        _
      // Predicated region
      $region25: #{upconv_forward.2} parent=11 // pred_check
        %p308 = pneg %p153
      $region26: #{upconv_forward.2} parent=11 // pred_check_branch
        %310 = sbr.rel (%p308) target = $region28
      $region27: #{upconv_forward.2} parent=11 // pred_region
        _
      $region28: #{upconv_forward.2} parent=11 // pred_fallthru
        _
      // Predicated region
      $region29: #{upconv_forward.2} parent=11 // pred_check
        %p311 = pneg %p174
      $region30: #{upconv_forward.2} parent=11 // pred_check_branch
        %313 = sbr.rel (%p311) target = $region32
      $region31: #{upconv_forward.2} parent=11 // pred_region
        _
      $region32: #{upconv_forward.2} parent=11 // pred_fallthru
        _
      // Predicated region
      $region33: #{upconv_forward.2} parent=11 // pred_check
        %p314 = pneg %p195
      $region34: #{upconv_forward.2} parent=11 // pred_check_branch
        %316 = sbr.rel (%p314) target = $region36
      $region35: #{upconv_forward.2} parent=11 // pred_region
        _
      $region36: #{upconv_forward.2} parent=11 // pred_fallthru
        _
      // Predicated region
      $region37: #{upconv_forward.2} parent=11 // pred_check
        %p317 = pneg %p216
      $region38: #{upconv_forward.2} parent=11 // pred_check_branch
        %319 = sbr.rel (%p317) target = $region40
      $region39: #{upconv_forward.2} parent=11 // pred_region
        _
      $region40: #{upconv_forward.2} parent=11 // pred_fallthru
        _
      // Predicated region
      $region41: #{upconv_forward.2} parent=11 // pred_check
        %p320 = pneg %p237
      $region42: #{upconv_forward.2} parent=11 // pred_check_branch
        %322 = sbr.rel (%p320) target = $region44
      $region43: #{upconv_forward.2} parent=11 // pred_region
        _
      $region44: #{upconv_forward.2} parent=11 // pred_fallthru
        _
      // Predicated region
      $region45: #{upconv_forward.2} parent=11 // pred_check
        %p323 = pneg %p258
      $region46: #{upconv_forward.2} parent=11 // pred_check_branch
        %325 = sbr.rel (%p323) target = $region48
      $region47: #{upconv_forward.2} parent=11 // pred_region
        _
      $region48: #{upconv_forward.2} parent=11 // pred_fallthru
        _
    $region12: #{upconv_forward.2} parent=5 // pred_fallthru
      _
    %p326 = scmp.lt.s32.totalorder %s17, 2
    // Predicated region
    $region49: #{upconv_forward.2} parent=5 // pred_check
      %p327 = pneg %p326
    $region50: #{upconv_forward.2} parent=5 // pred_check_branch
      %329 = sbr.rel (%p327) target = $region52
    $region51: #{upconv_forward.2} parent=5 // pred_region
      // Predicated region
      $region53: #{upconv_forward.2} parent=51 // pred_check
        %p330 = pneg %p100
      $region54: #{upconv_forward.2} parent=51 // pred_check_branch
        %332 = sbr.rel (%p330) target = $region56
      $region55: #{upconv_forward.2} parent=51 // pred_region
        %p333 = scmp.lt.s32.totalorder %s17, 1
        %s334 = scalar_select %p333, %s17, 1
        %s335 = smul.addr %s334, 8
        %s336 = scalar_lea.vmem %s3, %s335
      $region56: #{upconv_forward.2} parent=51 // pred_fallthru
        _
      // Predicated region
      $region57: #{upconv_forward.2} parent=51 // pred_check
        %p337 = pneg %p126
      $region58: #{upconv_forward.2} parent=51 // pred_check_branch
        %339 = sbr.rel (%p337) target = $region60
      $region59: #{upconv_forward.2} parent=51 // pred_region
        %p340 = scmp.lt.s32.totalorder %s17, 1
        %s341 = scalar_select %p340, %s17, 1
        %s342 = smul.addr %s341, 2
        %s343 = smul.addr %s342, 8
        %s344 = scalar_lea.vmem %s4, %s343
      $region60: #{upconv_forward.2} parent=51 // pred_fallthru
        _
    $region52: #{upconv_forward.2} parent=5 // pred_fallthru
      _
    %p345 = scmp.le.s32.totalorder 1, %s17
    %p346 = scmp.lt.s32.totalorder %s17, 3
    %p347 = pnand %p345, %p346
    %p348 = pneg %p347
    // Predicated region
    $region61: #{upconv_forward.2} parent=5 // pred_check
      _
    $region62: #{upconv_forward.2} parent=5 // pred_check_branch
      %350 = sbr.rel (%p347) target = $region64
    $region63: #{upconv_forward.2} parent=5 // pred_region
      %s351 = ssub.s32 %s17, 1
      %p352 = pneg %p38
      %p353 = pneg %p35
      %p354 = pneg %p59
      %p355 = pneg %p56
      %p356 = pneg %p80
      %p357 = pneg %p77
      %p358 = scmp.lt.s32.totalorder %s22, 1
      %s359 = scalar_select %p358, %s22, 1
      %s360 = smul.addr %s359, 8
      %s361 = scalar_lea.vmem %s3, %s360
      %p362 = pneg %p106
      %p363 = pneg %p103
      %p364 = scmp.lt.s32.totalorder %s22, 1
      %s365 = scalar_select %p364, %s22, 1
      %s366 = smul.addr %s365, 2
      %s367 = smul.addr %s366, 8
      %s368 = scalar_lea.vmem %s4, %s367
      %p369 = pneg %p132
      %p370 = pneg %p129
      %p371 = pneg %p153
      %p372 = pneg %p150
      %p373 = pneg %p174
      %p374 = pneg %p171
      %p375 = pneg %p195
      %p376 = pneg %p192
      %p377 = pneg %p216
      %p378 = pneg %p213
      %p379 = pneg %p237
      %p380 = pneg %p234
      %p381 = pneg %p258
      %p382 = pneg %p255
      %p383 = pneg %p284
      %p384 = pneg %p281
      %p385 = scmp.lt.s32.totalorder %s22, 1
      %s386 = scalar_select %p385, %s22, 1
      %s387 = smul.addr %s386, 4
      %s388 = smul.addr %s387, 8
      %s389 = scalar_lea.vmem %s11, %s388
      %p390 = scmp.lt.s32.totalorder %s22, 1
      %s391 = scalar_select %p390, %s22, 1
      %s392 = smul.addr %s391, 8
      %s393 = scalar_lea.vmem %s3, %s392
      %p394 = scmp.lt.s32.totalorder %s22, 1
      %s395 = scalar_select %p394, %s22, 1
      %s396 = smul.addr %s395, 2
      %s397 = smul.addr %s396, 8
      %s398 = scalar_lea.vmem %s4, %s397
      %p399 = scmp.lt.s32.totalorder %s22, 1
      %s400 = scalar_select %p399, %s22, 1
      %s401 = smul.addr %s400, 4
      %s402 = smul.addr %s401, 8
      %s403 = scalar_lea.vmem %s11, %s402
      %v405 = vld [vmem:[%s0] sm:$0xff]
      %v406 = vld [vmem:[%s0 + $0x8] sm:$0xff]
      %v407 = vld [vmem:[%s393] sm:$0xff]
      %vm408 = vcmask 64512
      %v410 = vsel %vm408, %v405, 0
      %v413 = vsel %vm408, %v406, 0
      %415 = vmatprep.subr.mxu0 0.0
      %416 = vmatpush1.msra.mxu0 0.0
      %417 = vmatprep.subr.mxu0 0.0
      %418 = vmatpush1.msra.mxu0 0.0
      %419 = vmatprep.subr.mxu0 0.0
      %420 = vmatpush1.msra.mxu0 0.0
      %421 = vmatprep.subr.mxu0 0.0
      %422 = vmatpush1.msra.mxu0 0.0
      %423 = vmatprep.subr.mxu0 0.0
      %424 = vmatpush1.msra.mxu0 0.0
      %425 = vmatprep.subr.mxu0 0.0
      %426 = vmatpush1.msra.mxu0 0.0
      %427 = vmatprep.subr.mxu0 0.0
      %428 = vmatpush1.msra.mxu0 0.0
      %429 = vmatprep.subr.mxu0 0.0
      %430 = vmatpush1.msra.mxu0 0.0
      %431 = vmatprep.subr.mxu0 0.0
      %432 = vmatpush1.msra.mxu0 0.0
      %433 = vmatprep.subr.mxu0 0.0
      %434 = vmatpush1.msra.mxu0 0.0
      %435 = vmatprep.subr.mxu0 0.0
      %436 = vmatpush1.msra.mxu0 0.0
      %437 = vmatprep.subr.mxu0 0.0
      %438 = vmatpush1.msra.mxu0 0.0
      %439 = vmatprep.subr.mxu0 0.0
      %440 = vmatpush1.msra.mxu0 0.0
      %441 = vmatprep.subr.mxu0 0.0
      %442 = vmatpush1.msra.mxu0 0.0
      %443 = vmatprep.subr.mxu0 0.0
      %444 = vmatpush1.msra.mxu0 0.0
      %445 = vmatprep.subr.mxu0 0.0
      %446 = vmatpush1.msra.mxu0 %v407
      %447 = vmatprep.subr.mxu0 0.0
      %448 = vmatpush2.msra.mxu0 0.0
      %449 = vmatprep.subr.mxu0 0.0
      %450 = vmatpush2.msra.mxu0 0.0
      %451 = vmatprep.subr.mxu0 0.0
      %452 = vmatpush2.msra.mxu0 0.0
      %453 = vmatprep.subr.mxu0 0.0
      %454 = vmatpush2.msra.mxu0 0.0
      %455 = vmatprep.subr.mxu0 0.0
      %456 = vmatpush2.msra.mxu0 0.0
      %457 = vmatprep.subr.mxu0 0.0
      %458 = vmatpush2.msra.mxu0 0.0
      %459 = vmatprep.subr.mxu0 0.0
      %460 = vmatpush2.msra.mxu0 0.0
      %461 = vmatprep.subr.mxu0 0.0
      %462 = vmatpush2.msra.mxu0 0.0
      %463 = vmatprep.subr.mxu0 0.0
      %464 = vmatpush2.msra.mxu0 0.0
      %465 = vmatprep.subr.mxu0 0.0
      %466 = vmatpush2.msra.mxu0 0.0
      %467 = vmatprep.subr.mxu0 0.0
      %468 = vmatpush2.msra.mxu0 0.0
      %469 = vmatprep.subr.mxu0 0.0
      %470 = vmatpush2.msra.mxu0 0.0
      %471 = vmatprep.subr.mxu0 0.0
      %472 = vmatpush2.msra.mxu0 0.0
      %473 = vmatprep.subr.mxu0 0.0
      %474 = vmatpush2.msra.mxu0 0.0
      %475 = vmatprep.subr.mxu0 0.0
      %476 = vmatpush2.msra.mxu0 0.0
      %477 = vmatprep.subr.mxu0 0.0
      %478 = vmatpush2.msra.mxu0 0.0
      %479 = vmatprep.mubr.f32.mxu0 0.0
      %480 = vmatmul.mubr.f32.gmra.mxu0 %v410
      %v481 = vpop.f32.mrf.mxu0
      %v482 = vadd.f32 0.0, %v481
      %v483 = vpop.f32.mrf.mxu0
      %484 = vmatprep.mubr.f32.mxu0 0.0
      %485 = vmatmul.mubr.f32.gmra.mxu0 %v413
      %v486 = vpop.f32.mrf.mxu0
      %v487 = vadd.f32 0.0, %v486
      %v488 = vpop.f32.mrf.mxu0
      %489 = vdwg.mxu0
      %v490 = vld [vmem:[%s1] sm:$0xff]
      %v491 = vld [vmem:[%s1 + $0x8] sm:$0xff]
      %v492 = vld [vmem:[%s1 + $0x10] sm:$0xff]
      %v493 = vld [vmem:[%s1 + $0x18] sm:$0xff]
      %v494 = vld [vmem:[%s398] sm:$0xff]
      %v495 = vld [vmem:[%s398 + $0x8] sm:$0xff]
      %v496 = vld [vmem:[%s2] sm:$0xff]
      %v497 = vld [vmem:[%s2 + $0x8] sm:$0xff]
      %v498 = vld [vmem:[%s2 + $0x10] sm:$0xff]
      %v499 = vld [vmem:[%s2 + $0x18] sm:$0xff]
      %v500 = vld [vmem:[%s2 + $0x20] sm:$0xff]
      %v501 = vld [vmem:[%s2 + $0x28] sm:$0xff]
      %v502 = vld [vmem:[%s2 + $0x30] sm:$0xff]
      %v503 = vld [vmem:[%s2 + $0x38] sm:$0xff]
      %vm504 = vcmask 523264
      %v506 = vsel %vm504, %v494, 0
      %v509 = vsel %vm504, %v495, 0
      %511 = vmatprep.subr.mxu0 0.0
      %512 = vmatpush1.msra.mxu0 0.0
      %513 = vmatprep.subr.mxu0 0.0
      %514 = vmatpush1.msra.mxu0 0.0
      %515 = vmatprep.subr.mxu0 0.0
      %516 = vmatpush1.msra.mxu0 0.0
      %517 = vmatprep.subr.mxu0 0.0
      %518 = vmatpush1.msra.mxu0 0.0
      %519 = vmatprep.subr.mxu0 0.0
      %520 = vmatpush1.msra.mxu0 0.0
      %521 = vmatprep.subr.mxu0 0.0
      %522 = vmatpush1.msra.mxu0 0.0
      %523 = vmatprep.subr.mxu0 0.0
      %524 = vmatpush1.msra.mxu0 0.0
      %525 = vmatprep.subr.mxu0 0.0
      %526 = vmatpush1.msra.mxu0 0.0
      %527 = vmatprep.subr.mxu0 0.0
      %528 = vmatpush1.msra.mxu0 %v503
      %529 = vmatprep.subr.mxu0 0.0
      %530 = vmatpush1.msra.mxu0 %v502
      %531 = vmatprep.subr.mxu0 0.0
      %532 = vmatpush1.msra.mxu0 %v501
      %533 = vmatprep.subr.mxu0 0.0
      %534 = vmatpush1.msra.mxu0 %v500
      %535 = vmatprep.subr.mxu0 0.0
      %536 = vmatpush1.msra.mxu0 %v499
      %537 = vmatprep.subr.mxu0 0.0
      %538 = vmatpush1.msra.mxu0 %v498
      %539 = vmatprep.subr.mxu0 0.0
      %540 = vmatpush1.msra.mxu0 %v497
      %541 = vmatprep.subr.mxu0 0.0
      %542 = vmatpush1.msra.mxu0 %v496
      %543 = vmatprep.subr.mxu0 0.0
      %544 = vmatpush2.msra.mxu0 0.0
      %545 = vmatprep.subr.mxu0 0.0
      %546 = vmatpush2.msra.mxu0 0.0
      %547 = vmatprep.subr.mxu0 0.0
      %548 = vmatpush2.msra.mxu0 0.0
      %549 = vmatprep.subr.mxu0 0.0
      %550 = vmatpush2.msra.mxu0 0.0
      %551 = vmatprep.subr.mxu0 0.0
      %552 = vmatpush2.msra.mxu0 0.0
      %553 = vmatprep.subr.mxu0 0.0
      %554 = vmatpush2.msra.mxu0 0.0
      %555 = vmatprep.subr.mxu0 0.0
      %556 = vmatpush2.msra.mxu0 0.0
      %557 = vmatprep.subr.mxu0 0.0
      %558 = vmatpush2.msra.mxu0 0.0
      %559 = vmatprep.subr.mxu0 0.0
      %560 = vmatpush2.msra.mxu0 0.0
      %561 = vmatprep.subr.mxu0 0.0
      %562 = vmatpush2.msra.mxu0 0.0
      %563 = vmatprep.subr.mxu0 0.0
      %564 = vmatpush2.msra.mxu0 0.0
      %565 = vmatprep.subr.mxu0 0.0
      %566 = vmatpush2.msra.mxu0 0.0
      %567 = vmatprep.subr.mxu0 0.0
      %568 = vmatpush2.msra.mxu0 0.0
      %569 = vmatprep.subr.mxu0 0.0
      %570 = vmatpush2.msra.mxu0 0.0
      %571 = vmatprep.subr.mxu0 0.0
      %572 = vmatpush2.msra.mxu0 0.0
      %573 = vmatprep.subr.mxu0 0.0
      %574 = vmatpush2.msra.mxu0 0.0
      %575 = vmatprep.mubr.f32.mxu0 0.0
      %576 = vmatmul.mubr.f32.gmra.mxu0 %v506
      %v577 = vpop.f32.mrf.mxu0
      %v578 = vadd.f32 0.0, %v577
      %v579 = vpop.f32.mrf.mxu0
      %580 = vmatprep.mubr.f32.mxu0 0.0
      %581 = vmatmul.mubr.f32.gmra.mxu0 %v509
      %v582 = vpop.f32.mrf.mxu0
      %v583 = vadd.f32 0.0, %v582
      %v584 = vpop.f32.mrf.mxu0
      %585 = vdwg.mxu0
      %vm586 = vcmask 261120
      %v588 = vsel %vm586, %v482, 0
      %v591 = vsel %vm586, %v487, 0
      %593 = vmatprep.subr.mxu0 0.0
      %594 = vmatpush1.msra.mxu0 0.0
      %595 = vmatprep.subr.mxu0 0.0
      %596 = vmatpush1.msra.mxu0 0.0
      %597 = vmatprep.subr.mxu0 0.0
      %598 = vmatpush1.msra.mxu0 0.0
      %599 = vmatprep.subr.mxu0 0.0
      %600 = vmatpush1.msra.mxu0 0.0
      %601 = vmatprep.subr.mxu0 0.0
      %602 = vmatpush1.msra.mxu0 0.0
      %603 = vmatprep.subr.mxu0 0.0
      %604 = vmatpush1.msra.mxu0 0.0
      %605 = vmatprep.subr.mxu0 0.0
      %606 = vmatpush1.msra.mxu0 0.0
      %607 = vmatprep.subr.mxu0 0.0
      %608 = vmatpush1.msra.mxu0 0.0
      %609 = vmatprep.subr.mxu0 0.0
      %610 = vmatpush1.msra.mxu0 0.0
      %611 = vmatprep.subr.mxu0 0.0
      %612 = vmatpush1.msra.mxu0 0.0
      %613 = vmatprep.subr.mxu0 0.0
      %614 = vmatpush1.msra.mxu0 0.0
      %615 = vmatprep.subr.mxu0 0.0
      %616 = vmatpush1.msra.mxu0 0.0
      %617 = vmatprep.subr.mxu0 0.0
      %618 = vmatpush1.msra.mxu0 %v493
      %619 = vmatprep.subr.mxu0 0.0
      %620 = vmatpush1.msra.mxu0 %v492
      %621 = vmatprep.subr.mxu0 0.0
      %622 = vmatpush1.msra.mxu0 %v491
      %623 = vmatprep.subr.mxu0 0.0
      %624 = vmatpush1.msra.mxu0 %v490
      %625 = vmatprep.subr.mxu0 0.0
      %626 = vmatpush2.msra.mxu0 0.0
      %627 = vmatprep.subr.mxu0 0.0
      %628 = vmatpush2.msra.mxu0 0.0
      %629 = vmatprep.subr.mxu0 0.0
      %630 = vmatpush2.msra.mxu0 0.0
      %631 = vmatprep.subr.mxu0 0.0
      %632 = vmatpush2.msra.mxu0 0.0
      %633 = vmatprep.subr.mxu0 0.0
      %634 = vmatpush2.msra.mxu0 0.0
      %635 = vmatprep.subr.mxu0 0.0
      %636 = vmatpush2.msra.mxu0 0.0
      %637 = vmatprep.subr.mxu0 0.0
      %638 = vmatpush2.msra.mxu0 0.0
      %639 = vmatprep.subr.mxu0 0.0
      %640 = vmatpush2.msra.mxu0 0.0
      %641 = vmatprep.subr.mxu0 0.0
      %642 = vmatpush2.msra.mxu0 0.0
      %643 = vmatprep.subr.mxu0 0.0
      %644 = vmatpush2.msra.mxu0 0.0
      %645 = vmatprep.subr.mxu0 0.0
      %646 = vmatpush2.msra.mxu0 0.0
      %647 = vmatprep.subr.mxu0 0.0
      %648 = vmatpush2.msra.mxu0 0.0
      %649 = vmatprep.subr.mxu0 0.0
      %650 = vmatpush2.msra.mxu0 0.0
      %651 = vmatprep.subr.mxu0 0.0
      %652 = vmatpush2.msra.mxu0 0.0
      %653 = vmatprep.subr.mxu0 0.0
      %654 = vmatpush2.msra.mxu0 0.0
      %655 = vmatprep.subr.mxu0 0.0
      %656 = vmatpush2.msra.mxu0 0.0
      %657 = vmatprep.mubr.f32.mxu0 0.0
      %658 = vmatmul.mubr.f32.gmra.mxu0 %v588
      %v659 = vpop.f32.mrf.mxu0
      %v660 = vadd.f32 %v578, %v659
      %v661 = vpop.f32.mrf.mxu0
      %662 = vmatprep.mubr.f32.mxu0 0.0
      %663 = vmatmul.mubr.f32.gmra.mxu0 %v591
      %v664 = vpop.f32.mrf.mxu0
      %v665 = vadd.f32 %v583, %v664
      %v666 = vpop.f32.mrf.mxu0
      %667 = vdwg.mxu0
      %vm670 = vcmask 1040384
      %v671 = vrot.slane %v660, 7
      %v672 = vrot.slane %v665, 7
      %v673 = vsel %vm670, %v671, %v672
      %v676 = vsel %vm670, 0.0, %v671
      %v677 = vpack.c.bf16 %v673, %v676
      %v678 = vld [vmem:[%s5] sm:$0xff]
      %v679 = vld [vmem:[%s5 + $0x8] sm:$0xff]
      %v680 = vld [vmem:[%s5 + $0x10] sm:$0xff]
      %v681 = vld [vmem:[%s5 + $0x18] sm:$0xff]
      %v682 = vld [vmem:[%s5 + $0x20] sm:$0xff]
      %v683 = vld [vmem:[%s5 + $0x28] sm:$0xff]
      %v684 = vld [vmem:[%s5 + $0x30] sm:$0xff]
      %v685 = vld [vmem:[%s5 + $0x38] sm:$0xff]
      %v686 = vld [vmem:[%s5 + $0x40] sm:$0xff]
      %v687 = vld [vmem:[%s5 + $0x48] sm:$0xff]
      %v688 = vld [vmem:[%s5 + $0x50] sm:$0xff]
      %v689 = vld [vmem:[%s5 + $0x58] sm:$0xff]
      %v690 = vld [vmem:[%s5 + $0x60] sm:$0xff]
      %v691 = vld [vmem:[%s5 + $0x68] sm:$0xff]
      %v692 = vld [vmem:[%s5 + $0x70] sm:$0xff]
      %v693 = vld [vmem:[%s5 + $0x78] sm:$0xff]
      %v694 = vpack.c.bf16 %v665, %v660
      %s695 = scalar_lea.vmem %s5, 128
      %v696 = vld [vmem:[%s695] sm:$0xff]
      %v697 = vld [vmem:[%s695 + $0x8] sm:$0xff]
      %v698 = vld [vmem:[%s695 + $0x10] sm:$0xff]
      %v699 = vld [vmem:[%s695 + $0x18] sm:$0xff]
      %v700 = vld [vmem:[%s695 + $0x20] sm:$0xff]
      %v701 = vld [vmem:[%s695 + $0x28] sm:$0xff]
      %v702 = vld [vmem:[%s695 + $0x30] sm:$0xff]
      %v703 = vld [vmem:[%s695 + $0x38] sm:$0xff]
      %v704 = vld [vmem:[%s695 + $0x40] sm:$0xff]
      %v705 = vld [vmem:[%s695 + $0x48] sm:$0xff]
      %v706 = vld [vmem:[%s695 + $0x50] sm:$0xff]
      %v707 = vld [vmem:[%s695 + $0x58] sm:$0xff]
      %v708 = vld [vmem:[%s695 + $0x60] sm:$0xff]
      %v709 = vld [vmem:[%s695 + $0x68] sm:$0xff]
      %v710 = vld [vmem:[%s695 + $0x70] sm:$0xff]
      %v711 = vld [vmem:[%s695 + $0x78] sm:$0xff]
      %v728 = vunpack.c.l.b16 %v696
      %v729 = vunpack.c.h.b16 %v696
      %v730 = vunpack.c.l.b16 %v697
      %v731 = vunpack.c.h.b16 %v697
      %v732 = vunpack.c.l.b16 %v698
      %v733 = vunpack.c.h.b16 %v698
      %v734 = vunpack.c.l.b16 %v699
      %v735 = vunpack.c.h.b16 %v699
      %v736 = vunpack.c.l.b16 %v700
      %v737 = vunpack.c.h.b16 %v700
      %v738 = vunpack.c.l.b16 %v701
      %v739 = vunpack.c.h.b16 %v701
      %v740 = vunpack.c.l.b16 %v702
      %v741 = vunpack.c.h.b16 %v702
      %v742 = vunpack.c.l.b16 %v703
      %v743 = vunpack.c.h.b16 %v703
      %v744 = vunpack.c.l.b16 %v704
      %v745 = vunpack.c.h.b16 %v704
      %v746 = vunpack.c.l.b16 %v705
      %v747 = vunpack.c.h.b16 %v705
      %v748 = vunpack.c.l.b16 %v706
      %v749 = vunpack.c.h.b16 %v706
      %v750 = vunpack.c.l.b16 %v707
      %v751 = vunpack.c.h.b16 %v707
      %v752 = vunpack.c.l.b16 %v708
      %v753 = vunpack.c.h.b16 %v708
      %v754 = vunpack.c.l.b16 %v709
      %v755 = vunpack.c.h.b16 %v709
      %v756 = vunpack.c.l.b16 %v710
      %v757 = vunpack.c.h.b16 %v710
      %v758 = vunpack.c.l.b16 %v711
      %v759 = vunpack.c.h.b16 %v711
      %v760 = vpack.c.b16 %v730, %v728
      %v761 = vpack.c.b16 %v731, %v729
      %v762 = vpack.c.b16 %v734, %v732
      %v763 = vpack.c.b16 %v735, %v733
      %v764 = vpack.c.b16 %v738, %v736
      %v765 = vpack.c.b16 %v739, %v737
      %v766 = vpack.c.b16 %v742, %v740
      %v767 = vpack.c.b16 %v743, %v741
      %v768 = vpack.c.b16 %v746, %v744
      %v769 = vpack.c.b16 %v747, %v745
      %v770 = vpack.c.b16 %v750, %v748
      %v771 = vpack.c.b16 %v751, %v749
      %v772 = vpack.c.b16 %v754, %v752
      %v773 = vpack.c.b16 %v755, %v753
      %v774 = vpack.c.b16 %v758, %v756
      %v775 = vpack.c.b16 %v759, %v757
      %792 = vmatprep.subr.bf16.mxu0 %v775
      %793 = vmatpush1.bf16.msra.mxu0 %v774
      %794 = vmatprep.subr.bf16.mxu0 %v773
      %795 = vmatpush1.bf16.msra.mxu0 %v772
      %796 = vmatprep.subr.bf16.mxu0 %v771
      %797 = vmatpush1.bf16.msra.mxu0 %v770
      %798 = vmatprep.subr.bf16.mxu0 %v769
      %799 = vmatpush1.bf16.msra.mxu0 %v768
      %800 = vmatprep.subr.bf16.mxu0 %v767
      %801 = vmatpush1.bf16.msra.mxu0 %v766
      %802 = vmatprep.subr.bf16.mxu0 %v765
      %803 = vmatpush1.bf16.msra.mxu0 %v764
      %804 = vmatprep.subr.bf16.mxu0 %v763
      %805 = vmatpush1.bf16.msra.mxu0 %v762
      %806 = vmatprep.subr.bf16.mxu0 %v761
      %807 = vmatpush1.bf16.msra.mxu0 %v760
      %808 = vmatprep.subr.bf16.mxu0 0
      %809 = vmatpush2.bf16.msra.mxu0 0
      %810 = vmatprep.subr.bf16.mxu0 0
      %811 = vmatpush2.bf16.msra.mxu0 0
      %812 = vmatprep.subr.bf16.mxu0 0
      %813 = vmatpush2.bf16.msra.mxu0 0
      %814 = vmatprep.subr.bf16.mxu0 0
      %815 = vmatpush2.bf16.msra.mxu0 0
      %816 = vmatprep.subr.bf16.mxu0 0
      %817 = vmatpush2.bf16.msra.mxu0 0
      %818 = vmatprep.subr.bf16.mxu0 0
      %819 = vmatpush2.bf16.msra.mxu0 0
      %820 = vmatprep.subr.bf16.mxu0 0
      %821 = vmatpush2.bf16.msra.mxu0 0
      %822 = vmatprep.subr.bf16.mxu0 0
      %823 = vmatpush2.bf16.msra.mxu0 0
      %824 = vmatprep.mubr.bf16.mxu0 0
      %825 = vmatmul.mubr.bf16.gmra.mxu0 %v694
      %v826 = vpop.f32.mrf.mxu0
      %v827 = vadd.f32 0.0, %v826
      %v828 = vpop.f32.mrf.mxu0
      %v829 = vadd.f32 0.0, %v828
      %v830 = vpop.f32.mrf.mxu0
      %v831 = vadd.f32 0.0, %v830
      %v832 = vpop.f32.mrf.mxu0
      %v833 = vadd.f32 0.0, %v832
      %834 = vdwg.mxu0
      %v851 = vunpack.c.l.b16 %v678
      %v852 = vunpack.c.h.b16 %v678
      %v853 = vunpack.c.l.b16 %v679
      %v854 = vunpack.c.h.b16 %v679
      %v855 = vunpack.c.l.b16 %v680
      %v856 = vunpack.c.h.b16 %v680
      %v857 = vunpack.c.l.b16 %v681
      %v858 = vunpack.c.h.b16 %v681
      %v859 = vunpack.c.l.b16 %v682
      %v860 = vunpack.c.h.b16 %v682
      %v861 = vunpack.c.l.b16 %v683
      %v862 = vunpack.c.h.b16 %v683
      %v863 = vunpack.c.l.b16 %v684
      %v864 = vunpack.c.h.b16 %v684
      %v865 = vunpack.c.l.b16 %v685
      %v866 = vunpack.c.h.b16 %v685
      %v867 = vunpack.c.l.b16 %v686
      %v868 = vunpack.c.h.b16 %v686
      %v869 = vunpack.c.l.b16 %v687
      %v870 = vunpack.c.h.b16 %v687
      %v871 = vunpack.c.l.b16 %v688
      %v872 = vunpack.c.h.b16 %v688
      %v873 = vunpack.c.l.b16 %v689
      %v874 = vunpack.c.h.b16 %v689
      %v875 = vunpack.c.l.b16 %v690
      %v876 = vunpack.c.h.b16 %v690
      %v877 = vunpack.c.l.b16 %v691
      %v878 = vunpack.c.h.b16 %v691
      %v879 = vunpack.c.l.b16 %v692
      %v880 = vunpack.c.h.b16 %v692
      %v881 = vunpack.c.l.b16 %v693
      %v882 = vunpack.c.h.b16 %v693
      %v883 = vpack.c.b16 %v853, %v851
      %v884 = vpack.c.b16 %v854, %v852
      %v885 = vpack.c.b16 %v857, %v855
      %v886 = vpack.c.b16 %v858, %v856
      %v887 = vpack.c.b16 %v861, %v859
      %v888 = vpack.c.b16 %v862, %v860
      %v889 = vpack.c.b16 %v865, %v863
      %v890 = vpack.c.b16 %v866, %v864
      %v891 = vpack.c.b16 %v869, %v867
      %v892 = vpack.c.b16 %v870, %v868
      %v893 = vpack.c.b16 %v873, %v871
      %v894 = vpack.c.b16 %v874, %v872
      %v895 = vpack.c.b16 %v877, %v875
      %v896 = vpack.c.b16 %v878, %v876
      %v897 = vpack.c.b16 %v881, %v879
      %v898 = vpack.c.b16 %v882, %v880
      %915 = vmatprep.subr.bf16.mxu0 %v898
      %916 = vmatpush1.bf16.msra.mxu0 %v897
      %917 = vmatprep.subr.bf16.mxu0 %v896
      %918 = vmatpush1.bf16.msra.mxu0 %v895
      %919 = vmatprep.subr.bf16.mxu0 %v894
      %920 = vmatpush1.bf16.msra.mxu0 %v893
      %921 = vmatprep.subr.bf16.mxu0 %v892
      %922 = vmatpush1.bf16.msra.mxu0 %v891
      %923 = vmatprep.subr.bf16.mxu0 %v890
      %924 = vmatpush1.bf16.msra.mxu0 %v889
      %925 = vmatprep.subr.bf16.mxu0 %v888
      %926 = vmatpush1.bf16.msra.mxu0 %v887
      %927 = vmatprep.subr.bf16.mxu0 %v886
      %928 = vmatpush1.bf16.msra.mxu0 %v885
      %929 = vmatprep.subr.bf16.mxu0 %v884
      %930 = vmatpush1.bf16.msra.mxu0 %v883
      %931 = vmatprep.subr.bf16.mxu0 0
      %932 = vmatpush2.bf16.msra.mxu0 0
      %933 = vmatprep.subr.bf16.mxu0 0
      %934 = vmatpush2.bf16.msra.mxu0 0
      %935 = vmatprep.subr.bf16.mxu0 0
      %936 = vmatpush2.bf16.msra.mxu0 0
      %937 = vmatprep.subr.bf16.mxu0 0
      %938 = vmatpush2.bf16.msra.mxu0 0
      %939 = vmatprep.subr.bf16.mxu0 0
      %940 = vmatpush2.bf16.msra.mxu0 0
      %941 = vmatprep.subr.bf16.mxu0 0
      %942 = vmatpush2.bf16.msra.mxu0 0
      %943 = vmatprep.subr.bf16.mxu0 0
      %944 = vmatpush2.bf16.msra.mxu0 0
      %945 = vmatprep.subr.bf16.mxu0 0
      %946 = vmatpush2.bf16.msra.mxu0 0
      %947 = vmatprep.mubr.bf16.mxu0 0
      %948 = vmatmul.mubr.bf16.gmra.mxu0 %v677
      %v949 = vpop.f32.mrf.mxu0
      %v950 = vadd.f32 %v827, %v949
      %v951 = vpop.f32.mrf.mxu0
      %v952 = vadd.f32 %v829, %v951
      %v953 = vpop.f32.mrf.mxu0
      %v954 = vadd.f32 %v831, %v953
      %v955 = vpop.f32.mrf.mxu0
      %v956 = vadd.f32 %v833, %v955
      %957 = vdwg.mxu0
      %vm958 = vcmask 1046528
      %v959 = vrot.slane %v660, 1
      %v960 = vrot.slane %v665, 1
      %v961 = vsel %vm958, %v959, %v960
      %v964 = vsel %vm958, %v960, 0.0
      %v965 = vpack.c.bf16 %v964, %v961
      %s966 = scalar_lea.vmem %s5, 256
      %v967 = vld [vmem:[%s966] sm:$0xff]
      %v968 = vld [vmem:[%s966 + $0x8] sm:$0xff]
      %v969 = vld [vmem:[%s966 + $0x10] sm:$0xff]
      %v970 = vld [vmem:[%s966 + $0x18] sm:$0xff]
      %v971 = vld [vmem:[%s966 + $0x20] sm:$0xff]
      %v972 = vld [vmem:[%s966 + $0x28] sm:$0xff]
      %v973 = vld [vmem:[%s966 + $0x30] sm:$0xff]
      %v974 = vld [vmem:[%s966 + $0x38] sm:$0xff]
      %v975 = vld [vmem:[%s966 + $0x40] sm:$0xff]
      %v976 = vld [vmem:[%s966 + $0x48] sm:$0xff]
      %v977 = vld [vmem:[%s966 + $0x50] sm:$0xff]
      %v978 = vld [vmem:[%s966 + $0x58] sm:$0xff]
      %v979 = vld [vmem:[%s966 + $0x60] sm:$0xff]
      %v980 = vld [vmem:[%s966 + $0x68] sm:$0xff]
      %v981 = vld [vmem:[%s966 + $0x70] sm:$0xff]
      %v982 = vld [vmem:[%s966 + $0x78] sm:$0xff]
      %v999 = vunpack.c.l.b16 %v967
      %v1000 = vunpack.c.h.b16 %v967
      %v1001 = vunpack.c.l.b16 %v968
      %v1002 = vunpack.c.h.b16 %v968
      %v1003 = vunpack.c.l.b16 %v969
      %v1004 = vunpack.c.h.b16 %v969
      %v1005 = vunpack.c.l.b16 %v970
      %v1006 = vunpack.c.h.b16 %v970
      %v1007 = vunpack.c.l.b16 %v971
      %v1008 = vunpack.c.h.b16 %v971
      %v1009 = vunpack.c.l.b16 %v972
      %v1010 = vunpack.c.h.b16 %v972
      %v1011 = vunpack.c.l.b16 %v973
      %v1012 = vunpack.c.h.b16 %v973
      %v1013 = vunpack.c.l.b16 %v974
      %v1014 = vunpack.c.h.b16 %v974
      %v1015 = vunpack.c.l.b16 %v975
      %v1016 = vunpack.c.h.b16 %v975
      %v1017 = vunpack.c.l.b16 %v976
      %v1018 = vunpack.c.h.b16 %v976
      %v1019 = vunpack.c.l.b16 %v977
      %v1020 = vunpack.c.h.b16 %v977
      %v1021 = vunpack.c.l.b16 %v978
      %v1022 = vunpack.c.h.b16 %v978
      %v1023 = vunpack.c.l.b16 %v979
      %v1024 = vunpack.c.h.b16 %v979
      %v1025 = vunpack.c.l.b16 %v980
      %v1026 = vunpack.c.h.b16 %v980
      %v1027 = vunpack.c.l.b16 %v981
      %v1028 = vunpack.c.h.b16 %v981
      %v1029 = vunpack.c.l.b16 %v982
      %v1030 = vunpack.c.h.b16 %v982
      %v1031 = vpack.c.b16 %v1001, %v999
      %v1032 = vpack.c.b16 %v1002, %v1000
      %v1033 = vpack.c.b16 %v1005, %v1003
      %v1034 = vpack.c.b16 %v1006, %v1004
      %v1035 = vpack.c.b16 %v1009, %v1007
      %v1036 = vpack.c.b16 %v1010, %v1008
      %v1037 = vpack.c.b16 %v1013, %v1011
      %v1038 = vpack.c.b16 %v1014, %v1012
      %v1039 = vpack.c.b16 %v1017, %v1015
      %v1040 = vpack.c.b16 %v1018, %v1016
      %v1041 = vpack.c.b16 %v1021, %v1019
      %v1042 = vpack.c.b16 %v1022, %v1020
      %v1043 = vpack.c.b16 %v1025, %v1023
      %v1044 = vpack.c.b16 %v1026, %v1024
      %v1045 = vpack.c.b16 %v1029, %v1027
      %v1046 = vpack.c.b16 %v1030, %v1028
      %1063 = vmatprep.subr.bf16.mxu0 %v1046
      %1064 = vmatpush1.bf16.msra.mxu0 %v1045
      %1065 = vmatprep.subr.bf16.mxu0 %v1044
      %1066 = vmatpush1.bf16.msra.mxu0 %v1043
      %1067 = vmatprep.subr.bf16.mxu0 %v1042
      %1068 = vmatpush1.bf16.msra.mxu0 %v1041
      %1069 = vmatprep.subr.bf16.mxu0 %v1040
      %1070 = vmatpush1.bf16.msra.mxu0 %v1039
      %1071 = vmatprep.subr.bf16.mxu0 %v1038
      %1072 = vmatpush1.bf16.msra.mxu0 %v1037
      %1073 = vmatprep.subr.bf16.mxu0 %v1036
      %1074 = vmatpush1.bf16.msra.mxu0 %v1035
      %1075 = vmatprep.subr.bf16.mxu0 %v1034
      %1076 = vmatpush1.bf16.msra.mxu0 %v1033
      %1077 = vmatprep.subr.bf16.mxu0 %v1032
      %1078 = vmatpush1.bf16.msra.mxu0 %v1031
      %1079 = vmatprep.subr.bf16.mxu0 0
      %1080 = vmatpush2.bf16.msra.mxu0 0
      %1081 = vmatprep.subr.bf16.mxu0 0
      %1082 = vmatpush2.bf16.msra.mxu0 0
      %1083 = vmatprep.subr.bf16.mxu0 0
      %1084 = vmatpush2.bf16.msra.mxu0 0
      %1085 = vmatprep.subr.bf16.mxu0 0
      %1086 = vmatpush2.bf16.msra.mxu0 0
      %1087 = vmatprep.subr.bf16.mxu0 0
      %1088 = vmatpush2.bf16.msra.mxu0 0
      %1089 = vmatprep.subr.bf16.mxu0 0
      %1090 = vmatpush2.bf16.msra.mxu0 0
      %1091 = vmatprep.subr.bf16.mxu0 0
      %1092 = vmatpush2.bf16.msra.mxu0 0
      %1093 = vmatprep.subr.bf16.mxu0 0
      %1094 = vmatpush2.bf16.msra.mxu0 0
      %1095 = vmatprep.mubr.bf16.mxu0 0
      %1096 = vmatmul.mubr.bf16.gmra.mxu0 %v965
      %v1097 = vpop.f32.mrf.mxu0
      %v1098 = vadd.f32 0.0, %v1097
      %v1099 = vpop.f32.mrf.mxu0
      %v1100 = vadd.f32 0.0, %v1099
      %v1101 = vpop.f32.mrf.mxu0
      %v1102 = vadd.f32 0.0, %v1101
      %v1103 = vpop.f32.mrf.mxu0
      %v1104 = vadd.f32 0.0, %v1103
      %1105 = vdwg.mxu0
      %v1106 = vadd.f32 %v950, %v1098
      %v1107 = vadd.f32 %v952, %v1100
      %v1108 = vadd.f32 %v954, %v1102
      %v1109 = vadd.f32 %v956, %v1104
      %v1110 = vld [vmem:[%s6] sm:$0x3]
      %v1112 = vlaneseq
      %v1113 = vshrl.u32 %v1112, 7
      %v1114 = vsub.s32 0, %v1113
      %v1115 = vrot.slane %v1110, %v1114
      %v1116 = vlaneseq
      %v1117 = vshrl.u32 %v1116, 7
      %v1118 = vsub.s32 1, %v1117
      %v1119 = vrot.slane %v1110, %v1118
      %v1122 = vadd.f32 %v1106, %v1115
      %v1123 = vadd.f32 %v1107, %v1119
      %v1124 = vadd.f32 %v1108, %v1115
      %v1125 = vadd.f32 %v1109, %v1119
      %v1126 = vmax.f32 %v1122, 0.0
      %v1127 = vmax.f32 %v1123, 0.0
      %v1128 = vmax.f32 %v1124, 0.0
      %v1129 = vmax.f32 %v1125, 0.0
      %v1130 = vld [vmem:[%s7] sm:$0xff]
      %v1131 = vld [vmem:[%s7 + $0x8] sm:$0xff]
      %v1132 = vld [vmem:[%s7 + $0x10] sm:$0xff]
      %v1133 = vld [vmem:[%s7 + $0x18] sm:$0xff]
      %v1134 = vld [vmem:[%s7 + $0x20] sm:$0xff]
      %v1135 = vld [vmem:[%s7 + $0x28] sm:$0xff]
      %v1136 = vld [vmem:[%s7 + $0x30] sm:$0xff]
      %v1137 = vld [vmem:[%s7 + $0x38] sm:$0xff]
      %v1138 = vld [vmem:[%s7 + $0x40] sm:$0xff]
      %v1139 = vld [vmem:[%s7 + $0x48] sm:$0xff]
      %v1140 = vld [vmem:[%s7 + $0x50] sm:$0xff]
      %v1141 = vld [vmem:[%s7 + $0x58] sm:$0xff]
      %v1142 = vld [vmem:[%s7 + $0x60] sm:$0xff]
      %v1143 = vld [vmem:[%s7 + $0x68] sm:$0xff]
      %v1144 = vld [vmem:[%s7 + $0x70] sm:$0xff]
      %v1145 = vld [vmem:[%s7 + $0x78] sm:$0xff]
      %v1146 = vld [vmem:[%s8] sm:$0x3]
      %v1148 = vlaneseq
      %v1149 = vshrl.u32 %v1148, 7
      %v1150 = vsub.s32 0, %v1149
      %v1151 = vrot.slane %v1146, %v1150
      %v1152 = vlaneseq
      %v1153 = vshrl.u32 %v1152, 7
      %v1154 = vsub.s32 1, %v1153
      %v1155 = vrot.slane %v1146, %v1154
      %v1174 = vunpack.c.l.b16 %v1130
      %v1175 = vunpack.c.h.b16 %v1130
      %v1176 = vunpack.c.l.b16 %v1131
      %v1177 = vunpack.c.h.b16 %v1131
      %v1178 = vunpack.c.l.b16 %v1132
      %v1179 = vunpack.c.h.b16 %v1132
      %v1180 = vunpack.c.l.b16 %v1133
      %v1181 = vunpack.c.h.b16 %v1133
      %v1182 = vunpack.c.l.b16 %v1134
      %v1183 = vunpack.c.h.b16 %v1134
      %v1184 = vunpack.c.l.b16 %v1135
      %v1185 = vunpack.c.h.b16 %v1135
      %v1186 = vunpack.c.l.b16 %v1136
      %v1187 = vunpack.c.h.b16 %v1136
      %v1188 = vunpack.c.l.b16 %v1137
      %v1189 = vunpack.c.h.b16 %v1137
      %v1190 = vunpack.c.l.b16 %v1138
      %v1191 = vunpack.c.h.b16 %v1138
      %v1192 = vunpack.c.l.b16 %v1139
      %v1193 = vunpack.c.h.b16 %v1139
      %v1194 = vunpack.c.l.b16 %v1140
      %v1195 = vunpack.c.h.b16 %v1140
      %v1196 = vunpack.c.l.b16 %v1141
      %v1197 = vunpack.c.h.b16 %v1141
      %v1198 = vunpack.c.l.b16 %v1142
      %v1199 = vunpack.c.h.b16 %v1142
      %v1200 = vunpack.c.l.b16 %v1143
      %v1201 = vunpack.c.h.b16 %v1143
      %v1202 = vunpack.c.l.b16 %v1144
      %v1203 = vunpack.c.h.b16 %v1144
      %v1204 = vunpack.c.l.b16 %v1145
      %v1205 = vunpack.c.h.b16 %v1145
      %v1206 = vpack.c.b16 %v1176, %v1174
      %v1207 = vpack.c.b16 %v1177, %v1175
      %v1208 = vpack.c.b16 %v1180, %v1178
      %v1209 = vpack.c.b16 %v1181, %v1179
      %v1210 = vpack.c.b16 %v1184, %v1182
      %v1211 = vpack.c.b16 %v1185, %v1183
      %v1212 = vpack.c.b16 %v1188, %v1186
      %v1213 = vpack.c.b16 %v1189, %v1187
      %v1214 = vpack.c.b16 %v1192, %v1190
      %v1215 = vpack.c.b16 %v1193, %v1191
      %v1216 = vpack.c.b16 %v1196, %v1194
      %v1217 = vpack.c.b16 %v1197, %v1195
      %v1218 = vpack.c.b16 %v1200, %v1198
      %v1219 = vpack.c.b16 %v1201, %v1199
      %v1220 = vpack.c.b16 %v1204, %v1202
      %v1221 = vpack.c.b16 %v1205, %v1203
      %1238 = vmatprep.subr.bf16.mxu0 %v1221
      %1239 = vmatpush1.bf16.msra.mxu0 %v1220
      %1240 = vmatprep.subr.bf16.mxu0 %v1219
      %1241 = vmatpush1.bf16.msra.mxu0 %v1218
      %1242 = vmatprep.subr.bf16.mxu0 %v1217
      %1243 = vmatpush1.bf16.msra.mxu0 %v1216
      %1244 = vmatprep.subr.bf16.mxu0 %v1215
      %1245 = vmatpush1.bf16.msra.mxu0 %v1214
      %1246 = vmatprep.subr.bf16.mxu0 %v1213
      %1247 = vmatpush1.bf16.msra.mxu0 %v1212
      %1248 = vmatprep.subr.bf16.mxu0 %v1211
      %1249 = vmatpush1.bf16.msra.mxu0 %v1210
      %1250 = vmatprep.subr.bf16.mxu0 %v1209
      %1251 = vmatpush1.bf16.msra.mxu0 %v1208
      %1252 = vmatprep.subr.bf16.mxu0 %v1207
      %1253 = vmatpush1.bf16.msra.mxu0 %v1206
      %1254 = vmatprep.subr.bf16.mxu0 0
      %1255 = vmatpush2.bf16.msra.mxu0 0
      %1256 = vmatprep.subr.bf16.mxu0 0
      %1257 = vmatpush2.bf16.msra.mxu0 0
      %1258 = vmatprep.subr.bf16.mxu0 0
      %1259 = vmatpush2.bf16.msra.mxu0 0
      %1260 = vmatprep.subr.bf16.mxu0 0
      %1261 = vmatpush2.bf16.msra.mxu0 0
      %1262 = vmatprep.subr.bf16.mxu0 0
      %1263 = vmatpush2.bf16.msra.mxu0 0
      %1264 = vmatprep.subr.bf16.mxu0 0
      %1265 = vmatpush2.bf16.msra.mxu0 0
      %1266 = vmatprep.subr.bf16.mxu0 0
      %1267 = vmatpush2.bf16.msra.mxu0 0
      %1268 = vmatprep.subr.bf16.mxu0 0
      %1269 = vmatpush2.bf16.msra.mxu0 0
      %1270 = vmatprep.mubr.bf16.mxu0 0
      %1271 = vmatmul.mubr.bf16.gmra.mxu0 %v694
      %v1272 = vpop.f32.mrf.mxu0
      %v1273 = vadd.f32 %v1151, %v1272
      %v1274 = vpop.f32.mrf.mxu0
      %v1275 = vadd.f32 %v1155, %v1274
      %v1276 = vpop.f32.mrf.mxu0
      %v1277 = vadd.f32 %v1151, %v1276
      %v1278 = vpop.f32.mrf.mxu0
      %v1279 = vadd.f32 %v1155, %v1278
      %1280 = vdwg.mxu0
      %v1285 = vrot.slane %v1126, 7
      %v1286 = vrot.slane %v1127, 7
      %v1287 = vrot.slane %v1128, 7
      %v1288 = vsel %vm670, %v1285, %v1287
      %v1289 = vrot.slane %v1129, 7
      %v1290 = vsel %vm670, %v1286, %v1289
      %v1295 = vsel %vm670, 0.0, %v1285
      %v1296 = vsel %vm670, 0.0, %v1286
      %v1297 = vpack.c.bf16 %v1288, %v1295
      %v1298 = vpack.c.bf16 %v1290, %v1296
      %v1299 = vld [vmem:[%s9] sm:$0xff]
      %v1300 = vld [vmem:[%s9 + $0x8] sm:$0xff]
      %v1301 = vld [vmem:[%s9 + $0x10] sm:$0xff]
      %v1302 = vld [vmem:[%s9 + $0x18] sm:$0xff]
      %v1303 = vld [vmem:[%s9 + $0x20] sm:$0xff]
      %v1304 = vld [vmem:[%s9 + $0x28] sm:$0xff]
      %v1305 = vld [vmem:[%s9 + $0x30] sm:$0xff]
      %v1306 = vld [vmem:[%s9 + $0x38] sm:$0xff]
      %v1307 = vld [vmem:[%s9 + $0x40] sm:$0xff]
      %v1308 = vld [vmem:[%s9 + $0x48] sm:$0xff]
      %v1309 = vld [vmem:[%s9 + $0x50] sm:$0xff]
      %v1310 = vld [vmem:[%s9 + $0x58] sm:$0xff]
      %v1311 = vld [vmem:[%s9 + $0x60] sm:$0xff]
      %v1312 = vld [vmem:[%s9 + $0x68] sm:$0xff]
      %v1313 = vld [vmem:[%s9 + $0x70] sm:$0xff]
      %v1314 = vld [vmem:[%s9 + $0x78] sm:$0xff]
      %v1315 = vld [vmem:[%s9 + $0x80] sm:$0xff]
      %v1316 = vld [vmem:[%s9 + $0x88] sm:$0xff]
      %v1317 = vld [vmem:[%s9 + $0x90] sm:$0xff]
      %v1318 = vld [vmem:[%s9 + $0x98] sm:$0xff]
      %v1319 = vld [vmem:[%s9 + $0xa0] sm:$0xff]
      %v1320 = vld [vmem:[%s9 + $0xa8] sm:$0xff]
      %v1321 = vld [vmem:[%s9 + $0xb0] sm:$0xff]
      %v1322 = vld [vmem:[%s9 + $0xb8] sm:$0xff]
      %v1323 = vld [vmem:[%s9 + $0xc0] sm:$0xff]
      %v1324 = vld [vmem:[%s9 + $0xc8] sm:$0xff]
      %v1325 = vld [vmem:[%s9 + $0xd0] sm:$0xff]
      %v1326 = vld [vmem:[%s9 + $0xd8] sm:$0xff]
      %v1327 = vld [vmem:[%s9 + $0xe0] sm:$0xff]
      %v1328 = vld [vmem:[%s9 + $0xe8] sm:$0xff]
      %v1329 = vld [vmem:[%s9 + $0xf0] sm:$0xff]
      %v1330 = vld [vmem:[%s9 + $0xf8] sm:$0xff]
      %v1331 = vpack.c.bf16 %v1128, %v1126
      %v1332 = vpack.c.bf16 %v1129, %v1127
      %s1333 = scalar_lea.vmem %s9, 256
      %v1334 = vld [vmem:[%s1333] sm:$0xff]
      %v1335 = vld [vmem:[%s1333 + $0x8] sm:$0xff]
      %v1336 = vld [vmem:[%s1333 + $0x10] sm:$0xff]
      %v1337 = vld [vmem:[%s1333 + $0x18] sm:$0xff]
      %v1338 = vld [vmem:[%s1333 + $0x20] sm:$0xff]
      %v1339 = vld [vmem:[%s1333 + $0x28] sm:$0xff]
      %v1340 = vld [vmem:[%s1333 + $0x30] sm:$0xff]
      %v1341 = vld [vmem:[%s1333 + $0x38] sm:$0xff]
      %v1342 = vld [vmem:[%s1333 + $0x40] sm:$0xff]
      %v1343 = vld [vmem:[%s1333 + $0x48] sm:$0xff]
      %v1344 = vld [vmem:[%s1333 + $0x50] sm:$0xff]
      %v1345 = vld [vmem:[%s1333 + $0x58] sm:$0xff]
      %v1346 = vld [vmem:[%s1333 + $0x60] sm:$0xff]
      %v1347 = vld [vmem:[%s1333 + $0x68] sm:$0xff]
      %v1348 = vld [vmem:[%s1333 + $0x70] sm:$0xff]
      %v1349 = vld [vmem:[%s1333 + $0x78] sm:$0xff]
      %v1350 = vld [vmem:[%s1333 + $0x80] sm:$0xff]
      %v1351 = vld [vmem:[%s1333 + $0x88] sm:$0xff]
      %v1352 = vld [vmem:[%s1333 + $0x90] sm:$0xff]
      %v1353 = vld [vmem:[%s1333 + $0x98] sm:$0xff]
      %v1354 = vld [vmem:[%s1333 + $0xa0] sm:$0xff]
      %v1355 = vld [vmem:[%s1333 + $0xa8] sm:$0xff]
      %v1356 = vld [vmem:[%s1333 + $0xb0] sm:$0xff]
      %v1357 = vld [vmem:[%s1333 + $0xb8] sm:$0xff]
      %v1358 = vld [vmem:[%s1333 + $0xc0] sm:$0xff]
      %v1359 = vld [vmem:[%s1333 + $0xc8] sm:$0xff]
      %v1360 = vld [vmem:[%s1333 + $0xd0] sm:$0xff]
      %v1361 = vld [vmem:[%s1333 + $0xd8] sm:$0xff]
      %v1362 = vld [vmem:[%s1333 + $0xe0] sm:$0xff]
      %v1363 = vld [vmem:[%s1333 + $0xe8] sm:$0xff]
      %v1364 = vld [vmem:[%s1333 + $0xf0] sm:$0xff]
      %v1365 = vld [vmem:[%s1333 + $0xf8] sm:$0xff]
      %v1398 = vunpack.c.l.b16 %v1334
      %v1399 = vunpack.c.h.b16 %v1334
      %v1400 = vunpack.c.l.b16 %v1335
      %v1401 = vunpack.c.h.b16 %v1335
      %v1402 = vunpack.c.l.b16 %v1336
      %v1403 = vunpack.c.h.b16 %v1336
      %v1404 = vunpack.c.l.b16 %v1337
      %v1405 = vunpack.c.h.b16 %v1337
      %v1406 = vunpack.c.l.b16 %v1338
      %v1407 = vunpack.c.h.b16 %v1338
      %v1408 = vunpack.c.l.b16 %v1339
      %v1409 = vunpack.c.h.b16 %v1339
      %v1410 = vunpack.c.l.b16 %v1340
      %v1411 = vunpack.c.h.b16 %v1340
      %v1412 = vunpack.c.l.b16 %v1341
      %v1413 = vunpack.c.h.b16 %v1341
      %v1414 = vunpack.c.l.b16 %v1342
      %v1415 = vunpack.c.h.b16 %v1342
      %v1416 = vunpack.c.l.b16 %v1343
      %v1417 = vunpack.c.h.b16 %v1343
      %v1418 = vunpack.c.l.b16 %v1344
      %v1419 = vunpack.c.h.b16 %v1344
      %v1420 = vunpack.c.l.b16 %v1345
      %v1421 = vunpack.c.h.b16 %v1345
      %v1422 = vunpack.c.l.b16 %v1346
      %v1423 = vunpack.c.h.b16 %v1346
      %v1424 = vunpack.c.l.b16 %v1347
      %v1425 = vunpack.c.h.b16 %v1347
      %v1426 = vunpack.c.l.b16 %v1348
      %v1427 = vunpack.c.h.b16 %v1348
      %v1428 = vunpack.c.l.b16 %v1349
      %v1429 = vunpack.c.h.b16 %v1349
      %v1430 = vunpack.c.l.b16 %v1350
      %v1431 = vunpack.c.h.b16 %v1350
      %v1432 = vunpack.c.l.b16 %v1351
      %v1433 = vunpack.c.h.b16 %v1351
      %v1434 = vunpack.c.l.b16 %v1352
      %v1435 = vunpack.c.h.b16 %v1352
      %v1436 = vunpack.c.l.b16 %v1353
      %v1437 = vunpack.c.h.b16 %v1353
      %v1438 = vunpack.c.l.b16 %v1354
      %v1439 = vunpack.c.h.b16 %v1354
      %v1440 = vunpack.c.l.b16 %v1355
      %v1441 = vunpack.c.h.b16 %v1355
      %v1442 = vunpack.c.l.b16 %v1356
      %v1443 = vunpack.c.h.b16 %v1356
      %v1444 = vunpack.c.l.b16 %v1357
      %v1445 = vunpack.c.h.b16 %v1357
      %v1446 = vunpack.c.l.b16 %v1358
      %v1447 = vunpack.c.h.b16 %v1358
      %v1448 = vunpack.c.l.b16 %v1359
      %v1449 = vunpack.c.h.b16 %v1359
      %v1450 = vunpack.c.l.b16 %v1360
      %v1451 = vunpack.c.h.b16 %v1360
      %v1452 = vunpack.c.l.b16 %v1361
      %v1453 = vunpack.c.h.b16 %v1361
      %v1454 = vunpack.c.l.b16 %v1362
      %v1455 = vunpack.c.h.b16 %v1362
      %v1456 = vunpack.c.l.b16 %v1363
      %v1457 = vunpack.c.h.b16 %v1363
      %v1458 = vunpack.c.l.b16 %v1364
      %v1459 = vunpack.c.h.b16 %v1364
      %v1460 = vunpack.c.l.b16 %v1365
      %v1461 = vunpack.c.h.b16 %v1365
      %v1462 = vpack.c.b16 %v1400, %v1398
      %v1463 = vpack.c.b16 %v1401, %v1399
      %v1464 = vpack.c.b16 %v1404, %v1402
      %v1465 = vpack.c.b16 %v1405, %v1403
      %v1466 = vpack.c.b16 %v1408, %v1406
      %v1467 = vpack.c.b16 %v1409, %v1407
      %v1468 = vpack.c.b16 %v1412, %v1410
      %v1469 = vpack.c.b16 %v1413, %v1411
      %v1470 = vpack.c.b16 %v1416, %v1414
      %v1471 = vpack.c.b16 %v1417, %v1415
      %v1472 = vpack.c.b16 %v1420, %v1418
      %v1473 = vpack.c.b16 %v1421, %v1419
      %v1474 = vpack.c.b16 %v1424, %v1422
      %v1475 = vpack.c.b16 %v1425, %v1423
      %v1476 = vpack.c.b16 %v1428, %v1426
      %v1477 = vpack.c.b16 %v1429, %v1427
      %v1478 = vpack.c.b16 %v1432, %v1430
      %v1479 = vpack.c.b16 %v1433, %v1431
      %v1480 = vpack.c.b16 %v1436, %v1434
      %v1481 = vpack.c.b16 %v1437, %v1435
      %v1482 = vpack.c.b16 %v1440, %v1438
      %v1483 = vpack.c.b16 %v1441, %v1439
      %v1484 = vpack.c.b16 %v1444, %v1442
      %v1485 = vpack.c.b16 %v1445, %v1443
      %v1486 = vpack.c.b16 %v1448, %v1446
      %v1487 = vpack.c.b16 %v1449, %v1447
      %v1488 = vpack.c.b16 %v1452, %v1450
      %v1489 = vpack.c.b16 %v1453, %v1451
      %v1490 = vpack.c.b16 %v1456, %v1454
      %v1491 = vpack.c.b16 %v1457, %v1455
      %v1492 = vpack.c.b16 %v1460, %v1458
      %v1493 = vpack.c.b16 %v1461, %v1459
      %1526 = vmatprep.subr.bf16.mxu0 %v1477
      %1527 = vmatpush1.bf16.msra.mxu0 %v1476
      %1528 = vmatprep.subr.bf16.mxu0 %v1475
      %1529 = vmatpush1.bf16.msra.mxu0 %v1474
      %1530 = vmatprep.subr.bf16.mxu0 %v1473
      %1531 = vmatpush1.bf16.msra.mxu0 %v1472
      %1532 = vmatprep.subr.bf16.mxu0 %v1471
      %1533 = vmatpush1.bf16.msra.mxu0 %v1470
      %1534 = vmatprep.subr.bf16.mxu0 %v1469
      %1535 = vmatpush1.bf16.msra.mxu0 %v1468
      %1536 = vmatprep.subr.bf16.mxu0 %v1467
      %1537 = vmatpush1.bf16.msra.mxu0 %v1466
      %1538 = vmatprep.subr.bf16.mxu0 %v1465
      %1539 = vmatpush1.bf16.msra.mxu0 %v1464
      %1540 = vmatprep.subr.bf16.mxu0 %v1463
      %1541 = vmatpush1.bf16.msra.mxu0 %v1462
      %1542 = vmatprep.subr.bf16.mxu0 %v1493
      %1543 = vmatpush2.bf16.msra.mxu0 %v1492
      %1544 = vmatprep.subr.bf16.mxu0 %v1491
      %1545 = vmatpush2.bf16.msra.mxu0 %v1490
      %1546 = vmatprep.subr.bf16.mxu0 %v1489
      %1547 = vmatpush2.bf16.msra.mxu0 %v1488
      %1548 = vmatprep.subr.bf16.mxu0 %v1487
      %1549 = vmatpush2.bf16.msra.mxu0 %v1486
      %1550 = vmatprep.subr.bf16.mxu0 %v1485
      %1551 = vmatpush2.bf16.msra.mxu0 %v1484
      %1552 = vmatprep.subr.bf16.mxu0 %v1483
      %1553 = vmatpush2.bf16.msra.mxu0 %v1482
      %1554 = vmatprep.subr.bf16.mxu0 %v1481
      %1555 = vmatpush2.bf16.msra.mxu0 %v1480
      %1556 = vmatprep.subr.bf16.mxu0 %v1479
      %1557 = vmatpush2.bf16.msra.mxu0 %v1478
      %1558 = vmatprep.mubr.bf16.mxu0 %v1332
      %1559 = vmatmul.mubr.bf16.gmra.mxu0 %v1331
      %v1560 = vpop.f32.mrf.mxu0
      %v1561 = vadd.f32 0.0, %v1560
      %v1562 = vpop.f32.mrf.mxu0
      %v1563 = vadd.f32 0.0, %v1562
      %v1564 = vpop.f32.mrf.mxu0
      %v1565 = vadd.f32 0.0, %v1564
      %v1566 = vpop.f32.mrf.mxu0
      %v1567 = vadd.f32 0.0, %v1566
      %1568 = vdwg.mxu0
      %v1601 = vunpack.c.l.b16 %v1299
      %v1602 = vunpack.c.h.b16 %v1299
      %v1603 = vunpack.c.l.b16 %v1300
      %v1604 = vunpack.c.h.b16 %v1300
      %v1605 = vunpack.c.l.b16 %v1301
      %v1606 = vunpack.c.h.b16 %v1301
      %v1607 = vunpack.c.l.b16 %v1302
      %v1608 = vunpack.c.h.b16 %v1302
      %v1609 = vunpack.c.l.b16 %v1303
      %v1610 = vunpack.c.h.b16 %v1303
      %v1611 = vunpack.c.l.b16 %v1304
      %v1612 = vunpack.c.h.b16 %v1304
      %v1613 = vunpack.c.l.b16 %v1305
      %v1614 = vunpack.c.h.b16 %v1305
      %v1615 = vunpack.c.l.b16 %v1306
      %v1616 = vunpack.c.h.b16 %v1306
      %v1617 = vunpack.c.l.b16 %v1307
      %v1618 = vunpack.c.h.b16 %v1307
      %v1619 = vunpack.c.l.b16 %v1308
      %v1620 = vunpack.c.h.b16 %v1308
      %v1621 = vunpack.c.l.b16 %v1309
      %v1622 = vunpack.c.h.b16 %v1309
      %v1623 = vunpack.c.l.b16 %v1310
      %v1624 = vunpack.c.h.b16 %v1310
      %v1625 = vunpack.c.l.b16 %v1311
      %v1626 = vunpack.c.h.b16 %v1311
      %v1627 = vunpack.c.l.b16 %v1312
      %v1628 = vunpack.c.h.b16 %v1312
      %v1629 = vunpack.c.l.b16 %v1313
      %v1630 = vunpack.c.h.b16 %v1313
      %v1631 = vunpack.c.l.b16 %v1314
      %v1632 = vunpack.c.h.b16 %v1314
      %v1633 = vunpack.c.l.b16 %v1315
      %v1634 = vunpack.c.h.b16 %v1315
      %v1635 = vunpack.c.l.b16 %v1316
      %v1636 = vunpack.c.h.b16 %v1316
      %v1637 = vunpack.c.l.b16 %v1317
      %v1638 = vunpack.c.h.b16 %v1317
      %v1639 = vunpack.c.l.b16 %v1318
      %v1640 = vunpack.c.h.b16 %v1318
      %v1641 = vunpack.c.l.b16 %v1319
      %v1642 = vunpack.c.h.b16 %v1319
      %v1643 = vunpack.c.l.b16 %v1320
      %v1644 = vunpack.c.h.b16 %v1320
      %v1645 = vunpack.c.l.b16 %v1321
      %v1646 = vunpack.c.h.b16 %v1321
      %v1647 = vunpack.c.l.b16 %v1322
      %v1648 = vunpack.c.h.b16 %v1322
      %v1649 = vunpack.c.l.b16 %v1323
      %v1650 = vunpack.c.h.b16 %v1323
      %v1651 = vunpack.c.l.b16 %v1324
      %v1652 = vunpack.c.h.b16 %v1324
      %v1653 = vunpack.c.l.b16 %v1325
      %v1654 = vunpack.c.h.b16 %v1325
      %v1655 = vunpack.c.l.b16 %v1326
      %v1656 = vunpack.c.h.b16 %v1326
      %v1657 = vunpack.c.l.b16 %v1327
      %v1658 = vunpack.c.h.b16 %v1327
      %v1659 = vunpack.c.l.b16 %v1328
      %v1660 = vunpack.c.h.b16 %v1328
      %v1661 = vunpack.c.l.b16 %v1329
      %v1662 = vunpack.c.h.b16 %v1329
      %v1663 = vunpack.c.l.b16 %v1330
      %v1664 = vunpack.c.h.b16 %v1330
      %v1665 = vpack.c.b16 %v1603, %v1601
      %v1666 = vpack.c.b16 %v1604, %v1602
      %v1667 = vpack.c.b16 %v1607, %v1605
      %v1668 = vpack.c.b16 %v1608, %v1606
      %v1669 = vpack.c.b16 %v1611, %v1609
      %v1670 = vpack.c.b16 %v1612, %v1610
      %v1671 = vpack.c.b16 %v1615, %v1613
      %v1672 = vpack.c.b16 %v1616, %v1614
      %v1673 = vpack.c.b16 %v1619, %v1617
      %v1674 = vpack.c.b16 %v1620, %v1618
      %v1675 = vpack.c.b16 %v1623, %v1621
      %v1676 = vpack.c.b16 %v1624, %v1622
      %v1677 = vpack.c.b16 %v1627, %v1625
      %v1678 = vpack.c.b16 %v1628, %v1626
      %v1679 = vpack.c.b16 %v1631, %v1629
      %v1680 = vpack.c.b16 %v1632, %v1630
      %v1681 = vpack.c.b16 %v1635, %v1633
      %v1682 = vpack.c.b16 %v1636, %v1634
      %v1683 = vpack.c.b16 %v1639, %v1637
      %v1684 = vpack.c.b16 %v1640, %v1638
      %v1685 = vpack.c.b16 %v1643, %v1641
      %v1686 = vpack.c.b16 %v1644, %v1642
      %v1687 = vpack.c.b16 %v1647, %v1645
      %v1688 = vpack.c.b16 %v1648, %v1646
      %v1689 = vpack.c.b16 %v1651, %v1649
      %v1690 = vpack.c.b16 %v1652, %v1650
      %v1691 = vpack.c.b16 %v1655, %v1653
      %v1692 = vpack.c.b16 %v1656, %v1654
      %v1693 = vpack.c.b16 %v1659, %v1657
      %v1694 = vpack.c.b16 %v1660, %v1658
      %v1695 = vpack.c.b16 %v1663, %v1661
      %v1696 = vpack.c.b16 %v1664, %v1662
      %1729 = vmatprep.subr.bf16.mxu0 %v1680
      %1730 = vmatpush1.bf16.msra.mxu0 %v1679
      %1731 = vmatprep.subr.bf16.mxu0 %v1678
      %1732 = vmatpush1.bf16.msra.mxu0 %v1677
      %1733 = vmatprep.subr.bf16.mxu0 %v1676
      %1734 = vmatpush1.bf16.msra.mxu0 %v1675
      %1735 = vmatprep.subr.bf16.mxu0 %v1674
      %1736 = vmatpush1.bf16.msra.mxu0 %v1673
      %1737 = vmatprep.subr.bf16.mxu0 %v1672
      %1738 = vmatpush1.bf16.msra.mxu0 %v1671
      %1739 = vmatprep.subr.bf16.mxu0 %v1670
      %1740 = vmatpush1.bf16.msra.mxu0 %v1669
      %1741 = vmatprep.subr.bf16.mxu0 %v1668
      %1742 = vmatpush1.bf16.msra.mxu0 %v1667
      %1743 = vmatprep.subr.bf16.mxu0 %v1666
      %1744 = vmatpush1.bf16.msra.mxu0 %v1665
      %1745 = vmatprep.subr.bf16.mxu0 %v1696
      %1746 = vmatpush2.bf16.msra.mxu0 %v1695
      %1747 = vmatprep.subr.bf16.mxu0 %v1694
      %1748 = vmatpush2.bf16.msra.mxu0 %v1693
      %1749 = vmatprep.subr.bf16.mxu0 %v1692
      %1750 = vmatpush2.bf16.msra.mxu0 %v1691
      %1751 = vmatprep.subr.bf16.mxu0 %v1690
      %1752 = vmatpush2.bf16.msra.mxu0 %v1689
      %1753 = vmatprep.subr.bf16.mxu0 %v1688
      %1754 = vmatpush2.bf16.msra.mxu0 %v1687
      %1755 = vmatprep.subr.bf16.mxu0 %v1686
      %1756 = vmatpush2.bf16.msra.mxu0 %v1685
      %1757 = vmatprep.subr.bf16.mxu0 %v1684
      %1758 = vmatpush2.bf16.msra.mxu0 %v1683
      %1759 = vmatprep.subr.bf16.mxu0 %v1682
      %1760 = vmatpush2.bf16.msra.mxu0 %v1681
      %1761 = vmatprep.mubr.bf16.mxu0 %v1298
      %1762 = vmatmul.mubr.bf16.gmra.mxu0 %v1297
      %v1763 = vpop.f32.mrf.mxu0
      %v1764 = vadd.f32 %v1561, %v1763
      %v1765 = vpop.f32.mrf.mxu0
      %v1766 = vadd.f32 %v1563, %v1765
      %v1767 = vpop.f32.mrf.mxu0
      %v1768 = vadd.f32 %v1565, %v1767
      %v1769 = vpop.f32.mrf.mxu0
      %v1770 = vadd.f32 %v1567, %v1769
      %1771 = vdwg.mxu0
      %v1772 = vrot.slane %v1126, 1
      %v1773 = vrot.slane %v1128, 1
      %v1774 = vsel %vm958, %v1772, %v1773
      %v1775 = vrot.slane %v1127, 1
      %v1776 = vrot.slane %v1129, 1
      %v1777 = vsel %vm958, %v1775, %v1776
      %v1782 = vsel %vm958, %v1773, 0.0
      %v1783 = vsel %vm958, %v1776, 0.0
      %v1784 = vpack.c.bf16 %v1782, %v1774
      %v1785 = vpack.c.bf16 %v1783, %v1777
      %s1786 = scalar_lea.vmem %s9, 512
      %v1787 = vld [vmem:[%s1786] sm:$0xff]
      %v1788 = vld [vmem:[%s1786 + $0x8] sm:$0xff]
      %v1789 = vld [vmem:[%s1786 + $0x10] sm:$0xff]
      %v1790 = vld [vmem:[%s1786 + $0x18] sm:$0xff]
      %v1791 = vld [vmem:[%s1786 + $0x20] sm:$0xff]
      %v1792 = vld [vmem:[%s1786 + $0x28] sm:$0xff]
      %v1793 = vld [vmem:[%s1786 + $0x30] sm:$0xff]
      %v1794 = vld [vmem:[%s1786 + $0x38] sm:$0xff]
      %v1795 = vld [vmem:[%s1786 + $0x40] sm:$0xff]
      %v1796 = vld [vmem:[%s1786 + $0x48] sm:$0xff]
      %v1797 = vld [vmem:[%s1786 + $0x50] sm:$0xff]
      %v1798 = vld [vmem:[%s1786 + $0x58] sm:$0xff]
      %v1799 = vld [vmem:[%s1786 + $0x60] sm:$0xff]
      %v1800 = vld [vmem:[%s1786 + $0x68] sm:$0xff]
      %v1801 = vld [vmem:[%s1786 + $0x70] sm:$0xff]
      %v1802 = vld [vmem:[%s1786 + $0x78] sm:$0xff]
      %v1803 = vld [vmem:[%s1786 + $0x80] sm:$0xff]
      %v1804 = vld [vmem:[%s1786 + $0x88] sm:$0xff]
      %v1805 = vld [vmem:[%s1786 + $0x90] sm:$0xff]
      %v1806 = vld [vmem:[%s1786 + $0x98] sm:$0xff]
      %v1807 = vld [vmem:[%s1786 + $0xa0] sm:$0xff]
      %v1808 = vld [vmem:[%s1786 + $0xa8] sm:$0xff]
      %v1809 = vld [vmem:[%s1786 + $0xb0] sm:$0xff]
      %v1810 = vld [vmem:[%s1786 + $0xb8] sm:$0xff]
      %v1811 = vld [vmem:[%s1786 + $0xc0] sm:$0xff]
      %v1812 = vld [vmem:[%s1786 + $0xc8] sm:$0xff]
      %v1813 = vld [vmem:[%s1786 + $0xd0] sm:$0xff]
      %v1814 = vld [vmem:[%s1786 + $0xd8] sm:$0xff]
      %v1815 = vld [vmem:[%s1786 + $0xe0] sm:$0xff]
      %v1816 = vld [vmem:[%s1786 + $0xe8] sm:$0xff]
      %v1817 = vld [vmem:[%s1786 + $0xf0] sm:$0xff]
      %v1818 = vld [vmem:[%s1786 + $0xf8] sm:$0xff]
      %v1851 = vunpack.c.l.b16 %v1787
      %v1852 = vunpack.c.h.b16 %v1787
      %v1853 = vunpack.c.l.b16 %v1788
      %v1854 = vunpack.c.h.b16 %v1788
      %v1855 = vunpack.c.l.b16 %v1789
      %v1856 = vunpack.c.h.b16 %v1789
      %v1857 = vunpack.c.l.b16 %v1790
      %v1858 = vunpack.c.h.b16 %v1790
      %v1859 = vunpack.c.l.b16 %v1791
      %v1860 = vunpack.c.h.b16 %v1791
      %v1861 = vunpack.c.l.b16 %v1792
      %v1862 = vunpack.c.h.b16 %v1792
      %v1863 = vunpack.c.l.b16 %v1793
      %v1864 = vunpack.c.h.b16 %v1793
      %v1865 = vunpack.c.l.b16 %v1794
      %v1866 = vunpack.c.h.b16 %v1794
      %v1867 = vunpack.c.l.b16 %v1795
      %v1868 = vunpack.c.h.b16 %v1795
      %v1869 = vunpack.c.l.b16 %v1796
      %v1870 = vunpack.c.h.b16 %v1796
      %v1871 = vunpack.c.l.b16 %v1797
      %v1872 = vunpack.c.h.b16 %v1797
      %v1873 = vunpack.c.l.b16 %v1798
      %v1874 = vunpack.c.h.b16 %v1798
      %v1875 = vunpack.c.l.b16 %v1799
      %v1876 = vunpack.c.h.b16 %v1799
      %v1877 = vunpack.c.l.b16 %v1800
      %v1878 = vunpack.c.h.b16 %v1800
      %v1879 = vunpack.c.l.b16 %v1801
      %v1880 = vunpack.c.h.b16 %v1801
      %v1881 = vunpack.c.l.b16 %v1802
      %v1882 = vunpack.c.h.b16 %v1802
      %v1883 = vunpack.c.l.b16 %v1803
      %v1884 = vunpack.c.h.b16 %v1803
      %v1885 = vunpack.c.l.b16 %v1804
      %v1886 = vunpack.c.h.b16 %v1804
      %v1887 = vunpack.c.l.b16 %v1805
      %v1888 = vunpack.c.h.b16 %v1805
      %v1889 = vunpack.c.l.b16 %v1806
      %v1890 = vunpack.c.h.b16 %v1806
      %v1891 = vunpack.c.l.b16 %v1807
      %v1892 = vunpack.c.h.b16 %v1807
      %v1893 = vunpack.c.l.b16 %v1808
      %v1894 = vunpack.c.h.b16 %v1808
      %v1895 = vunpack.c.l.b16 %v1809
      %v1896 = vunpack.c.h.b16 %v1809
      %v1897 = vunpack.c.l.b16 %v1810
      %v1898 = vunpack.c.h.b16 %v1810
      %v1899 = vunpack.c.l.b16 %v1811
      %v1900 = vunpack.c.h.b16 %v1811
      %v1901 = vunpack.c.l.b16 %v1812
      %v1902 = vunpack.c.h.b16 %v1812
      %v1903 = vunpack.c.l.b16 %v1813
      %v1904 = vunpack.c.h.b16 %v1813
      %v1905 = vunpack.c.l.b16 %v1814
      %v1906 = vunpack.c.h.b16 %v1814
      %v1907 = vunpack.c.l.b16 %v1815
      %v1908 = vunpack.c.h.b16 %v1815
      %v1909 = vunpack.c.l.b16 %v1816
      %v1910 = vunpack.c.h.b16 %v1816
      %v1911 = vunpack.c.l.b16 %v1817
      %v1912 = vunpack.c.h.b16 %v1817
      %v1913 = vunpack.c.l.b16 %v1818
      %v1914 = vunpack.c.h.b16 %v1818
      %v1915 = vpack.c.b16 %v1853, %v1851
      %v1916 = vpack.c.b16 %v1854, %v1852
      %v1917 = vpack.c.b16 %v1857, %v1855
      %v1918 = vpack.c.b16 %v1858, %v1856
      %v1919 = vpack.c.b16 %v1861, %v1859
      %v1920 = vpack.c.b16 %v1862, %v1860
      %v1921 = vpack.c.b16 %v1865, %v1863
      %v1922 = vpack.c.b16 %v1866, %v1864
      %v1923 = vpack.c.b16 %v1869, %v1867
      %v1924 = vpack.c.b16 %v1870, %v1868
      %v1925 = vpack.c.b16 %v1873, %v1871
      %v1926 = vpack.c.b16 %v1874, %v1872
      %v1927 = vpack.c.b16 %v1877, %v1875
      %v1928 = vpack.c.b16 %v1878, %v1876
      %v1929 = vpack.c.b16 %v1881, %v1879
      %v1930 = vpack.c.b16 %v1882, %v1880
      %v1931 = vpack.c.b16 %v1885, %v1883
      %v1932 = vpack.c.b16 %v1886, %v1884
      %v1933 = vpack.c.b16 %v1889, %v1887
      %v1934 = vpack.c.b16 %v1890, %v1888
      %v1935 = vpack.c.b16 %v1893, %v1891
      %v1936 = vpack.c.b16 %v1894, %v1892
      %v1937 = vpack.c.b16 %v1897, %v1895
      %v1938 = vpack.c.b16 %v1898, %v1896
      %v1939 = vpack.c.b16 %v1901, %v1899
      %v1940 = vpack.c.b16 %v1902, %v1900
      %v1941 = vpack.c.b16 %v1905, %v1903
      %v1942 = vpack.c.b16 %v1906, %v1904
      %v1943 = vpack.c.b16 %v1909, %v1907
      %v1944 = vpack.c.b16 %v1910, %v1908
      %v1945 = vpack.c.b16 %v1913, %v1911
      %v1946 = vpack.c.b16 %v1914, %v1912
      %1979 = vmatprep.subr.bf16.mxu0 %v1930
      %1980 = vmatpush1.bf16.msra.mxu0 %v1929
      %1981 = vmatprep.subr.bf16.mxu0 %v1928
      %1982 = vmatpush1.bf16.msra.mxu0 %v1927
      %1983 = vmatprep.subr.bf16.mxu0 %v1926
      %1984 = vmatpush1.bf16.msra.mxu0 %v1925
      %1985 = vmatprep.subr.bf16.mxu0 %v1924
      %1986 = vmatpush1.bf16.msra.mxu0 %v1923
      %1987 = vmatprep.subr.bf16.mxu0 %v1922
      %1988 = vmatpush1.bf16.msra.mxu0 %v1921
      %1989 = vmatprep.subr.bf16.mxu0 %v1920
      %1990 = vmatpush1.bf16.msra.mxu0 %v1919
      %1991 = vmatprep.subr.bf16.mxu0 %v1918
      %1992 = vmatpush1.bf16.msra.mxu0 %v1917
      %1993 = vmatprep.subr.bf16.mxu0 %v1916
      %1994 = vmatpush1.bf16.msra.mxu0 %v1915
      %1995 = vmatprep.subr.bf16.mxu0 %v1946
      %1996 = vmatpush2.bf16.msra.mxu0 %v1945
      %1997 = vmatprep.subr.bf16.mxu0 %v1944
      %1998 = vmatpush2.bf16.msra.mxu0 %v1943
      %1999 = vmatprep.subr.bf16.mxu0 %v1942
      %2000 = vmatpush2.bf16.msra.mxu0 %v1941
      %2001 = vmatprep.subr.bf16.mxu0 %v1940
      %2002 = vmatpush2.bf16.msra.mxu0 %v1939
      %2003 = vmatprep.subr.bf16.mxu0 %v1938
      %2004 = vmatpush2.bf16.msra.mxu0 %v1937
      %2005 = vmatprep.subr.bf16.mxu0 %v1936
      %2006 = vmatpush2.bf16.msra.mxu0 %v1935
      %2007 = vmatprep.subr.bf16.mxu0 %v1934
      %2008 = vmatpush2.bf16.msra.mxu0 %v1933
      %2009 = vmatprep.subr.bf16.mxu0 %v1932
      %2010 = vmatpush2.bf16.msra.mxu0 %v1931
      %2011 = vmatprep.mubr.bf16.mxu0 %v1785
      %2012 = vmatmul.mubr.bf16.gmra.mxu0 %v1784
      %v2013 = vpop.f32.mrf.mxu0
      %v2014 = vadd.f32 0.0, %v2013
      %v2015 = vpop.f32.mrf.mxu0
      %v2016 = vadd.f32 0.0, %v2015
      %v2017 = vpop.f32.mrf.mxu0
      %v2018 = vadd.f32 0.0, %v2017
      %v2019 = vpop.f32.mrf.mxu0
      %v2020 = vadd.f32 0.0, %v2019
      %2021 = vdwg.mxu0
      %v2022 = vadd.f32 %v1764, %v2014
      %v2023 = vadd.f32 %v1766, %v2016
      %v2024 = vadd.f32 %v1768, %v2018
      %v2025 = vadd.f32 %v1770, %v2020
      %v2026 = vld [vmem:[%s10] sm:$0x3]
      %v2028 = vlaneseq
      %v2029 = vshrl.u32 %v2028, 7
      %v2030 = vsub.s32 0, %v2029
      %v2031 = vrot.slane %v2026, %v2030
      %v2032 = vlaneseq
      %v2033 = vshrl.u32 %v2032, 7
      %v2034 = vsub.s32 1, %v2033
      %v2035 = vrot.slane %v2026, %v2034
      %v2038 = vadd.f32 %v2022, %v2031
      %v2039 = vadd.f32 %v2023, %v2035
      %v2040 = vadd.f32 %v2024, %v2031
      %v2041 = vadd.f32 %v2025, %v2035
      %v2042 = vadd.f32 %v2038, %v1273
      %v2043 = vadd.f32 %v2039, %v1275
      %v2044 = vadd.f32 %v2040, %v1277
      %v2045 = vadd.f32 %v2041, %v1279
      %v2046 = vmax.f32 %v2042, 0.0
      %v2047 = vmax.f32 %v2043, 0.0
      %v2048 = vmax.f32 %v2044, 0.0
      %v2049 = vmax.f32 %v2045, 0.0
      %2050 = vst [vmem:[%s403] sm:$0xff] %v2046
      %2051 = vst [vmem:[%s403 + $0x8] sm:$0xff] %v2047
      %2052 = vst [vmem:[%s403 + $0x10] sm:$0xff] %v2048
      %2053 = vst [vmem:[%s403 + $0x18] sm:$0xff] %v2049
      %p2054 = scmp.lt.s32.totalorder %s22, 1
      %s2055 = scalar_select %p2054, %s22, 1
      %s2056 = smul.addr %s2055, 4
      %s2057 = smul.addr %s2056, 8
      %s2058 = scalar_lea.vmem %s11, %s2057
      // Predicated region
      $region65: #{upconv_forward.2} parent=63 // pred_check
        %p2059 = pneg %p281
      $region66: #{upconv_forward.2} parent=63 // pred_check_branch
        %2061 = sbr.rel (%p2059) target = $region68
      $region67: #{upconv_forward.2} parent=63 // pred_region
        _
      $region68: #{upconv_forward.2} parent=63 // pred_fallthru
        _
    $region64: #{upconv_forward.2} parent=5 // pred_fallthru
      _
    %p2062 = scmp.le.s32.totalorder 2, %s17
    // Predicated region
    $region69: #{upconv_forward.2} parent=5 // pred_check
      %p2063 = pneg %p2062
    $region70: #{upconv_forward.2} parent=5 // pred_check_branch
      %2065 = sbr.rel (%p2063) target = $region72
    $region71: #{upconv_forward.2} parent=5 // pred_region
      %s2066 = ssub.s32 %s17, 2
      // Predicated region
      $region73: #{upconv_forward.2} parent=71 // pred_check
        %p2067 = pneg %p287
      $region74: #{upconv_forward.2} parent=71 // pred_check_branch
        %2069 = sbr.rel (%p2067) target = $region76
      $region75: #{upconv_forward.2} parent=71 // pred_region
        %p2070 = scmp.lt.s32.totalorder %s23, 1
        %s2071 = scalar_select %p2070, %s23, 1
        %s2072 = smul.addr %s2071, 4
        %s2073 = smul.addr %s2072, 8
        %s2074 = scalar_lea.vmem %s11, %s2073
      $region76: #{upconv_forward.2} parent=71 // pred_fallthru
        _
    $region72: #{upconv_forward.2} parent=5 // pred_fallthru
      _
  $region6: #{upconv_forward.2} parent=0 // loop_footer
    %s21 = sadd.s32 1, %s17
  $region7: #{upconv_forward.2} parent=0 // loop_footer_branch
    %16 = sbr.rel target = $region3
  $region8: #{upconv_forward.2} parent=0 // loop_exit
    _

// kernel: upconv_forward.3
$region0: #{upconv_forward.3}
  #allocation0 [shape = 'u32[]', space=smem, size = 0x4, offset = 0x4, fixed_abs, tag = 'smem constant byte address 0x4 - core index']
  #allocation1 [shape = 'u32[144,128]{1,0:T(1,128)}', space=vmem, size = 0x12000, scoped, tag = 'internal scratch']
  %s0 = inlined_call_operand.vmem [shape: f32[2,16,256], index: 0, kind: input, shape index: {}]
  %s1 = inlined_call_operand.vmem [shape: bf16[3,256,256], index: 1, kind: input, shape index: {}]
  %s2 = inlined_call_operand.vmem [shape: f32[1,256], index: 2, kind: input, shape index: {}]
  %s3 = inlined_call_operand.vmem [shape: bf16[3,256,256], index: 3, kind: input, shape index: {}]
  %s4 = inlined_call_operand.vmem [shape: f32[1,256], index: 4, kind: input, shape index: {}]
  %s5 = inlined_call_operand.vmem [shape: f32[2,16,256], index: 5, kind: output, shape index: {}]
  %s6 = sld [smem:[#allocation0]]
  $region53: #{upconv_forward.3} parent=0
    _
  %s8 = ssub.s32 1, %s6
  %s9 = scalar_select 0, %s8, %s6
  loop: start=0, step=1, limit=4
  $region2: #{upconv_forward.3} parent=0 // loop_pre_header
    _
  $region3: #{upconv_forward.3} parent=0 // loop_header
    %s11 = sphi 0, %s15
    %p12 = scmp.ge.s32.totalorder %s11, 4
    %s21 = sphi 0, %s23
    %s24 = sphi 0, %s21
    %s25 = sphi 0, %s24
    %s41 = sphi 0, %s25
    %s45 = sphi 0, %s45
    %s47 = sphi 0, %s45
    %s48 = sphi 0, %s47
    %s62 = sphi 0, %s48
    %s66 = sphi 0, %s66
    %s68 = sphi 0, %s66
    %s69 = sphi 0, %s68
    %s83 = sphi 0, %s69
    %s87 = sphi 0, %s87
    %s89 = sphi 0, %s87
    %s90 = sphi 0, %s89
    %s104 = sphi 0, %s90
    %s108 = sphi 0, %s108
    %s110 = sphi 0, %s108
    %s111 = sphi 0, %s110
    %s125 = sphi 0, %s111
    %s131 = sphi 0, %s133
    %s134 = sphi 0, %s131
    %s135 = sphi 0, %s134
    %s151 = sphi 0, %s135
  $region4: #{upconv_forward.3} parent=0 // loop_header_branch
    %14 = sbr.rel (%p12) target = $region8
  $region5: #{upconv_forward.3} parent=0 // loop_body
    %s16 = ssub.s32 %s11, 1
    %s17 = ssub.s32 %s11, 2
    %s18 = sadd.s32 %s11, 1
    %s19 = ssub.s32 %s11, %s18
    %p20 = scmp.eq.s32.totalorder %s19, 0
    %s22 = sadd.s32 %s21, 1
    %s23 = scalar_select %p20, %s21, %s22
    %p26 = pneg %p20
    %p27 = scmp.eq.s32.totalorder %s11, 1
    %p28 = por %p26, %p27
    %p29 = scmp.ne.s32.totalorder %s21, %s24
    %p30 = scmp.eq.s32.totalorder %s11, 0
    %p31 = por %p29, %p30
    %p32 = scmp.ne.s32.totalorder %s21, %s24
    %p33 = scmp.eq.s32.totalorder %s16, 1
    %p34 = por %p32, %p33
    %p35 = scmp.ne.s32.totalorder %s24, %s25
    %p36 = scmp.eq.s32.totalorder %s16, 0
    %p37 = por %p35, %p36
    %p38 = scmp.ne.s32.totalorder %s24, %s25
    %p39 = scmp.eq.s32.totalorder %s17, 1
    %p40 = por %p38, %p39
    %p42 = scmp.ne.s32.totalorder %s25, %s41
    %p43 = scmp.eq.s32.totalorder %s17, 0
    %p44 = por %p42, %p43
    %s46 = sadd.s32 %s45, 1
    %p49 = scmp.eq.s32.totalorder %s11, 1
    %p50 = scmp.ne.s32.totalorder %s45, %s47
    %p51 = scmp.eq.s32.totalorder %s11, 0
    %p52 = por %p50, %p51
    %p53 = scmp.ne.s32.totalorder %s45, %s47
    %p54 = scmp.eq.s32.totalorder %s16, 1
    %p55 = por %p53, %p54
    %p56 = scmp.ne.s32.totalorder %s47, %s48
    %p57 = scmp.eq.s32.totalorder %s16, 0
    %p58 = por %p56, %p57
    %p59 = scmp.ne.s32.totalorder %s47, %s48
    %p60 = scmp.eq.s32.totalorder %s17, 1
    %p61 = por %p59, %p60
    %p63 = scmp.ne.s32.totalorder %s48, %s62
    %p64 = scmp.eq.s32.totalorder %s17, 0
    %p65 = por %p63, %p64
    %s67 = sadd.s32 %s66, 1
    %p70 = scmp.eq.s32.totalorder %s11, 1
    %p71 = scmp.ne.s32.totalorder %s66, %s68
    %p72 = scmp.eq.s32.totalorder %s11, 0
    %p73 = por %p71, %p72
    %p74 = scmp.ne.s32.totalorder %s66, %s68
    %p75 = scmp.eq.s32.totalorder %s16, 1
    %p76 = por %p74, %p75
    %p77 = scmp.ne.s32.totalorder %s68, %s69
    %p78 = scmp.eq.s32.totalorder %s16, 0
    %p79 = por %p77, %p78
    %p80 = scmp.ne.s32.totalorder %s68, %s69
    %p81 = scmp.eq.s32.totalorder %s17, 1
    %p82 = por %p80, %p81
    %p84 = scmp.ne.s32.totalorder %s69, %s83
    %p85 = scmp.eq.s32.totalorder %s17, 0
    %p86 = por %p84, %p85
    %s88 = sadd.s32 %s87, 1
    %p91 = scmp.eq.s32.totalorder %s11, 1
    %p92 = scmp.ne.s32.totalorder %s87, %s89
    %p93 = scmp.eq.s32.totalorder %s11, 0
    %p94 = por %p92, %p93
    %p95 = scmp.ne.s32.totalorder %s87, %s89
    %p96 = scmp.eq.s32.totalorder %s16, 1
    %p97 = por %p95, %p96
    %p98 = scmp.ne.s32.totalorder %s89, %s90
    %p99 = scmp.eq.s32.totalorder %s16, 0
    %p100 = por %p98, %p99
    %p101 = scmp.ne.s32.totalorder %s89, %s90
    %p102 = scmp.eq.s32.totalorder %s17, 1
    %p103 = por %p101, %p102
    %p105 = scmp.ne.s32.totalorder %s90, %s104
    %p106 = scmp.eq.s32.totalorder %s17, 0
    %p107 = por %p105, %p106
    %s109 = sadd.s32 %s108, 1
    %p112 = scmp.eq.s32.totalorder %s11, 1
    %p113 = scmp.ne.s32.totalorder %s108, %s110
    %p114 = scmp.eq.s32.totalorder %s11, 0
    %p115 = por %p113, %p114
    %p116 = scmp.ne.s32.totalorder %s108, %s110
    %p117 = scmp.eq.s32.totalorder %s16, 1
    %p118 = por %p116, %p117
    %p119 = scmp.ne.s32.totalorder %s110, %s111
    %p120 = scmp.eq.s32.totalorder %s16, 0
    %p121 = por %p119, %p120
    %p122 = scmp.ne.s32.totalorder %s110, %s111
    %p123 = scmp.eq.s32.totalorder %s17, 1
    %p124 = por %p122, %p123
    %p126 = scmp.ne.s32.totalorder %s111, %s125
    %p127 = scmp.eq.s32.totalorder %s17, 0
    %p128 = por %p126, %p127
    %s129 = ssub.s32 %s11, %s18
    %p130 = scmp.eq.s32.totalorder %s129, 0
    %s132 = sadd.s32 %s131, 1
    %s133 = scalar_select %p130, %s131, %s132
    %p136 = pneg %p130
    %p137 = scmp.eq.s32.totalorder %s11, 1
    %p138 = por %p136, %p137
    %p139 = scmp.ne.s32.totalorder %s131, %s134
    %p140 = scmp.eq.s32.totalorder %s11, 0
    %p141 = por %p139, %p140
    %p142 = scmp.ne.s32.totalorder %s131, %s134
    %p143 = scmp.eq.s32.totalorder %s16, 1
    %p144 = por %p142, %p143
    %p145 = scmp.ne.s32.totalorder %s134, %s135
    %p146 = scmp.eq.s32.totalorder %s16, 0
    %p147 = por %p145, %p146
    %p148 = scmp.ne.s32.totalorder %s134, %s135
    %p149 = scmp.eq.s32.totalorder %s17, 1
    %p150 = por %p148, %p149
    %p152 = scmp.ne.s32.totalorder %s135, %s151
    %p153 = scmp.eq.s32.totalorder %s17, 0
    %p154 = por %p152, %p153
    %p155 = scmp.le.s32.totalorder 1, %s11
    %p156 = scmp.lt.s32.totalorder %s11, 3
    %p157 = pnand %p155, %p156
    %p158 = pneg %p157
    // Predicated region
    $region9: #{upconv_forward.3} parent=5 // pred_check
      _
    $region10: #{upconv_forward.3} parent=5 // pred_check_branch
      %160 = sbr.rel (%p157) target = $region12
    $region11: #{upconv_forward.3} parent=5 // pred_region
      %s161 = ssub.s32 %s11, 1
      // Predicated region
      $region13: #{upconv_forward.3} parent=11 // pred_check
        %p162 = pneg %p58
      $region14: #{upconv_forward.3} parent=11 // pred_check_branch
        %164 = sbr.rel (%p162) target = $region16
      $region15: #{upconv_forward.3} parent=11 // pred_region
        _
      $region16: #{upconv_forward.3} parent=11 // pred_fallthru
        _
      // Predicated region
      $region17: #{upconv_forward.3} parent=11 // pred_check
        %p165 = pneg %p79
      $region18: #{upconv_forward.3} parent=11 // pred_check_branch
        %167 = sbr.rel (%p165) target = $region20
      $region19: #{upconv_forward.3} parent=11 // pred_region
        _
      $region20: #{upconv_forward.3} parent=11 // pred_fallthru
        _
      // Predicated region
      $region21: #{upconv_forward.3} parent=11 // pred_check
        %p168 = pneg %p100
      $region22: #{upconv_forward.3} parent=11 // pred_check_branch
        %170 = sbr.rel (%p168) target = $region24
      $region23: #{upconv_forward.3} parent=11 // pred_region
        _
      $region24: #{upconv_forward.3} parent=11 // pred_fallthru
        _
      // Predicated region
      $region25: #{upconv_forward.3} parent=11 // pred_check
        %p171 = pneg %p121
      $region26: #{upconv_forward.3} parent=11 // pred_check_branch
        %173 = sbr.rel (%p171) target = $region28
      $region27: #{upconv_forward.3} parent=11 // pred_region
        _
      $region28: #{upconv_forward.3} parent=11 // pred_fallthru
        _
    $region12: #{upconv_forward.3} parent=5 // pred_fallthru
      _
    %p174 = scmp.lt.s32.totalorder %s11, 2
    // Predicated region
    $region29: #{upconv_forward.3} parent=5 // pred_check
      %p175 = pneg %p174
    $region30: #{upconv_forward.3} parent=5 // pred_check_branch
      %177 = sbr.rel (%p175) target = $region32
    $region31: #{upconv_forward.3} parent=5 // pred_region
      // Predicated region
      $region33: #{upconv_forward.3} parent=31 // pred_check
        %p178 = pneg %p31
      $region34: #{upconv_forward.3} parent=31 // pred_check_branch
        %180 = sbr.rel (%p178) target = $region36
      $region35: #{upconv_forward.3} parent=31 // pred_region
        %p181 = scmp.lt.s32.totalorder %s11, 1
        %s182 = scalar_select %p181, %s11, 1
        %s183 = smul.addr %s182, 4
        %s184 = smul.addr %s183, 8
        %s185 = scalar_lea.vmem %s0, %s184
      $region36: #{upconv_forward.3} parent=31 // pred_fallthru
        _
    $region32: #{upconv_forward.3} parent=5 // pred_fallthru
      _
    %p186 = scmp.le.s32.totalorder 1, %s11
    %p187 = scmp.lt.s32.totalorder %s11, 3
    %p188 = pnand %p186, %p187
    %p189 = pneg %p188
    // Predicated region
    $region37: #{upconv_forward.3} parent=5 // pred_check
      _
    $region38: #{upconv_forward.3} parent=5 // pred_check_branch
      %191 = sbr.rel (%p188) target = $region40
    $region39: #{upconv_forward.3} parent=5 // pred_region
      %s192 = ssub.s32 %s11, 1
      %p193 = scmp.lt.s32.totalorder %s16, 1
      %s194 = scalar_select %p193, %s16, 1
      %s195 = smul.addr %s194, 4
      %s196 = smul.addr %s195, 8
      %s197 = scalar_lea.vmem %s0, %s196
      %p198 = pneg %p37
      %p199 = pneg %p34
      %p200 = pneg %p58
      %p201 = pneg %p55
      %p202 = pneg %p79
      %p203 = pneg %p76
      %p204 = pneg %p100
      %p205 = pneg %p97
      %p206 = pneg %p121
      %p207 = pneg %p118
      %p208 = pneg %p147
      %p209 = pneg %p144
      %p210 = scmp.lt.s32.totalorder %s16, 1
      %s211 = scalar_select %p210, %s16, 1
      %s212 = smul.addr %s211, 4
      %s213 = smul.addr %s212, 8
      %s214 = scalar_lea.vmem %s5, %s213
      %p215 = scmp.lt.s32.totalorder %s16, 1
      %s216 = scalar_select %p215, %s16, 1
      %s217 = smul.addr %s216, 4
      %s218 = smul.addr %s217, 8
      %s219 = scalar_lea.vmem %s0, %s218
      %p220 = scmp.lt.s32.totalorder %s16, 1
      %s221 = scalar_select %p220, %s16, 1
      %s222 = smul.addr %s221, 4
      %s223 = smul.addr %s222, 8
      %s224 = scalar_lea.vmem %s5, %s223
      %v225 = vld [vmem:[%s219] sm:$0xff]
      %v226 = vld [vmem:[%s219 + $0x8] sm:$0xff]
      %v227 = vld [vmem:[%s219 + $0x10] sm:$0xff]
      %v228 = vld [vmem:[%s219 + $0x18] sm:$0xff]
      %vm233 = vcmask 1040384
      %v234 = vrot.slane %v225, 7
      %v235 = vrot.slane %v226, 7
      %v236 = vrot.slane %v227, 7
      %v237 = vsel %vm233, %v234, %v236
      %v238 = vrot.slane %v228, 7
      %v239 = vsel %vm233, %v235, %v238
      %v244 = vsel %vm233, 0.0, %v234
      %v245 = vsel %vm233, 0.0, %v235
      %v246 = vpack.c.bf16 %v237, %v244
      %v247 = vpack.c.bf16 %v239, %v245
      %v248 = vld [vmem:[%s1] sm:$0xff]
      %v249 = vld [vmem:[%s1 + $0x8] sm:$0xff]
      %v250 = vld [vmem:[%s1 + $0x10] sm:$0xff]
      %v251 = vld [vmem:[%s1 + $0x18] sm:$0xff]
      %v252 = vld [vmem:[%s1 + $0x20] sm:$0xff]
      %v253 = vld [vmem:[%s1 + $0x28] sm:$0xff]
      %v254 = vld [vmem:[%s1 + $0x30] sm:$0xff]
      %v255 = vld [vmem:[%s1 + $0x38] sm:$0xff]
      %v256 = vld [vmem:[%s1 + $0x40] sm:$0xff]
      %v257 = vld [vmem:[%s1 + $0x48] sm:$0xff]
      %v258 = vld [vmem:[%s1 + $0x50] sm:$0xff]
      %v259 = vld [vmem:[%s1 + $0x58] sm:$0xff]
      %v260 = vld [vmem:[%s1 + $0x60] sm:$0xff]
      %v261 = vld [vmem:[%s1 + $0x68] sm:$0xff]
      %v262 = vld [vmem:[%s1 + $0x70] sm:$0xff]
      %v263 = vld [vmem:[%s1 + $0x78] sm:$0xff]
      %v264 = vld [vmem:[%s1 + $0x80] sm:$0xff]
      %v265 = vld [vmem:[%s1 + $0x88] sm:$0xff]
      %v266 = vld [vmem:[%s1 + $0x90] sm:$0xff]
      %v267 = vld [vmem:[%s1 + $0x98] sm:$0xff]
      %v268 = vld [vmem:[%s1 + $0xa0] sm:$0xff]
      %v269 = vld [vmem:[%s1 + $0xa8] sm:$0xff]
      %v270 = vld [vmem:[%s1 + $0xb0] sm:$0xff]
      %v271 = vld [vmem:[%s1 + $0xb8] sm:$0xff]
      %v272 = vld [vmem:[%s1 + $0xc0] sm:$0xff]
      %v273 = vld [vmem:[%s1 + $0xc8] sm:$0xff]
      %v274 = vld [vmem:[%s1 + $0xd0] sm:$0xff]
      %v275 = vld [vmem:[%s1 + $0xd8] sm:$0xff]
      %v276 = vld [vmem:[%s1 + $0xe0] sm:$0xff]
      %v277 = vld [vmem:[%s1 + $0xe8] sm:$0xff]
      %v278 = vld [vmem:[%s1 + $0xf0] sm:$0xff]
      %v279 = vld [vmem:[%s1 + $0xf8] sm:$0xff]
      %v280 = vpack.c.bf16 %v227, %v225
      %v281 = vpack.c.bf16 %v228, %v226
      %s282 = scalar_lea.vmem %s1, 256
      %v283 = vld [vmem:[%s282] sm:$0xff]
      %v284 = vld [vmem:[%s282 + $0x8] sm:$0xff]
      %v285 = vld [vmem:[%s282 + $0x10] sm:$0xff]
      %v286 = vld [vmem:[%s282 + $0x18] sm:$0xff]
      %v287 = vld [vmem:[%s282 + $0x20] sm:$0xff]
      %v288 = vld [vmem:[%s282 + $0x28] sm:$0xff]
      %v289 = vld [vmem:[%s282 + $0x30] sm:$0xff]
      %v290 = vld [vmem:[%s282 + $0x38] sm:$0xff]
      %v291 = vld [vmem:[%s282 + $0x40] sm:$0xff]
      %v292 = vld [vmem:[%s282 + $0x48] sm:$0xff]
      %v293 = vld [vmem:[%s282 + $0x50] sm:$0xff]
      %v294 = vld [vmem:[%s282 + $0x58] sm:$0xff]
      %v295 = vld [vmem:[%s282 + $0x60] sm:$0xff]
      %v296 = vld [vmem:[%s282 + $0x68] sm:$0xff]
      %v297 = vld [vmem:[%s282 + $0x70] sm:$0xff]
      %v298 = vld [vmem:[%s282 + $0x78] sm:$0xff]
      %v299 = vld [vmem:[%s282 + $0x80] sm:$0xff]
      %v300 = vld [vmem:[%s282 + $0x88] sm:$0xff]
      %v301 = vld [vmem:[%s282 + $0x90] sm:$0xff]
      %v302 = vld [vmem:[%s282 + $0x98] sm:$0xff]
      %v303 = vld [vmem:[%s282 + $0xa0] sm:$0xff]
      %v304 = vld [vmem:[%s282 + $0xa8] sm:$0xff]
      %v305 = vld [vmem:[%s282 + $0xb0] sm:$0xff]
      %v306 = vld [vmem:[%s282 + $0xb8] sm:$0xff]
      %v307 = vld [vmem:[%s282 + $0xc0] sm:$0xff]
      %v308 = vld [vmem:[%s282 + $0xc8] sm:$0xff]
      %v309 = vld [vmem:[%s282 + $0xd0] sm:$0xff]
      %v310 = vld [vmem:[%s282 + $0xd8] sm:$0xff]
      %v311 = vld [vmem:[%s282 + $0xe0] sm:$0xff]
      %v312 = vld [vmem:[%s282 + $0xe8] sm:$0xff]
      %v313 = vld [vmem:[%s282 + $0xf0] sm:$0xff]
      %v314 = vld [vmem:[%s282 + $0xf8] sm:$0xff]
      %v347 = vunpack.c.l.b16 %v283
      %v348 = vunpack.c.h.b16 %v283
      %v349 = vunpack.c.l.b16 %v284
      %v350 = vunpack.c.h.b16 %v284
      %v351 = vunpack.c.l.b16 %v285
      %v352 = vunpack.c.h.b16 %v285
      %v353 = vunpack.c.l.b16 %v286
      %v354 = vunpack.c.h.b16 %v286
      %v355 = vunpack.c.l.b16 %v287
      %v356 = vunpack.c.h.b16 %v287
      %v357 = vunpack.c.l.b16 %v288
      %v358 = vunpack.c.h.b16 %v288
      %v359 = vunpack.c.l.b16 %v289
      %v360 = vunpack.c.h.b16 %v289
      %v361 = vunpack.c.l.b16 %v290
      %v362 = vunpack.c.h.b16 %v290
      %v363 = vunpack.c.l.b16 %v291
      %v364 = vunpack.c.h.b16 %v291
      %v365 = vunpack.c.l.b16 %v292
      %v366 = vunpack.c.h.b16 %v292
      %v367 = vunpack.c.l.b16 %v293
      %v368 = vunpack.c.h.b16 %v293
      %v369 = vunpack.c.l.b16 %v294
      %v370 = vunpack.c.h.b16 %v294
      %v371 = vunpack.c.l.b16 %v295
      %v372 = vunpack.c.h.b16 %v295
      %v373 = vunpack.c.l.b16 %v296
      %v374 = vunpack.c.h.b16 %v296
      %v375 = vunpack.c.l.b16 %v297
      %v376 = vunpack.c.h.b16 %v297
      %v377 = vunpack.c.l.b16 %v298
      %v378 = vunpack.c.h.b16 %v298
      %v379 = vunpack.c.l.b16 %v299
      %v380 = vunpack.c.h.b16 %v299
      %v381 = vunpack.c.l.b16 %v300
      %v382 = vunpack.c.h.b16 %v300
      %v383 = vunpack.c.l.b16 %v301
      %v384 = vunpack.c.h.b16 %v301
      %v385 = vunpack.c.l.b16 %v302
      %v386 = vunpack.c.h.b16 %v302
      %v387 = vunpack.c.l.b16 %v303
      %v388 = vunpack.c.h.b16 %v303
      %v389 = vunpack.c.l.b16 %v304
      %v390 = vunpack.c.h.b16 %v304
      %v391 = vunpack.c.l.b16 %v305
      %v392 = vunpack.c.h.b16 %v305
      %v393 = vunpack.c.l.b16 %v306
      %v394 = vunpack.c.h.b16 %v306
      %v395 = vunpack.c.l.b16 %v307
      %v396 = vunpack.c.h.b16 %v307
      %v397 = vunpack.c.l.b16 %v308
      %v398 = vunpack.c.h.b16 %v308
      %v399 = vunpack.c.l.b16 %v309
      %v400 = vunpack.c.h.b16 %v309
      %v401 = vunpack.c.l.b16 %v310
      %v402 = vunpack.c.h.b16 %v310
      %v403 = vunpack.c.l.b16 %v311
      %v404 = vunpack.c.h.b16 %v311
      %v405 = vunpack.c.l.b16 %v312
      %v406 = vunpack.c.h.b16 %v312
      %v407 = vunpack.c.l.b16 %v313
      %v408 = vunpack.c.h.b16 %v313
      %v409 = vunpack.c.l.b16 %v314
      %v410 = vunpack.c.h.b16 %v314
      %v411 = vpack.c.b16 %v349, %v347
      %v412 = vpack.c.b16 %v350, %v348
      %v413 = vpack.c.b16 %v353, %v351
      %v414 = vpack.c.b16 %v354, %v352
      %v415 = vpack.c.b16 %v357, %v355
      %v416 = vpack.c.b16 %v358, %v356
      %v417 = vpack.c.b16 %v361, %v359
      %v418 = vpack.c.b16 %v362, %v360
      %v419 = vpack.c.b16 %v365, %v363
      %v420 = vpack.c.b16 %v366, %v364
      %v421 = vpack.c.b16 %v369, %v367
      %v422 = vpack.c.b16 %v370, %v368
      %v423 = vpack.c.b16 %v373, %v371
      %v424 = vpack.c.b16 %v374, %v372
      %v425 = vpack.c.b16 %v377, %v375
      %v426 = vpack.c.b16 %v378, %v376
      %v427 = vpack.c.b16 %v381, %v379
      %v428 = vpack.c.b16 %v382, %v380
      %v429 = vpack.c.b16 %v385, %v383
      %v430 = vpack.c.b16 %v386, %v384
      %v431 = vpack.c.b16 %v389, %v387
      %v432 = vpack.c.b16 %v390, %v388
      %v433 = vpack.c.b16 %v393, %v391
      %v434 = vpack.c.b16 %v394, %v392
      %v435 = vpack.c.b16 %v397, %v395
      %v436 = vpack.c.b16 %v398, %v396
      %v437 = vpack.c.b16 %v401, %v399
      %v438 = vpack.c.b16 %v402, %v400
      %v439 = vpack.c.b16 %v405, %v403
      %v440 = vpack.c.b16 %v406, %v404
      %v441 = vpack.c.b16 %v409, %v407
      %v442 = vpack.c.b16 %v410, %v408
      %475 = vmatprep.subr.bf16.mxu0 %v426
      %476 = vmatpush1.bf16.msra.mxu0 %v425
      %477 = vmatprep.subr.bf16.mxu0 %v424
      %478 = vmatpush1.bf16.msra.mxu0 %v423
      %479 = vmatprep.subr.bf16.mxu0 %v422
      %480 = vmatpush1.bf16.msra.mxu0 %v421
      %481 = vmatprep.subr.bf16.mxu0 %v420
      %482 = vmatpush1.bf16.msra.mxu0 %v419
      %483 = vmatprep.subr.bf16.mxu0 %v418
      %484 = vmatpush1.bf16.msra.mxu0 %v417
      %485 = vmatprep.subr.bf16.mxu0 %v416
      %486 = vmatpush1.bf16.msra.mxu0 %v415
      %487 = vmatprep.subr.bf16.mxu0 %v414
      %488 = vmatpush1.bf16.msra.mxu0 %v413
      %489 = vmatprep.subr.bf16.mxu0 %v412
      %490 = vmatpush1.bf16.msra.mxu0 %v411
      %491 = vmatprep.subr.bf16.mxu0 %v442
      %492 = vmatpush2.bf16.msra.mxu0 %v441
      %493 = vmatprep.subr.bf16.mxu0 %v440
      %494 = vmatpush2.bf16.msra.mxu0 %v439
      %495 = vmatprep.subr.bf16.mxu0 %v438
      %496 = vmatpush2.bf16.msra.mxu0 %v437
      %497 = vmatprep.subr.bf16.mxu0 %v436
      %498 = vmatpush2.bf16.msra.mxu0 %v435
      %499 = vmatprep.subr.bf16.mxu0 %v434
      %500 = vmatpush2.bf16.msra.mxu0 %v433
      %501 = vmatprep.subr.bf16.mxu0 %v432
      %502 = vmatpush2.bf16.msra.mxu0 %v431
      %503 = vmatprep.subr.bf16.mxu0 %v430
      %504 = vmatpush2.bf16.msra.mxu0 %v429
      %505 = vmatprep.subr.bf16.mxu0 %v428
      %506 = vmatpush2.bf16.msra.mxu0 %v427
      %507 = vmatprep.mubr.bf16.mxu0 %v281
      %508 = vmatmul.mubr.bf16.gmra.mxu0 %v280
      %v509 = vpop.f32.mrf.mxu0
      %v510 = vadd.f32 0.0, %v509
      %v511 = vpop.f32.mrf.mxu0
      %v512 = vadd.f32 0.0, %v511
      %v513 = vpop.f32.mrf.mxu0
      %v514 = vadd.f32 0.0, %v513
      %v515 = vpop.f32.mrf.mxu0
      %v516 = vadd.f32 0.0, %v515
      %517 = vdwg.mxu0
      %v550 = vunpack.c.l.b16 %v248
      %v551 = vunpack.c.h.b16 %v248
      %v552 = vunpack.c.l.b16 %v249
      %v553 = vunpack.c.h.b16 %v249
      %v554 = vunpack.c.l.b16 %v250
      %v555 = vunpack.c.h.b16 %v250
      %v556 = vunpack.c.l.b16 %v251
      %v557 = vunpack.c.h.b16 %v251
      %v558 = vunpack.c.l.b16 %v252
      %v559 = vunpack.c.h.b16 %v252
      %v560 = vunpack.c.l.b16 %v253
      %v561 = vunpack.c.h.b16 %v253
      %v562 = vunpack.c.l.b16 %v254
      %v563 = vunpack.c.h.b16 %v254
      %v564 = vunpack.c.l.b16 %v255
      %v565 = vunpack.c.h.b16 %v255
      %v566 = vunpack.c.l.b16 %v256
      %v567 = vunpack.c.h.b16 %v256
      %v568 = vunpack.c.l.b16 %v257
      %v569 = vunpack.c.h.b16 %v257
      %v570 = vunpack.c.l.b16 %v258
      %v571 = vunpack.c.h.b16 %v258
      %v572 = vunpack.c.l.b16 %v259
      %v573 = vunpack.c.h.b16 %v259
      %v574 = vunpack.c.l.b16 %v260
      %v575 = vunpack.c.h.b16 %v260
      %v576 = vunpack.c.l.b16 %v261
      %v577 = vunpack.c.h.b16 %v261
      %v578 = vunpack.c.l.b16 %v262
      %v579 = vunpack.c.h.b16 %v262
      %v580 = vunpack.c.l.b16 %v263
      %v581 = vunpack.c.h.b16 %v263
      %v582 = vunpack.c.l.b16 %v264
      %v583 = vunpack.c.h.b16 %v264
      %v584 = vunpack.c.l.b16 %v265
      %v585 = vunpack.c.h.b16 %v265
      %v586 = vunpack.c.l.b16 %v266
      %v587 = vunpack.c.h.b16 %v266
      %v588 = vunpack.c.l.b16 %v267
      %v589 = vunpack.c.h.b16 %v267
      %v590 = vunpack.c.l.b16 %v268
      %v591 = vunpack.c.h.b16 %v268
      %v592 = vunpack.c.l.b16 %v269
      %v593 = vunpack.c.h.b16 %v269
      %v594 = vunpack.c.l.b16 %v270
      %v595 = vunpack.c.h.b16 %v270
      %v596 = vunpack.c.l.b16 %v271
      %v597 = vunpack.c.h.b16 %v271
      %v598 = vunpack.c.l.b16 %v272
      %v599 = vunpack.c.h.b16 %v272
      %v600 = vunpack.c.l.b16 %v273
      %v601 = vunpack.c.h.b16 %v273
      %v602 = vunpack.c.l.b16 %v274
      %v603 = vunpack.c.h.b16 %v274
      %v604 = vunpack.c.l.b16 %v275
      %v605 = vunpack.c.h.b16 %v275
      %v606 = vunpack.c.l.b16 %v276
      %v607 = vunpack.c.h.b16 %v276
      %v608 = vunpack.c.l.b16 %v277
      %v609 = vunpack.c.h.b16 %v277
      %v610 = vunpack.c.l.b16 %v278
      %v611 = vunpack.c.h.b16 %v278
      %v612 = vunpack.c.l.b16 %v279
      %v613 = vunpack.c.h.b16 %v279
      %v614 = vpack.c.b16 %v552, %v550
      %v615 = vpack.c.b16 %v553, %v551
      %v616 = vpack.c.b16 %v556, %v554
      %v617 = vpack.c.b16 %v557, %v555
      %v618 = vpack.c.b16 %v560, %v558
      %v619 = vpack.c.b16 %v561, %v559
      %v620 = vpack.c.b16 %v564, %v562
      %v621 = vpack.c.b16 %v565, %v563
      %v622 = vpack.c.b16 %v568, %v566
      %v623 = vpack.c.b16 %v569, %v567
      %v624 = vpack.c.b16 %v572, %v570
      %v625 = vpack.c.b16 %v573, %v571
      %v626 = vpack.c.b16 %v576, %v574
      %v627 = vpack.c.b16 %v577, %v575
      %v628 = vpack.c.b16 %v580, %v578
      %v629 = vpack.c.b16 %v581, %v579
      %v630 = vpack.c.b16 %v584, %v582
      %v631 = vpack.c.b16 %v585, %v583
      %v632 = vpack.c.b16 %v588, %v586
      %v633 = vpack.c.b16 %v589, %v587
      %v634 = vpack.c.b16 %v592, %v590
      %v635 = vpack.c.b16 %v593, %v591
      %v636 = vpack.c.b16 %v596, %v594
      %v637 = vpack.c.b16 %v597, %v595
      %v638 = vpack.c.b16 %v600, %v598
      %v639 = vpack.c.b16 %v601, %v599
      %v640 = vpack.c.b16 %v604, %v602
      %v641 = vpack.c.b16 %v605, %v603
      %v642 = vpack.c.b16 %v608, %v606
      %v643 = vpack.c.b16 %v609, %v607
      %v644 = vpack.c.b16 %v612, %v610
      %v645 = vpack.c.b16 %v613, %v611
      %678 = vmatprep.subr.bf16.mxu0 %v629
      %679 = vmatpush1.bf16.msra.mxu0 %v628
      %680 = vmatprep.subr.bf16.mxu0 %v627
      %681 = vmatpush1.bf16.msra.mxu0 %v626
      %682 = vmatprep.subr.bf16.mxu0 %v625
      %683 = vmatpush1.bf16.msra.mxu0 %v624
      %684 = vmatprep.subr.bf16.mxu0 %v623
      %685 = vmatpush1.bf16.msra.mxu0 %v622
      %686 = vmatprep.subr.bf16.mxu0 %v621
      %687 = vmatpush1.bf16.msra.mxu0 %v620
      %688 = vmatprep.subr.bf16.mxu0 %v619
      %689 = vmatpush1.bf16.msra.mxu0 %v618
      %690 = vmatprep.subr.bf16.mxu0 %v617
      %691 = vmatpush1.bf16.msra.mxu0 %v616
      %692 = vmatprep.subr.bf16.mxu0 %v615
      %693 = vmatpush1.bf16.msra.mxu0 %v614
      %694 = vmatprep.subr.bf16.mxu0 %v645
      %695 = vmatpush2.bf16.msra.mxu0 %v644
      %696 = vmatprep.subr.bf16.mxu0 %v643
      %697 = vmatpush2.bf16.msra.mxu0 %v642
      %698 = vmatprep.subr.bf16.mxu0 %v641
      %699 = vmatpush2.bf16.msra.mxu0 %v640
      %700 = vmatprep.subr.bf16.mxu0 %v639
      %701 = vmatpush2.bf16.msra.mxu0 %v638
      %702 = vmatprep.subr.bf16.mxu0 %v637
      %703 = vmatpush2.bf16.msra.mxu0 %v636
      %704 = vmatprep.subr.bf16.mxu0 %v635
      %705 = vmatpush2.bf16.msra.mxu0 %v634
      %706 = vmatprep.subr.bf16.mxu0 %v633
      %707 = vmatpush2.bf16.msra.mxu0 %v632
      %708 = vmatprep.subr.bf16.mxu0 %v631
      %709 = vmatpush2.bf16.msra.mxu0 %v630
      %710 = vmatprep.mubr.bf16.mxu0 %v247
      %711 = vmatmul.mubr.bf16.gmra.mxu0 %v246
      %v712 = vpop.f32.mrf.mxu0
      %v713 = vadd.f32 %v510, %v712
      %v714 = vpop.f32.mrf.mxu0
      %v715 = vadd.f32 %v512, %v714
      %v716 = vpop.f32.mrf.mxu0
      %v717 = vadd.f32 %v514, %v716
      %v718 = vpop.f32.mrf.mxu0
      %v719 = vadd.f32 %v516, %v718
      %720 = vdwg.mxu0
      %vm721 = vcmask 1046528
      %v722 = vrot.slane %v225, 1
      %v723 = vrot.slane %v227, 1
      %v724 = vsel %vm721, %v722, %v723
      %v725 = vrot.slane %v226, 1
      %v726 = vrot.slane %v228, 1
      %v727 = vsel %vm721, %v725, %v726
      %v732 = vsel %vm721, %v723, 0.0
      %v733 = vsel %vm721, %v726, 0.0
      %v734 = vpack.c.bf16 %v732, %v724
      %v735 = vpack.c.bf16 %v733, %v727
      %s736 = scalar_lea.vmem %s1, 512
      %v737 = vld [vmem:[%s736] sm:$0xff]
      %v738 = vld [vmem:[%s736 + $0x8] sm:$0xff]
      %v739 = vld [vmem:[%s736 + $0x10] sm:$0xff]
      %v740 = vld [vmem:[%s736 + $0x18] sm:$0xff]
      %v741 = vld [vmem:[%s736 + $0x20] sm:$0xff]
      %v742 = vld [vmem:[%s736 + $0x28] sm:$0xff]
      %v743 = vld [vmem:[%s736 + $0x30] sm:$0xff]
      %v744 = vld [vmem:[%s736 + $0x38] sm:$0xff]
      %v745 = vld [vmem:[%s736 + $0x40] sm:$0xff]
      %v746 = vld [vmem:[%s736 + $0x48] sm:$0xff]
      %v747 = vld [vmem:[%s736 + $0x50] sm:$0xff]
      %v748 = vld [vmem:[%s736 + $0x58] sm:$0xff]
      %v749 = vld [vmem:[%s736 + $0x60] sm:$0xff]
      %v750 = vld [vmem:[%s736 + $0x68] sm:$0xff]
      %v751 = vld [vmem:[%s736 + $0x70] sm:$0xff]
      %v752 = vld [vmem:[%s736 + $0x78] sm:$0xff]
      %v753 = vld [vmem:[%s736 + $0x80] sm:$0xff]
      %v754 = vld [vmem:[%s736 + $0x88] sm:$0xff]
      %v755 = vld [vmem:[%s736 + $0x90] sm:$0xff]
      %v756 = vld [vmem:[%s736 + $0x98] sm:$0xff]
      %v757 = vld [vmem:[%s736 + $0xa0] sm:$0xff]
      %v758 = vld [vmem:[%s736 + $0xa8] sm:$0xff]
      %v759 = vld [vmem:[%s736 + $0xb0] sm:$0xff]
      %v760 = vld [vmem:[%s736 + $0xb8] sm:$0xff]
      %v761 = vld [vmem:[%s736 + $0xc0] sm:$0xff]
      %v762 = vld [vmem:[%s736 + $0xc8] sm:$0xff]
      %v763 = vld [vmem:[%s736 + $0xd0] sm:$0xff]
      %v764 = vld [vmem:[%s736 + $0xd8] sm:$0xff]
      %v765 = vld [vmem:[%s736 + $0xe0] sm:$0xff]
      %v766 = vld [vmem:[%s736 + $0xe8] sm:$0xff]
      %v767 = vld [vmem:[%s736 + $0xf0] sm:$0xff]
      %v768 = vld [vmem:[%s736 + $0xf8] sm:$0xff]
      %v801 = vunpack.c.l.b16 %v737
      %v802 = vunpack.c.h.b16 %v737
      %v803 = vunpack.c.l.b16 %v738
      %v804 = vunpack.c.h.b16 %v738
      %v805 = vunpack.c.l.b16 %v739
      %v806 = vunpack.c.h.b16 %v739
      %v807 = vunpack.c.l.b16 %v740
      %v808 = vunpack.c.h.b16 %v740
      %v809 = vunpack.c.l.b16 %v741
      %v810 = vunpack.c.h.b16 %v741
      %v811 = vunpack.c.l.b16 %v742
      %v812 = vunpack.c.h.b16 %v742
      %v813 = vunpack.c.l.b16 %v743
      %v814 = vunpack.c.h.b16 %v743
      %v815 = vunpack.c.l.b16 %v744
      %v816 = vunpack.c.h.b16 %v744
      %v817 = vunpack.c.l.b16 %v745
      %v818 = vunpack.c.h.b16 %v745
      %v819 = vunpack.c.l.b16 %v746
      %v820 = vunpack.c.h.b16 %v746
      %v821 = vunpack.c.l.b16 %v747
      %v822 = vunpack.c.h.b16 %v747
      %v823 = vunpack.c.l.b16 %v748
      %v824 = vunpack.c.h.b16 %v748
      %v825 = vunpack.c.l.b16 %v749
      %v826 = vunpack.c.h.b16 %v749
      %v827 = vunpack.c.l.b16 %v750
      %v828 = vunpack.c.h.b16 %v750
      %v829 = vunpack.c.l.b16 %v751
      %v830 = vunpack.c.h.b16 %v751
      %v831 = vunpack.c.l.b16 %v752
      %v832 = vunpack.c.h.b16 %v752
      %v833 = vunpack.c.l.b16 %v753
      %v834 = vunpack.c.h.b16 %v753
      %v835 = vunpack.c.l.b16 %v754
      %v836 = vunpack.c.h.b16 %v754
      %v837 = vunpack.c.l.b16 %v755
      %v838 = vunpack.c.h.b16 %v755
      %v839 = vunpack.c.l.b16 %v756
      %v840 = vunpack.c.h.b16 %v756
      %v841 = vunpack.c.l.b16 %v757
      %v842 = vunpack.c.h.b16 %v757
      %v843 = vunpack.c.l.b16 %v758
      %v844 = vunpack.c.h.b16 %v758
      %v845 = vunpack.c.l.b16 %v759
      %v846 = vunpack.c.h.b16 %v759
      %v847 = vunpack.c.l.b16 %v760
      %v848 = vunpack.c.h.b16 %v760
      %v849 = vunpack.c.l.b16 %v761
      %v850 = vunpack.c.h.b16 %v761
      %v851 = vunpack.c.l.b16 %v762
      %v852 = vunpack.c.h.b16 %v762
      %v853 = vunpack.c.l.b16 %v763
      %v854 = vunpack.c.h.b16 %v763
      %v855 = vunpack.c.l.b16 %v764
      %v856 = vunpack.c.h.b16 %v764
      %v857 = vunpack.c.l.b16 %v765
      %v858 = vunpack.c.h.b16 %v765
      %v859 = vunpack.c.l.b16 %v766
      %v860 = vunpack.c.h.b16 %v766
      %v861 = vunpack.c.l.b16 %v767
      %v862 = vunpack.c.h.b16 %v767
      %v863 = vunpack.c.l.b16 %v768
      %v864 = vunpack.c.h.b16 %v768
      %v865 = vpack.c.b16 %v803, %v801
      %v866 = vpack.c.b16 %v804, %v802
      %v867 = vpack.c.b16 %v807, %v805
      %v868 = vpack.c.b16 %v808, %v806
      %v869 = vpack.c.b16 %v811, %v809
      %v870 = vpack.c.b16 %v812, %v810
      %v871 = vpack.c.b16 %v815, %v813
      %v872 = vpack.c.b16 %v816, %v814
      %v873 = vpack.c.b16 %v819, %v817
      %v874 = vpack.c.b16 %v820, %v818
      %v875 = vpack.c.b16 %v823, %v821
      %v876 = vpack.c.b16 %v824, %v822
      %v877 = vpack.c.b16 %v827, %v825
      %v878 = vpack.c.b16 %v828, %v826
      %v879 = vpack.c.b16 %v831, %v829
      %v880 = vpack.c.b16 %v832, %v830
      %v881 = vpack.c.b16 %v835, %v833
      %v882 = vpack.c.b16 %v836, %v834
      %v883 = vpack.c.b16 %v839, %v837
      %v884 = vpack.c.b16 %v840, %v838
      %v885 = vpack.c.b16 %v843, %v841
      %v886 = vpack.c.b16 %v844, %v842
      %v887 = vpack.c.b16 %v847, %v845
      %v888 = vpack.c.b16 %v848, %v846
      %v889 = vpack.c.b16 %v851, %v849
      %v890 = vpack.c.b16 %v852, %v850
      %v891 = vpack.c.b16 %v855, %v853
      %v892 = vpack.c.b16 %v856, %v854
      %v893 = vpack.c.b16 %v859, %v857
      %v894 = vpack.c.b16 %v860, %v858
      %v895 = vpack.c.b16 %v863, %v861
      %v896 = vpack.c.b16 %v864, %v862
      %929 = vmatprep.subr.bf16.mxu0 %v880
      %930 = vmatpush1.bf16.msra.mxu0 %v879
      %931 = vmatprep.subr.bf16.mxu0 %v878
      %932 = vmatpush1.bf16.msra.mxu0 %v877
      %933 = vmatprep.subr.bf16.mxu0 %v876
      %934 = vmatpush1.bf16.msra.mxu0 %v875
      %935 = vmatprep.subr.bf16.mxu0 %v874
      %936 = vmatpush1.bf16.msra.mxu0 %v873
      %937 = vmatprep.subr.bf16.mxu0 %v872
      %938 = vmatpush1.bf16.msra.mxu0 %v871
      %939 = vmatprep.subr.bf16.mxu0 %v870
      %940 = vmatpush1.bf16.msra.mxu0 %v869
      %941 = vmatprep.subr.bf16.mxu0 %v868
      %942 = vmatpush1.bf16.msra.mxu0 %v867
      %943 = vmatprep.subr.bf16.mxu0 %v866
      %944 = vmatpush1.bf16.msra.mxu0 %v865
      %945 = vmatprep.subr.bf16.mxu0 %v896
      %946 = vmatpush2.bf16.msra.mxu0 %v895
      %947 = vmatprep.subr.bf16.mxu0 %v894
      %948 = vmatpush2.bf16.msra.mxu0 %v893
      %949 = vmatprep.subr.bf16.mxu0 %v892
      %950 = vmatpush2.bf16.msra.mxu0 %v891
      %951 = vmatprep.subr.bf16.mxu0 %v890
      %952 = vmatpush2.bf16.msra.mxu0 %v889
      %953 = vmatprep.subr.bf16.mxu0 %v888
      %954 = vmatpush2.bf16.msra.mxu0 %v887
      %955 = vmatprep.subr.bf16.mxu0 %v886
      %956 = vmatpush2.bf16.msra.mxu0 %v885
      %957 = vmatprep.subr.bf16.mxu0 %v884
      %958 = vmatpush2.bf16.msra.mxu0 %v883
      %959 = vmatprep.subr.bf16.mxu0 %v882
      %960 = vmatpush2.bf16.msra.mxu0 %v881
      %961 = vmatprep.mubr.bf16.mxu0 %v735
      %962 = vmatmul.mubr.bf16.gmra.mxu0 %v734
      %v963 = vpop.f32.mrf.mxu0
      %v964 = vadd.f32 0.0, %v963
      %v965 = vpop.f32.mrf.mxu0
      %v966 = vadd.f32 0.0, %v965
      %v967 = vpop.f32.mrf.mxu0
      %v968 = vadd.f32 0.0, %v967
      %v969 = vpop.f32.mrf.mxu0
      %v970 = vadd.f32 0.0, %v969
      %971 = vdwg.mxu0
      %v972 = vadd.f32 %v713, %v964
      %v973 = vadd.f32 %v715, %v966
      %v974 = vadd.f32 %v717, %v968
      %v975 = vadd.f32 %v719, %v970
      %v976 = vld [vmem:[%s2] sm:$0x3]
      %v978 = vlaneseq
      %v979 = vshrl.u32 %v978, 7
      %v980 = vsub.s32 0, %v979
      %v981 = vrot.slane %v976, %v980
      %v982 = vlaneseq
      %v983 = vshrl.u32 %v982, 7
      %v984 = vsub.s32 1, %v983
      %v985 = vrot.slane %v976, %v984
      %v988 = vadd.f32 %v972, %v981
      %v989 = vadd.f32 %v973, %v985
      %v990 = vadd.f32 %v974, %v981
      %v991 = vadd.f32 %v975, %v985
      %v992 = vmax.f32 %v988, 0.0
      %v993 = vmax.f32 %v989, 0.0
      %v994 = vmax.f32 %v990, 0.0
      %v995 = vmax.f32 %v991, 0.0
      %v1000 = vrot.slane %v992, 7
      %v1001 = vrot.slane %v993, 7
      %v1002 = vrot.slane %v994, 7
      %v1003 = vsel %vm233, %v1000, %v1002
      %v1004 = vrot.slane %v995, 7
      %v1005 = vsel %vm233, %v1001, %v1004
      %v1010 = vsel %vm233, 0.0, %v1000
      %v1011 = vsel %vm233, 0.0, %v1001
      %v1012 = vpack.c.bf16 %v1003, %v1010
      %v1013 = vpack.c.bf16 %v1005, %v1011
      %v1014 = vld [vmem:[%s3] sm:$0xff]
      %v1015 = vld [vmem:[%s3 + $0x8] sm:$0xff]
      %v1016 = vld [vmem:[%s3 + $0x10] sm:$0xff]
      %v1017 = vld [vmem:[%s3 + $0x18] sm:$0xff]
      %v1018 = vld [vmem:[%s3 + $0x20] sm:$0xff]
      %v1019 = vld [vmem:[%s3 + $0x28] sm:$0xff]
      %v1020 = vld [vmem:[%s3 + $0x30] sm:$0xff]
      %v1021 = vld [vmem:[%s3 + $0x38] sm:$0xff]
      %v1022 = vld [vmem:[%s3 + $0x40] sm:$0xff]
      %v1023 = vld [vmem:[%s3 + $0x48] sm:$0xff]
      %v1024 = vld [vmem:[%s3 + $0x50] sm:$0xff]
      %v1025 = vld [vmem:[%s3 + $0x58] sm:$0xff]
      %v1026 = vld [vmem:[%s3 + $0x60] sm:$0xff]
      %v1027 = vld [vmem:[%s3 + $0x68] sm:$0xff]
      %v1028 = vld [vmem:[%s3 + $0x70] sm:$0xff]
      %v1029 = vld [vmem:[%s3 + $0x78] sm:$0xff]
      %v1030 = vld [vmem:[%s3 + $0x80] sm:$0xff]
      %v1031 = vld [vmem:[%s3 + $0x88] sm:$0xff]
      %v1032 = vld [vmem:[%s3 + $0x90] sm:$0xff]
      %v1033 = vld [vmem:[%s3 + $0x98] sm:$0xff]
      %v1034 = vld [vmem:[%s3 + $0xa0] sm:$0xff]
      %v1035 = vld [vmem:[%s3 + $0xa8] sm:$0xff]
      %v1036 = vld [vmem:[%s3 + $0xb0] sm:$0xff]
      %v1037 = vld [vmem:[%s3 + $0xb8] sm:$0xff]
      %v1038 = vld [vmem:[%s3 + $0xc0] sm:$0xff]
      %v1039 = vld [vmem:[%s3 + $0xc8] sm:$0xff]
      %v1040 = vld [vmem:[%s3 + $0xd0] sm:$0xff]
      %v1041 = vld [vmem:[%s3 + $0xd8] sm:$0xff]
      %v1042 = vld [vmem:[%s3 + $0xe0] sm:$0xff]
      %v1043 = vld [vmem:[%s3 + $0xe8] sm:$0xff]
      %v1044 = vld [vmem:[%s3 + $0xf0] sm:$0xff]
      %v1045 = vld [vmem:[%s3 + $0xf8] sm:$0xff]
      %v1046 = vpack.c.bf16 %v994, %v992
      %v1047 = vpack.c.bf16 %v995, %v993
      %s1048 = scalar_lea.vmem %s3, 256
      %v1049 = vld [vmem:[%s1048] sm:$0xff]
      %v1050 = vld [vmem:[%s1048 + $0x8] sm:$0xff]
      %v1051 = vld [vmem:[%s1048 + $0x10] sm:$0xff]
      %v1052 = vld [vmem:[%s1048 + $0x18] sm:$0xff]
      %v1053 = vld [vmem:[%s1048 + $0x20] sm:$0xff]
      %v1054 = vld [vmem:[%s1048 + $0x28] sm:$0xff]
      %v1055 = vld [vmem:[%s1048 + $0x30] sm:$0xff]
      %v1056 = vld [vmem:[%s1048 + $0x38] sm:$0xff]
      %v1057 = vld [vmem:[%s1048 + $0x40] sm:$0xff]
      %v1058 = vld [vmem:[%s1048 + $0x48] sm:$0xff]
      %v1059 = vld [vmem:[%s1048 + $0x50] sm:$0xff]
      %v1060 = vld [vmem:[%s1048 + $0x58] sm:$0xff]
      %v1061 = vld [vmem:[%s1048 + $0x60] sm:$0xff]
      %v1062 = vld [vmem:[%s1048 + $0x68] sm:$0xff]
      %v1063 = vld [vmem:[%s1048 + $0x70] sm:$0xff]
      %v1064 = vld [vmem:[%s1048 + $0x78] sm:$0xff]
      %v1065 = vld [vmem:[%s1048 + $0x80] sm:$0xff]
      %v1066 = vld [vmem:[%s1048 + $0x88] sm:$0xff]
      %v1067 = vld [vmem:[%s1048 + $0x90] sm:$0xff]
      %v1068 = vld [vmem:[%s1048 + $0x98] sm:$0xff]
      %v1069 = vld [vmem:[%s1048 + $0xa0] sm:$0xff]
      %v1070 = vld [vmem:[%s1048 + $0xa8] sm:$0xff]
      %v1071 = vld [vmem:[%s1048 + $0xb0] sm:$0xff]
      %v1072 = vld [vmem:[%s1048 + $0xb8] sm:$0xff]
      %v1073 = vld [vmem:[%s1048 + $0xc0] sm:$0xff]
      %v1074 = vld [vmem:[%s1048 + $0xc8] sm:$0xff]
      %v1075 = vld [vmem:[%s1048 + $0xd0] sm:$0xff]
      %v1076 = vld [vmem:[%s1048 + $0xd8] sm:$0xff]
      %v1077 = vld [vmem:[%s1048 + $0xe0] sm:$0xff]
      %v1078 = vld [vmem:[%s1048 + $0xe8] sm:$0xff]
      %v1079 = vld [vmem:[%s1048 + $0xf0] sm:$0xff]
      %v1080 = vld [vmem:[%s1048 + $0xf8] sm:$0xff]
      %v1113 = vunpack.c.l.b16 %v1049
      %v1114 = vunpack.c.h.b16 %v1049
      %v1115 = vunpack.c.l.b16 %v1050
      %v1116 = vunpack.c.h.b16 %v1050
      %v1117 = vunpack.c.l.b16 %v1051
      %v1118 = vunpack.c.h.b16 %v1051
      %v1119 = vunpack.c.l.b16 %v1052
      %v1120 = vunpack.c.h.b16 %v1052
      %v1121 = vunpack.c.l.b16 %v1053
      %v1122 = vunpack.c.h.b16 %v1053
      %v1123 = vunpack.c.l.b16 %v1054
      %v1124 = vunpack.c.h.b16 %v1054
      %v1125 = vunpack.c.l.b16 %v1055
      %v1126 = vunpack.c.h.b16 %v1055
      %v1127 = vunpack.c.l.b16 %v1056
      %v1128 = vunpack.c.h.b16 %v1056
      %v1129 = vunpack.c.l.b16 %v1057
      %v1130 = vunpack.c.h.b16 %v1057
      %v1131 = vunpack.c.l.b16 %v1058
      %v1132 = vunpack.c.h.b16 %v1058
      %v1133 = vunpack.c.l.b16 %v1059
      %v1134 = vunpack.c.h.b16 %v1059
      %v1135 = vunpack.c.l.b16 %v1060
      %v1136 = vunpack.c.h.b16 %v1060
      %v1137 = vunpack.c.l.b16 %v1061
      %v1138 = vunpack.c.h.b16 %v1061
      %v1139 = vunpack.c.l.b16 %v1062
      %v1140 = vunpack.c.h.b16 %v1062
      %v1141 = vunpack.c.l.b16 %v1063
      %v1142 = vunpack.c.h.b16 %v1063
      %v1143 = vunpack.c.l.b16 %v1064
      %v1144 = vunpack.c.h.b16 %v1064
      %v1145 = vunpack.c.l.b16 %v1065
      %v1146 = vunpack.c.h.b16 %v1065
      %v1147 = vunpack.c.l.b16 %v1066
      %v1148 = vunpack.c.h.b16 %v1066
      %v1149 = vunpack.c.l.b16 %v1067
      %v1150 = vunpack.c.h.b16 %v1067
      %v1151 = vunpack.c.l.b16 %v1068
      %v1152 = vunpack.c.h.b16 %v1068
      %v1153 = vunpack.c.l.b16 %v1069
      %v1154 = vunpack.c.h.b16 %v1069
      %v1155 = vunpack.c.l.b16 %v1070
      %v1156 = vunpack.c.h.b16 %v1070
      %v1157 = vunpack.c.l.b16 %v1071
      %v1158 = vunpack.c.h.b16 %v1071
      %v1159 = vunpack.c.l.b16 %v1072
      %v1160 = vunpack.c.h.b16 %v1072
      %v1161 = vunpack.c.l.b16 %v1073
      %v1162 = vunpack.c.h.b16 %v1073
      %v1163 = vunpack.c.l.b16 %v1074
      %v1164 = vunpack.c.h.b16 %v1074
      %v1165 = vunpack.c.l.b16 %v1075
      %v1166 = vunpack.c.h.b16 %v1075
      %v1167 = vunpack.c.l.b16 %v1076
      %v1168 = vunpack.c.h.b16 %v1076
      %v1169 = vunpack.c.l.b16 %v1077
      %v1170 = vunpack.c.h.b16 %v1077
      %v1171 = vunpack.c.l.b16 %v1078
      %v1172 = vunpack.c.h.b16 %v1078
      %v1173 = vunpack.c.l.b16 %v1079
      %v1174 = vunpack.c.h.b16 %v1079
      %v1175 = vunpack.c.l.b16 %v1080
      %v1176 = vunpack.c.h.b16 %v1080
      %v1177 = vpack.c.b16 %v1115, %v1113
      %v1178 = vpack.c.b16 %v1116, %v1114
      %v1179 = vpack.c.b16 %v1119, %v1117
      %v1180 = vpack.c.b16 %v1120, %v1118
      %v1181 = vpack.c.b16 %v1123, %v1121
      %v1182 = vpack.c.b16 %v1124, %v1122
      %v1183 = vpack.c.b16 %v1127, %v1125
      %v1184 = vpack.c.b16 %v1128, %v1126
      %v1185 = vpack.c.b16 %v1131, %v1129
      %v1186 = vpack.c.b16 %v1132, %v1130
      %v1187 = vpack.c.b16 %v1135, %v1133
      %v1188 = vpack.c.b16 %v1136, %v1134
      %v1189 = vpack.c.b16 %v1139, %v1137
      %v1190 = vpack.c.b16 %v1140, %v1138
      %v1191 = vpack.c.b16 %v1143, %v1141
      %v1192 = vpack.c.b16 %v1144, %v1142
      %v1193 = vpack.c.b16 %v1147, %v1145
      %v1194 = vpack.c.b16 %v1148, %v1146
      %v1195 = vpack.c.b16 %v1151, %v1149
      %v1196 = vpack.c.b16 %v1152, %v1150
      %v1197 = vpack.c.b16 %v1155, %v1153
      %v1198 = vpack.c.b16 %v1156, %v1154
      %v1199 = vpack.c.b16 %v1159, %v1157
      %v1200 = vpack.c.b16 %v1160, %v1158
      %v1201 = vpack.c.b16 %v1163, %v1161
      %v1202 = vpack.c.b16 %v1164, %v1162
      %v1203 = vpack.c.b16 %v1167, %v1165
      %v1204 = vpack.c.b16 %v1168, %v1166
      %v1205 = vpack.c.b16 %v1171, %v1169
      %v1206 = vpack.c.b16 %v1172, %v1170
      %v1207 = vpack.c.b16 %v1175, %v1173
      %v1208 = vpack.c.b16 %v1176, %v1174
      %1241 = vmatprep.subr.bf16.mxu0 %v1192
      %1242 = vmatpush1.bf16.msra.mxu0 %v1191
      %1243 = vmatprep.subr.bf16.mxu0 %v1190
      %1244 = vmatpush1.bf16.msra.mxu0 %v1189
      %1245 = vmatprep.subr.bf16.mxu0 %v1188
      %1246 = vmatpush1.bf16.msra.mxu0 %v1187
      %1247 = vmatprep.subr.bf16.mxu0 %v1186
      %1248 = vmatpush1.bf16.msra.mxu0 %v1185
      %1249 = vmatprep.subr.bf16.mxu0 %v1184
      %1250 = vmatpush1.bf16.msra.mxu0 %v1183
      %1251 = vmatprep.subr.bf16.mxu0 %v1182
      %1252 = vmatpush1.bf16.msra.mxu0 %v1181
      %1253 = vmatprep.subr.bf16.mxu0 %v1180
      %1254 = vmatpush1.bf16.msra.mxu0 %v1179
      %1255 = vmatprep.subr.bf16.mxu0 %v1178
      %1256 = vmatpush1.bf16.msra.mxu0 %v1177
      %1257 = vmatprep.subr.bf16.mxu0 %v1208
      %1258 = vmatpush2.bf16.msra.mxu0 %v1207
      %1259 = vmatprep.subr.bf16.mxu0 %v1206
      %1260 = vmatpush2.bf16.msra.mxu0 %v1205
      %1261 = vmatprep.subr.bf16.mxu0 %v1204
      %1262 = vmatpush2.bf16.msra.mxu0 %v1203
      %1263 = vmatprep.subr.bf16.mxu0 %v1202
      %1264 = vmatpush2.bf16.msra.mxu0 %v1201
      %1265 = vmatprep.subr.bf16.mxu0 %v1200
      %1266 = vmatpush2.bf16.msra.mxu0 %v1199
      %1267 = vmatprep.subr.bf16.mxu0 %v1198
      %1268 = vmatpush2.bf16.msra.mxu0 %v1197
      %1269 = vmatprep.subr.bf16.mxu0 %v1196
      %1270 = vmatpush2.bf16.msra.mxu0 %v1195
      %1271 = vmatprep.subr.bf16.mxu0 %v1194
      %1272 = vmatpush2.bf16.msra.mxu0 %v1193
      %1273 = vmatprep.mubr.bf16.mxu0 %v1047
      %1274 = vmatmul.mubr.bf16.gmra.mxu0 %v1046
      %v1275 = vpop.f32.mrf.mxu0
      %v1276 = vadd.f32 0.0, %v1275
      %v1277 = vpop.f32.mrf.mxu0
      %v1278 = vadd.f32 0.0, %v1277
      %v1279 = vpop.f32.mrf.mxu0
      %v1280 = vadd.f32 0.0, %v1279
      %v1281 = vpop.f32.mrf.mxu0
      %v1282 = vadd.f32 0.0, %v1281
      %1283 = vdwg.mxu0
      %v1316 = vunpack.c.l.b16 %v1014
      %v1317 = vunpack.c.h.b16 %v1014
      %v1318 = vunpack.c.l.b16 %v1015
      %v1319 = vunpack.c.h.b16 %v1015
      %v1320 = vunpack.c.l.b16 %v1016
      %v1321 = vunpack.c.h.b16 %v1016
      %v1322 = vunpack.c.l.b16 %v1017
      %v1323 = vunpack.c.h.b16 %v1017
      %v1324 = vunpack.c.l.b16 %v1018
      %v1325 = vunpack.c.h.b16 %v1018
      %v1326 = vunpack.c.l.b16 %v1019
      %v1327 = vunpack.c.h.b16 %v1019
      %v1328 = vunpack.c.l.b16 %v1020
      %v1329 = vunpack.c.h.b16 %v1020
      %v1330 = vunpack.c.l.b16 %v1021
      %v1331 = vunpack.c.h.b16 %v1021
      %v1332 = vunpack.c.l.b16 %v1022
      %v1333 = vunpack.c.h.b16 %v1022
      %v1334 = vunpack.c.l.b16 %v1023
      %v1335 = vunpack.c.h.b16 %v1023
      %v1336 = vunpack.c.l.b16 %v1024
      %v1337 = vunpack.c.h.b16 %v1024
      %v1338 = vunpack.c.l.b16 %v1025
      %v1339 = vunpack.c.h.b16 %v1025
      %v1340 = vunpack.c.l.b16 %v1026
      %v1341 = vunpack.c.h.b16 %v1026
      %v1342 = vunpack.c.l.b16 %v1027
      %v1343 = vunpack.c.h.b16 %v1027
      %v1344 = vunpack.c.l.b16 %v1028
      %v1345 = vunpack.c.h.b16 %v1028
      %v1346 = vunpack.c.l.b16 %v1029
      %v1347 = vunpack.c.h.b16 %v1029
      %v1348 = vunpack.c.l.b16 %v1030
      %v1349 = vunpack.c.h.b16 %v1030
      %v1350 = vunpack.c.l.b16 %v1031
      %v1351 = vunpack.c.h.b16 %v1031
      %v1352 = vunpack.c.l.b16 %v1032
      %v1353 = vunpack.c.h.b16 %v1032
      %v1354 = vunpack.c.l.b16 %v1033
      %v1355 = vunpack.c.h.b16 %v1033
      %v1356 = vunpack.c.l.b16 %v1034
      %v1357 = vunpack.c.h.b16 %v1034
      %v1358 = vunpack.c.l.b16 %v1035
      %v1359 = vunpack.c.h.b16 %v1035
      %v1360 = vunpack.c.l.b16 %v1036
      %v1361 = vunpack.c.h.b16 %v1036
      %v1362 = vunpack.c.l.b16 %v1037
      %v1363 = vunpack.c.h.b16 %v1037
      %v1364 = vunpack.c.l.b16 %v1038
      %v1365 = vunpack.c.h.b16 %v1038
      %v1366 = vunpack.c.l.b16 %v1039
      %v1367 = vunpack.c.h.b16 %v1039
      %v1368 = vunpack.c.l.b16 %v1040
      %v1369 = vunpack.c.h.b16 %v1040
      %v1370 = vunpack.c.l.b16 %v1041
      %v1371 = vunpack.c.h.b16 %v1041
      %v1372 = vunpack.c.l.b16 %v1042
      %v1373 = vunpack.c.h.b16 %v1042
      %v1374 = vunpack.c.l.b16 %v1043
      %v1375 = vunpack.c.h.b16 %v1043
      %v1376 = vunpack.c.l.b16 %v1044
      %v1377 = vunpack.c.h.b16 %v1044
      %v1378 = vunpack.c.l.b16 %v1045
      %v1379 = vunpack.c.h.b16 %v1045
      %v1380 = vpack.c.b16 %v1318, %v1316
      %v1381 = vpack.c.b16 %v1319, %v1317
      %v1382 = vpack.c.b16 %v1322, %v1320
      %v1383 = vpack.c.b16 %v1323, %v1321
      %v1384 = vpack.c.b16 %v1326, %v1324
      %v1385 = vpack.c.b16 %v1327, %v1325
      %v1386 = vpack.c.b16 %v1330, %v1328
      %v1387 = vpack.c.b16 %v1331, %v1329
      %v1388 = vpack.c.b16 %v1334, %v1332
      %v1389 = vpack.c.b16 %v1335, %v1333
      %v1390 = vpack.c.b16 %v1338, %v1336
      %v1391 = vpack.c.b16 %v1339, %v1337
      %v1392 = vpack.c.b16 %v1342, %v1340
      %v1393 = vpack.c.b16 %v1343, %v1341
      %v1394 = vpack.c.b16 %v1346, %v1344
      %v1395 = vpack.c.b16 %v1347, %v1345
      %v1396 = vpack.c.b16 %v1350, %v1348
      %v1397 = vpack.c.b16 %v1351, %v1349
      %v1398 = vpack.c.b16 %v1354, %v1352
      %v1399 = vpack.c.b16 %v1355, %v1353
      %v1400 = vpack.c.b16 %v1358, %v1356
      %v1401 = vpack.c.b16 %v1359, %v1357
      %v1402 = vpack.c.b16 %v1362, %v1360
      %v1403 = vpack.c.b16 %v1363, %v1361
      %v1404 = vpack.c.b16 %v1366, %v1364
      %v1405 = vpack.c.b16 %v1367, %v1365
      %v1406 = vpack.c.b16 %v1370, %v1368
      %v1407 = vpack.c.b16 %v1371, %v1369
      %v1408 = vpack.c.b16 %v1374, %v1372
      %v1409 = vpack.c.b16 %v1375, %v1373
      %v1410 = vpack.c.b16 %v1378, %v1376
      %v1411 = vpack.c.b16 %v1379, %v1377
      %1444 = vmatprep.subr.bf16.mxu0 %v1395
      %1445 = vmatpush1.bf16.msra.mxu0 %v1394
      %1446 = vmatprep.subr.bf16.mxu0 %v1393
      %1447 = vmatpush1.bf16.msra.mxu0 %v1392
      %1448 = vmatprep.subr.bf16.mxu0 %v1391
      %1449 = vmatpush1.bf16.msra.mxu0 %v1390
      %1450 = vmatprep.subr.bf16.mxu0 %v1389
      %1451 = vmatpush1.bf16.msra.mxu0 %v1388
      %1452 = vmatprep.subr.bf16.mxu0 %v1387
      %1453 = vmatpush1.bf16.msra.mxu0 %v1386
      %1454 = vmatprep.subr.bf16.mxu0 %v1385
      %1455 = vmatpush1.bf16.msra.mxu0 %v1384
      %1456 = vmatprep.subr.bf16.mxu0 %v1383
      %1457 = vmatpush1.bf16.msra.mxu0 %v1382
      %1458 = vmatprep.subr.bf16.mxu0 %v1381
      %1459 = vmatpush1.bf16.msra.mxu0 %v1380
      %1460 = vmatprep.subr.bf16.mxu0 %v1411
      %1461 = vmatpush2.bf16.msra.mxu0 %v1410
      %1462 = vmatprep.subr.bf16.mxu0 %v1409
      %1463 = vmatpush2.bf16.msra.mxu0 %v1408
      %1464 = vmatprep.subr.bf16.mxu0 %v1407
      %1465 = vmatpush2.bf16.msra.mxu0 %v1406
      %1466 = vmatprep.subr.bf16.mxu0 %v1405
      %1467 = vmatpush2.bf16.msra.mxu0 %v1404
      %1468 = vmatprep.subr.bf16.mxu0 %v1403
      %1469 = vmatpush2.bf16.msra.mxu0 %v1402
      %1470 = vmatprep.subr.bf16.mxu0 %v1401
      %1471 = vmatpush2.bf16.msra.mxu0 %v1400
      %1472 = vmatprep.subr.bf16.mxu0 %v1399
      %1473 = vmatpush2.bf16.msra.mxu0 %v1398
      %1474 = vmatprep.subr.bf16.mxu0 %v1397
      %1475 = vmatpush2.bf16.msra.mxu0 %v1396
      %1476 = vmatprep.mubr.bf16.mxu0 %v1013
      %1477 = vmatmul.mubr.bf16.gmra.mxu0 %v1012
      %v1478 = vpop.f32.mrf.mxu0
      %v1479 = vadd.f32 %v1276, %v1478
      %v1480 = vpop.f32.mrf.mxu0
      %v1481 = vadd.f32 %v1278, %v1480
      %v1482 = vpop.f32.mrf.mxu0
      %v1483 = vadd.f32 %v1280, %v1482
      %v1484 = vpop.f32.mrf.mxu0
      %v1485 = vadd.f32 %v1282, %v1484
      %1486 = vdwg.mxu0
      %v1487 = vrot.slane %v992, 1
      %v1488 = vrot.slane %v994, 1
      %v1489 = vsel %vm721, %v1487, %v1488
      %v1490 = vrot.slane %v993, 1
      %v1491 = vrot.slane %v995, 1
      %v1492 = vsel %vm721, %v1490, %v1491
      %v1497 = vsel %vm721, %v1488, 0.0
      %v1498 = vsel %vm721, %v1491, 0.0
      %v1499 = vpack.c.bf16 %v1497, %v1489
      %v1500 = vpack.c.bf16 %v1498, %v1492
      %s1501 = scalar_lea.vmem %s3, 512
      %v1502 = vld [vmem:[%s1501] sm:$0xff]
      %v1503 = vld [vmem:[%s1501 + $0x8] sm:$0xff]
      %v1504 = vld [vmem:[%s1501 + $0x10] sm:$0xff]
      %v1505 = vld [vmem:[%s1501 + $0x18] sm:$0xff]
      %v1506 = vld [vmem:[%s1501 + $0x20] sm:$0xff]
      %v1507 = vld [vmem:[%s1501 + $0x28] sm:$0xff]
      %v1508 = vld [vmem:[%s1501 + $0x30] sm:$0xff]
      %v1509 = vld [vmem:[%s1501 + $0x38] sm:$0xff]
      %v1510 = vld [vmem:[%s1501 + $0x40] sm:$0xff]
      %v1511 = vld [vmem:[%s1501 + $0x48] sm:$0xff]
      %v1512 = vld [vmem:[%s1501 + $0x50] sm:$0xff]
      %v1513 = vld [vmem:[%s1501 + $0x58] sm:$0xff]
      %v1514 = vld [vmem:[%s1501 + $0x60] sm:$0xff]
      %v1515 = vld [vmem:[%s1501 + $0x68] sm:$0xff]
      %v1516 = vld [vmem:[%s1501 + $0x70] sm:$0xff]
      %v1517 = vld [vmem:[%s1501 + $0x78] sm:$0xff]
      %v1518 = vld [vmem:[%s1501 + $0x80] sm:$0xff]
      %v1519 = vld [vmem:[%s1501 + $0x88] sm:$0xff]
      %v1520 = vld [vmem:[%s1501 + $0x90] sm:$0xff]
      %v1521 = vld [vmem:[%s1501 + $0x98] sm:$0xff]
      %v1522 = vld [vmem:[%s1501 + $0xa0] sm:$0xff]
      %v1523 = vld [vmem:[%s1501 + $0xa8] sm:$0xff]
      %v1524 = vld [vmem:[%s1501 + $0xb0] sm:$0xff]
      %v1525 = vld [vmem:[%s1501 + $0xb8] sm:$0xff]
      %v1526 = vld [vmem:[%s1501 + $0xc0] sm:$0xff]
      %v1527 = vld [vmem:[%s1501 + $0xc8] sm:$0xff]
      %v1528 = vld [vmem:[%s1501 + $0xd0] sm:$0xff]
      %v1529 = vld [vmem:[%s1501 + $0xd8] sm:$0xff]
      %v1530 = vld [vmem:[%s1501 + $0xe0] sm:$0xff]
      %v1531 = vld [vmem:[%s1501 + $0xe8] sm:$0xff]
      %v1532 = vld [vmem:[%s1501 + $0xf0] sm:$0xff]
      %v1533 = vld [vmem:[%s1501 + $0xf8] sm:$0xff]
      %v1566 = vunpack.c.l.b16 %v1502
      %v1567 = vunpack.c.h.b16 %v1502
      %v1568 = vunpack.c.l.b16 %v1503
      %v1569 = vunpack.c.h.b16 %v1503
      %v1570 = vunpack.c.l.b16 %v1504
      %v1571 = vunpack.c.h.b16 %v1504
      %v1572 = vunpack.c.l.b16 %v1505
      %v1573 = vunpack.c.h.b16 %v1505
      %v1574 = vunpack.c.l.b16 %v1506
      %v1575 = vunpack.c.h.b16 %v1506
      %v1576 = vunpack.c.l.b16 %v1507
      %v1577 = vunpack.c.h.b16 %v1507
      %v1578 = vunpack.c.l.b16 %v1508
      %v1579 = vunpack.c.h.b16 %v1508
      %v1580 = vunpack.c.l.b16 %v1509
      %v1581 = vunpack.c.h.b16 %v1509
      %v1582 = vunpack.c.l.b16 %v1510
      %v1583 = vunpack.c.h.b16 %v1510
      %v1584 = vunpack.c.l.b16 %v1511
      %v1585 = vunpack.c.h.b16 %v1511
      %v1586 = vunpack.c.l.b16 %v1512
      %v1587 = vunpack.c.h.b16 %v1512
      %v1588 = vunpack.c.l.b16 %v1513
      %v1589 = vunpack.c.h.b16 %v1513
      %v1590 = vunpack.c.l.b16 %v1514
      %v1591 = vunpack.c.h.b16 %v1514
      %v1592 = vunpack.c.l.b16 %v1515
      %v1593 = vunpack.c.h.b16 %v1515
      %v1594 = vunpack.c.l.b16 %v1516
      %v1595 = vunpack.c.h.b16 %v1516
      %v1596 = vunpack.c.l.b16 %v1517
      %v1597 = vunpack.c.h.b16 %v1517
      %v1598 = vunpack.c.l.b16 %v1518
      %v1599 = vunpack.c.h.b16 %v1518
      %v1600 = vunpack.c.l.b16 %v1519
      %v1601 = vunpack.c.h.b16 %v1519
      %v1602 = vunpack.c.l.b16 %v1520
      %v1603 = vunpack.c.h.b16 %v1520
      %v1604 = vunpack.c.l.b16 %v1521
      %v1605 = vunpack.c.h.b16 %v1521
      %v1606 = vunpack.c.l.b16 %v1522
      %v1607 = vunpack.c.h.b16 %v1522
      %v1608 = vunpack.c.l.b16 %v1523
      %v1609 = vunpack.c.h.b16 %v1523
      %v1610 = vunpack.c.l.b16 %v1524
      %v1611 = vunpack.c.h.b16 %v1524
      %v1612 = vunpack.c.l.b16 %v1525
      %v1613 = vunpack.c.h.b16 %v1525
      %v1614 = vunpack.c.l.b16 %v1526
      %v1615 = vunpack.c.h.b16 %v1526
      %v1616 = vunpack.c.l.b16 %v1527
      %v1617 = vunpack.c.h.b16 %v1527
      %v1618 = vunpack.c.l.b16 %v1528
      %v1619 = vunpack.c.h.b16 %v1528
      %v1620 = vunpack.c.l.b16 %v1529
      %v1621 = vunpack.c.h.b16 %v1529
      %v1622 = vunpack.c.l.b16 %v1530
      %v1623 = vunpack.c.h.b16 %v1530
      %v1624 = vunpack.c.l.b16 %v1531
      %v1625 = vunpack.c.h.b16 %v1531
      %v1626 = vunpack.c.l.b16 %v1532
      %v1627 = vunpack.c.h.b16 %v1532
      %v1628 = vunpack.c.l.b16 %v1533
      %v1629 = vunpack.c.h.b16 %v1533
      %v1630 = vpack.c.b16 %v1568, %v1566
      %v1631 = vpack.c.b16 %v1569, %v1567
      %v1632 = vpack.c.b16 %v1572, %v1570
      %v1633 = vpack.c.b16 %v1573, %v1571
      %v1634 = vpack.c.b16 %v1576, %v1574
      %v1635 = vpack.c.b16 %v1577, %v1575
      %v1636 = vpack.c.b16 %v1580, %v1578
      %v1637 = vpack.c.b16 %v1581, %v1579
      %v1638 = vpack.c.b16 %v1584, %v1582
      %v1639 = vpack.c.b16 %v1585, %v1583
      %v1640 = vpack.c.b16 %v1588, %v1586
      %v1641 = vpack.c.b16 %v1589, %v1587
      %v1642 = vpack.c.b16 %v1592, %v1590
      %v1643 = vpack.c.b16 %v1593, %v1591
      %v1644 = vpack.c.b16 %v1596, %v1594
      %v1645 = vpack.c.b16 %v1597, %v1595
      %v1646 = vpack.c.b16 %v1600, %v1598
      %v1647 = vpack.c.b16 %v1601, %v1599
      %v1648 = vpack.c.b16 %v1604, %v1602
      %v1649 = vpack.c.b16 %v1605, %v1603
      %v1650 = vpack.c.b16 %v1608, %v1606
      %v1651 = vpack.c.b16 %v1609, %v1607
      %v1652 = vpack.c.b16 %v1612, %v1610
      %v1653 = vpack.c.b16 %v1613, %v1611
      %v1654 = vpack.c.b16 %v1616, %v1614
      %v1655 = vpack.c.b16 %v1617, %v1615
      %v1656 = vpack.c.b16 %v1620, %v1618
      %v1657 = vpack.c.b16 %v1621, %v1619
      %v1658 = vpack.c.b16 %v1624, %v1622
      %v1659 = vpack.c.b16 %v1625, %v1623
      %v1660 = vpack.c.b16 %v1628, %v1626
      %v1661 = vpack.c.b16 %v1629, %v1627
      %1694 = vmatprep.subr.bf16.mxu0 %v1645
      %1695 = vmatpush1.bf16.msra.mxu0 %v1644
      %1696 = vmatprep.subr.bf16.mxu0 %v1643
      %1697 = vmatpush1.bf16.msra.mxu0 %v1642
      %1698 = vmatprep.subr.bf16.mxu0 %v1641
      %1699 = vmatpush1.bf16.msra.mxu0 %v1640
      %1700 = vmatprep.subr.bf16.mxu0 %v1639
      %1701 = vmatpush1.bf16.msra.mxu0 %v1638
      %1702 = vmatprep.subr.bf16.mxu0 %v1637
      %1703 = vmatpush1.bf16.msra.mxu0 %v1636
      %1704 = vmatprep.subr.bf16.mxu0 %v1635
      %1705 = vmatpush1.bf16.msra.mxu0 %v1634
      %1706 = vmatprep.subr.bf16.mxu0 %v1633
      %1707 = vmatpush1.bf16.msra.mxu0 %v1632
      %1708 = vmatprep.subr.bf16.mxu0 %v1631
      %1709 = vmatpush1.bf16.msra.mxu0 %v1630
      %1710 = vmatprep.subr.bf16.mxu0 %v1661
      %1711 = vmatpush2.bf16.msra.mxu0 %v1660
      %1712 = vmatprep.subr.bf16.mxu0 %v1659
      %1713 = vmatpush2.bf16.msra.mxu0 %v1658
      %1714 = vmatprep.subr.bf16.mxu0 %v1657
      %1715 = vmatpush2.bf16.msra.mxu0 %v1656
      %1716 = vmatprep.subr.bf16.mxu0 %v1655
      %1717 = vmatpush2.bf16.msra.mxu0 %v1654
      %1718 = vmatprep.subr.bf16.mxu0 %v1653
      %1719 = vmatpush2.bf16.msra.mxu0 %v1652
      %1720 = vmatprep.subr.bf16.mxu0 %v1651
      %1721 = vmatpush2.bf16.msra.mxu0 %v1650
      %1722 = vmatprep.subr.bf16.mxu0 %v1649
      %1723 = vmatpush2.bf16.msra.mxu0 %v1648
      %1724 = vmatprep.subr.bf16.mxu0 %v1647
      %1725 = vmatpush2.bf16.msra.mxu0 %v1646
      %1726 = vmatprep.mubr.bf16.mxu0 %v1500
      %1727 = vmatmul.mubr.bf16.gmra.mxu0 %v1499
      %v1728 = vpop.f32.mrf.mxu0
      %v1729 = vadd.f32 0.0, %v1728
      %v1730 = vpop.f32.mrf.mxu0
      %v1731 = vadd.f32 0.0, %v1730
      %v1732 = vpop.f32.mrf.mxu0
      %v1733 = vadd.f32 0.0, %v1732
      %v1734 = vpop.f32.mrf.mxu0
      %v1735 = vadd.f32 0.0, %v1734
      %1736 = vdwg.mxu0
      %v1737 = vadd.f32 %v1479, %v1729
      %v1738 = vadd.f32 %v1481, %v1731
      %v1739 = vadd.f32 %v1483, %v1733
      %v1740 = vadd.f32 %v1485, %v1735
      %v1741 = vld [vmem:[%s4] sm:$0x3]
      %v1743 = vlaneseq
      %v1744 = vshrl.u32 %v1743, 7
      %v1745 = vsub.s32 0, %v1744
      %v1746 = vrot.slane %v1741, %v1745
      %v1747 = vlaneseq
      %v1748 = vshrl.u32 %v1747, 7
      %v1749 = vsub.s32 1, %v1748
      %v1750 = vrot.slane %v1741, %v1749
      %v1753 = vadd.f32 %v1737, %v1746
      %v1754 = vadd.f32 %v1738, %v1750
      %v1755 = vadd.f32 %v1739, %v1746
      %v1756 = vadd.f32 %v1740, %v1750
      %v1757 = vadd.f32 %v1753, %v225
      %v1758 = vadd.f32 %v1754, %v226
      %v1759 = vadd.f32 %v1755, %v227
      %v1760 = vadd.f32 %v1756, %v228
      %v1761 = vmax.f32 %v1757, 0.0
      %v1762 = vmax.f32 %v1758, 0.0
      %v1763 = vmax.f32 %v1759, 0.0
      %v1764 = vmax.f32 %v1760, 0.0
      %1765 = vst [vmem:[%s224] sm:$0xff] %v1761
      %1766 = vst [vmem:[%s224 + $0x8] sm:$0xff] %v1762
      %1767 = vst [vmem:[%s224 + $0x10] sm:$0xff] %v1763
      %1768 = vst [vmem:[%s224 + $0x18] sm:$0xff] %v1764
      %p1769 = scmp.lt.s32.totalorder %s16, 1
      %s1770 = scalar_select %p1769, %s16, 1
      %s1771 = smul.addr %s1770, 4
      %s1772 = smul.addr %s1771, 8
      %s1773 = scalar_lea.vmem %s5, %s1772
      // Predicated region
      $region41: #{upconv_forward.3} parent=39 // pred_check
        %p1774 = pneg %p144
      $region42: #{upconv_forward.3} parent=39 // pred_check_branch
        %1776 = sbr.rel (%p1774) target = $region44
      $region43: #{upconv_forward.3} parent=39 // pred_region
        _
      $region44: #{upconv_forward.3} parent=39 // pred_fallthru
        _
    $region40: #{upconv_forward.3} parent=5 // pred_fallthru
      _
    %p1777 = scmp.le.s32.totalorder 2, %s11
    // Predicated region
    $region45: #{upconv_forward.3} parent=5 // pred_check
      %p1778 = pneg %p1777
    $region46: #{upconv_forward.3} parent=5 // pred_check_branch
      %1780 = sbr.rel (%p1778) target = $region48
    $region47: #{upconv_forward.3} parent=5 // pred_region
      %s1781 = ssub.s32 %s11, 2
      // Predicated region
      $region49: #{upconv_forward.3} parent=47 // pred_check
        %p1782 = pneg %p150
      $region50: #{upconv_forward.3} parent=47 // pred_check_branch
        %1784 = sbr.rel (%p1782) target = $region52
      $region51: #{upconv_forward.3} parent=47 // pred_region
        %p1785 = scmp.lt.s32.totalorder %s17, 1
        %s1786 = scalar_select %p1785, %s17, 1
        %s1787 = smul.addr %s1786, 4
        %s1788 = smul.addr %s1787, 8
        %s1789 = scalar_lea.vmem %s5, %s1788
      $region52: #{upconv_forward.3} parent=47 // pred_fallthru
        _
    $region48: #{upconv_forward.3} parent=5 // pred_fallthru
      _
  $region6: #{upconv_forward.3} parent=0 // loop_footer
    %s15 = sadd.s32 1, %s11
  $region7: #{upconv_forward.3} parent=0 // loop_footer_branch
    %10 = sbr.rel target = $region3
  $region8: #{upconv_forward.3} parent=0 // loop_exit
    _

</llo_original>
